<compile_context>
chip_gen: v7x
topology: tpu7x:2x2x1
jax: 0.10.0
libtpu: 0.0.40
codegen_flags: <defaults>
</compile_context>

<pallas_src>
import jax
import jax.numpy as jnp
from jax.experimental import pallas as pl
from jax.experimental.pallas import tpu as pltpu

TOOL_MAPPING = {0: 'grasper', 1: 'bipolar', 2: 'hook', 3: 'scissors', 4: 'clipper', 5: 'irrigator'}
NC = len(TOOL_MAPPING)                      # 6 classes -> detect head emits 4 + 6 = 10 channels
FEATURE_LAYER = 9
SKIP_CONNECTIONS = {12: [11, 6], 15: [14, 4], 18: [17, 13], 21: [20, 10]}
N_OUT = 4 + NC + 1                          # box(4) | cls(6) | conf(1)

# (cin, cout) per synthetic layer (layers 9/12/15/18/21 have no own conv: layer 9's
# output is replaced by the feature_reducer, the others by the skip-concat hook).
_CHANNEL_PLAN = {
    0: (3, 8), 1: (8, 16), 2: (16, 16), 3: (16, 24), 4: (24, 24),
    5: (24, 32), 6: (32, 32), 7: (32, 48), 8: (48, 48),
    10: (48, 40), 11: (40, 32), 13: (64, 32), 14: (32, 24),
    16: (48, 32), 17: (32, 32), 19: (64, 40), 20: (40, 40),
    22: (80, 4 + NC),
}
_FEATURE_REDUCER_PLAN = {"fr1": (48, 24), "fr2": (24, 48)}


# ----------------------------- static packing plan -----------------------------------
# Layers in kernel consumption order.  Each entry:
#   (act, weight_key, bias_key, cout, [(cin_lo, cin_hi), ...])
# where the pieces split the (cin, cout) weight along cin (skip-concats realised as
# split matmuls: cat([a, b]) @ W  ==  a @ W[:ca] + b @ W[ca:]).
_NETWORK_SPEC = (
    ("silu", "w0",    "b0",     8, ((0, 3),)),
    ("silu", "w1",    "b1",    16, ((0, 8),)),
    ("silu", "w2",    "b2",    16, ((0, 16),)),
    ("silu", "w3",    "b3",    24, ((0, 16),)),
    ("silu", "w4",    "b4",    24, ((0, 24),)),
    ("silu", "w5",    "b5",    32, ((0, 24),)),
    ("silu", "w6",    "b6",    32, ((0, 32),)),
    ("silu", "w7",    "b7",    48, ((0, 32),)),
    ("silu", "w8",    "b8",    48, ((0, 48),)),
    ("relu", "fr1_w", "fr1_b", 24, ((0, 48),)),          # layer 9 hook: feature_reducer
    ("relu", "fr2_w", "fr2_b", 48, ((0, 24),)),
    ("silu", "w10",   "b10",   40, ((0, 48),)),
    ("silu", "w11",   "b11",   32, ((0, 40),)),
    ("silu", "w13",   "b13",   32, ((0, 32), (32, 64))),  # cat([11, 6])
    ("silu", "w14",   "b14",   24, ((0, 32),)),
    ("silu", "w16",   "b16",   32, ((0, 24), (24, 48))),  # cat([14, 4])
    ("silu", "w17",   "b17",   32, ((0, 32),)),
    ("silu", "w19",   "b19",   40, ((0, 32), (32, 64))),  # cat([17, 13])
    ("silu", "w20",   "b20",   40, ((0, 40),)),
    ("none", "w22",   "b22",   10, ((0, 40), (40, 80))),  # cat([20, 10]) -> Detect
)

_ROW_ALIGN = 16          # bf16 sublane packing: keep every weight piece 16-row aligned
_W_COLS = 128            # one full lane tile; all cin <= 80 are zero-padded into it
_MAX_COUT = 48
_N_BIAS = len(_NETWORK_SPEC)


def _round_up(x, m):
    return ((x + m - 1) // m) * m


def _build_plan():
    plan = []
    row = 0
    for col, (act, wkey, bkey, cout, pieces) in enumerate(_NETWORK_SPEC):
        pmeta = []
        for (lo, hi) in pieces:
            pmeta.append((row, cout, hi - lo, wkey, lo, hi))
            row += _round_up(cout, _ROW_ALIGN)
        plan.append((act, bkey, cout, col, tuple(pmeta)))
    return tuple(plan), _round_up(row, _ROW_ALIGN)


_PLAN, _W_ROWS = _build_plan()


def pack_params(params):
    """Pack all layer weights into one bf16 (rows, 128) slab (W^T pieces, 16-row
    aligned, cin zero-padded) and all biases into one f32 (48, n_layers) slab
    (one column per layer)."""
    w_slab = jnp.zeros((_W_ROWS, _W_COLS), jnp.bfloat16)
    b_slab = jnp.zeros((_MAX_COUT, _N_BIAS), jnp.float32)
    for (act, bkey, cout, col, pieces) in _PLAN:
        for (row, pcout, cin, wkey, lo, hi) in pieces:
            wt = jnp.transpose(params[wkey][lo:hi, :]).astype(jnp.bfloat16)   # (cout, cin)
            w_slab = w_slab.at[row:row + pcout, :cin].set(wt)
        b_slab = b_slab.at[:cout, col].set(params[bkey].astype(jnp.float32))
    return w_slab, b_slab


# ----------------------------- fused Pallas kernel -----------------------------------

def _fused_yolo_kernel(x_ref, w_ref, b_ref, o_ref):
    """Whole 23-layer chain on one (C=3, tm) pixel tile, channels-in-sublanes.

    x_ref: (3, tm) f32   — input pixels (lanes dense)
    w_ref: (_W_ROWS, 128) bf16 — packed W^T slab, VMEM-resident across the grid
    b_ref: (48, n_layers) f32  — packed bias slab
    o_ref: (11, tm) f32  — box4 | cls6 | conf1
    """

    def layer(idx, *hs):
        act, _bkey, cout, col, pieces = _PLAN[idx]
        acc = None
        for (row, _pc, cin, _wk, _lo, _hi), h in zip(pieces, hs):
            w = w_ref[row:row + cout, :cin]                       # (cout, cin) bf16, static slice
            d = jnp.dot(w, h.astype(jnp.bfloat16),
                        preferred_element_type=jnp.float32)       # (cout, tm) f32 acc
            acc = d if acc is None else acc + d
        a = acc + b_ref[:cout, col:col + 1]                       # (cout, 1) bias, lane-broadcast
        if act == "silu":
            return a * jax.nn.sigmoid(a)
        if act == "relu":
            return jnp.maximum(a, 0.0)
        return a                                                   # "none" (detect head raw)

    x = x_ref[...]                      # (3, tm) f32
    f = layer(0, x)
    f = layer(1, f)
    f = layer(2, f)
    f = layer(3, f)
    f4 = layer(4, f)                    # saved -> concat at 15
    f = layer(5, f4)
    f6 = layer(6, f)                    # saved -> concat at 12
    f = layer(7, f6)
    f8 = layer(8, f)                    # input of SPPF/layer 9
    # layer 9: _feature_modification_hook — SPPF output replaced by feature_reducer(f8)
    f = layer(9, f8)                    # feature_reducer conv 1 (relu)
    f9 = layer(10, f)                   # feature_reducer conv 2 (relu)
    f10 = layer(11, f9)                 # saved -> concat at 21
    f11 = layer(12, f10)                # saved -> concat at 12
    f13 = layer(13, f11, f6)            # layer 12 concat + layer 13 conv (split matmul)
    f14 = layer(14, f13)                # saved -> concat at 15
    f16 = layer(15, f14, f4)            # layer 15 concat + layer 16 conv
    f17 = layer(16, f16)                # saved -> concat at 18
    f19 = layer(17, f17, f13)           # layer 18 concat + layer 19 conv
    f20 = layer(18, f19)                # saved -> concat at 21

    # layer 21 concat + layer 22 = Detect head (raw).
    a = layer(19, f20, f10)                                   # (10, tm)
    cls = jax.nn.sigmoid(a[4:, :])                            # sigmoid only on class slice
    # Three direct sublane-slice stores (no concatenate), lanes fully dense.
    o_ref[0:4, :] = a[:4, :].astype(o_ref.dtype)              # raw box channels
    o_ref[4:4 + NC, :] = cls.astype(o_ref.dtype)
    o_ref[4 + NC:4 + NC + 1, :] = jnp.max(cls, axis=0, keepdims=True).astype(o_ref.dtype)


def fused_yolo_slab(x, w_slab, b_slab, tm):
    """x: (B, C, HWp) with HWp % tm == 0 and tm a multiple of 128 (or == HWp).
    Returns (B, N_OUT, HWp) f32."""
    B, C, HWp = x.shape
    grid = (B, HWp // tm)
    return pl.pallas_call(
        _fused_yolo_kernel,
        out_shape=jax.ShapeDtypeStruct((B, N_OUT, HWp), jnp.float32),
        grid=grid,
        in_specs=[
            pl.BlockSpec((None, C, tm), lambda b, i: (b, 0, i)),       # pixel tile
            pl.BlockSpec(w_slab.shape, lambda b, i: (0, 0)),           # resident weight slab
            pl.BlockSpec(b_slab.shape, lambda b, i: (0, 0)),           # resident bias slab
        ],
        out_specs=pl.BlockSpec((None, N_OUT, tm), lambda b, i: (b, 0, i)),
        compiler_params=pltpu.CompilerParams(
            dimension_semantics=("parallel", "parallel"),   # batch & pixel tiles independent
            vmem_limit_bytes=32 * 1024 * 1024,              # headroom on all generations
        ),
    )(x, w_slab, b_slab)


# ----------------------------- postprocess glue (JAX) --------------------------------

def detect_postprocess(preds, amax_conf, *, max_det, nc):
    """Mirror of ultralytics Detect.postprocess (top-k selection; thin JAX glue on the
    tiny (B, A, 4+nc) result)."""
    B, A, _ = preds.shape
    k = min(max_det, A)
    boxes = preds[..., :4]
    scores = preds[..., 4:]
    _, idx = jax.lax.top_k(amax_conf, k)                              # (B, k)
    boxes = jnp.take_along_axis(boxes, idx[..., None], axis=1)        # (B, k, 4)
    scores = jnp.take_along_axis(scores, idx[..., None], axis=1)      # (B, k, nc)
    flat_scores, flat_idx = jax.lax.top_k(scores.reshape(B, k * nc), k)
    anchor_idx = flat_idx // nc
    cls = (flat_idx % nc).astype(jnp.float32)
    sel_boxes = jnp.take_along_axis(boxes, anchor_idx[..., None], axis=1)
    return jnp.concatenate(
        [sel_boxes, flat_scores[..., None], cls[..., None]], axis=-1)  # (B, k, 6)


def domain_adapted_yolo_forward(params, x_nchw, max_det=300, tile=512):
    B, C, H, W = x_nchw.shape
    HW = H * W
    # NCHW is already channel-major over H*W -> free reshape, NO boundary transpose.
    x = x_nchw.reshape(B, C, HW)

    tile = max(128, (tile // 128) * 128)
    hw128 = _round_up(HW, 128)
    tm = min(tile, hw128)
    hwp = _round_up(HW, tm)
    if hwp != HW:
        x = jnp.pad(x, ((0, 0), (0, 0), (0, hwp - HW)))   # padded pixels are independent

    w_slab, b_slab = pack_params(params)
    out = fused_yolo_slab(x, w_slab, b_slab, tm)           # (B, 11, hwp)
    out = out[..., :HW]
    # ultralytics feeds Detect.postprocess with permute(0, 2, 1) of the raw (B, no, A).
    preds = jnp.transpose(out[:, :4 + NC, :], (0, 2, 1))   # (B, A, 10)
    conf = out[:, 4 + NC, :]                               # (B, A) fused per-anchor max
    return detect_postprocess(preds, conf, max_det=max_det, nc=NC)


# ----------------------------- params ------------------------------------------------

def init_params(key):
    params = {}
    for i, (cin, cout) in _CHANNEL_PLAN.items():
        key, kw, kb = jax.random.split(key, 3)
        params[f"w{i}"] = jax.random.normal(kw, (cin, cout), jnp.float32) / jnp.sqrt(cin)
        params[f"b{i}"] = 0.01 * jax.random.normal(kb, (cout,), jnp.float32)
    for name, (cin, cout) in _FEATURE_REDUCER_PLAN.items():
        key, kw, kb = jax.random.split(key, 3)
        params[f"{name}_w"] = jax.random.normal(kw, (cin, cout), jnp.float32) / jnp.sqrt(cin)
        params[f"{name}_b"] = 0.01 * jax.random.normal(kb, (cout,), jnp.float32)
    return params


if __name__ == "__main__":
    key = jax.random.PRNGKey(0)
    kp, kx = jax.random.split(key)
    params = init_params(kp)
    # Small synthetic image batch, NCHW like the PyTorch module expects.
    x = jax.random.normal(kx, (2, 3, 16, 16), jnp.float32)

    fwd = jax.jit(domain_adapted_yolo_forward)
    out = jax.block_until_ready(fwd(params, x))

    A = x.shape[2] * x.shape[3]
    assert out.shape == (x.shape[0], min(300, A), 6), out.shape
    # Mimic the module's confidence>0.14 reporting (values only; no printing of boxes).
    _n_high_conf = int(jnp.sum(out[..., 4] > 0.14))
    print("KERNEL_OK")
</pallas_src>

<mosaic_0001>
module attributes {stable_mosaic.version = 11 : i64} {
  func.func @_fused_yolo_kernel(%arg0: i32, %arg1: i32, %arg2: memref<1x3x256xf32, #tpu.memory_space<vmem>>, %arg3: memref<800x128xbf16, #tpu.memory_space<vmem>>, %arg4: memref<48x20xf32, #tpu.memory_space<vmem>>, %arg5: memref<1x11x256xf32, #tpu.memory_space<vmem>>) attributes {dimension_semantics = [#tpu.dimension_semantics<parallel>, #tpu.dimension_semantics<parallel>], iteration_bounds = array<i64: 2, 1>, scalar_prefetch = 0 : i64, scratch_operands = 0 : i64, tpu.core_type = #tpu.core_type<tc>, window_params = [{transform_indices = @transform_0, window_bounds = array<i64: 1, 3, 256>}, {pipeline_mode = #tpu.pipeline_mode<synchronous>, transform_indices = @transform_1, window_bounds = array<i64: 800, 128>}, {pipeline_mode = #tpu.pipeline_mode<synchronous>, transform_indices = @transform_2, window_bounds = array<i64: 48, 20>}, {transform_indices = @transform_3, window_bounds = array<i64: 1, 11, 256>}]} {
    %c0 = arith.constant 0 : index
    %c0_0 = arith.constant 0 : index
    %c0_1 = arith.constant 0 : index
    %0 = vector.load %arg2[%c0, %c0_0, %c0_1] : memref<1x3x256xf32, #tpu.memory_space<vmem>>, vector<1x3x256xf32>
    %1 = vector.shape_cast %0 : vector<1x3x256xf32> to vector<3x256xf32>
    %c0_2 = arith.constant 0 : index
    %c0_3 = arith.constant 0 : index
    %2 = vector.load %arg3[%c0_2, %c0_3] : memref<800x128xbf16, #tpu.memory_space<vmem>>, vector<8x3xbf16>
    %3 = arith.truncf %1 : vector<3x256xf32> to vector<3x256xbf16>
    %cst = arith.constant dense<0.000000e+00> : vector<8x256xf32>
    %4 = tpu.matmul %2, %3, %cst {dimension_numbers = #tpu.dot_dimension_numbers<[1], [0], [0], [1], [0, 0, 1, 1], [], []>} : vector<8x3xbf16>, vector<3x256xbf16>, vector<8x256xf32> -> vector<8x256xf32>
    %c0_4 = arith.constant 0 : index
    %c0_5 = arith.constant 0 : index
    %5 = vector.load %arg4[%c0_4, %c0_5] : memref<48x20xf32, #tpu.memory_space<vmem>>, vector<8x1xf32>
    %6 = vector.broadcast %5 : vector<8x1xf32> to vector<8x256xf32>
    %7 = arith.addf %4, %6 : vector<8x256xf32>
    %8 = arith.negf %7 : vector<8x256xf32>
    %9 = math.exp %8 : vector<8x256xf32>
    %cst_6 = arith.constant 1.000000e+00 : f32
    %10 = vector.broadcast %cst_6 : f32 to vector<8x256xf32>
    %11 = arith.addf %10, %9 : vector<8x256xf32>
    %12 = arith.divf %10, %11 : vector<8x256xf32>
    %13 = arith.mulf %7, %12 : vector<8x256xf32>
    %c16 = arith.constant 16 : index
    %c0_7 = arith.constant 0 : index
    %14 = vector.load %arg3[%c16, %c0_7] : memref<800x128xbf16, #tpu.memory_space<vmem>>, vector<16x8xbf16>
    %15 = arith.truncf %13 : vector<8x256xf32> to vector<8x256xbf16>
    %cst_8 = arith.constant dense<0.000000e+00> : vector<16x256xf32>
    %16 = tpu.matmul %14, %15, %cst_8 {dimension_numbers = #tpu.dot_dimension_numbers<[1], [0], [0], [1], [0, 0, 1, 1], [], []>} : vector<16x8xbf16>, vector<8x256xbf16>, vector<16x256xf32> -> vector<16x256xf32>
    %c0_9 = arith.constant 0 : index
    %c1 = arith.constant 1 : index
    %17 = vector.load %arg4[%c0_9, %c1] : memref<48x20xf32, #tpu.memory_space<vmem>>, vector<16x1xf32>
    %18 = vector.broadcast %17 : vector<16x1xf32> to vector<16x256xf32>
    %19 = arith.addf %16, %18 : vector<16x256xf32>
    %20 = arith.negf %19 : vector<16x256xf32>
    %21 = math.exp %20 : vector<16x256xf32>
    %cst_10 = arith.constant 1.000000e+00 : f32
    %22 = vector.broadcast %cst_10 : f32 to vector<16x256xf32>
    %23 = arith.addf %22, %21 : vector<16x256xf32>
    %24 = arith.divf %22, %23 : vector<16x256xf32>
    %25 = arith.mulf %19, %24 : vector<16x256xf32>
    %c32 = arith.constant 32 : index
    %c0_11 = arith.constant 0 : index
    %26 = vector.load %arg3[%c32, %c0_11] : memref<800x128xbf16, #tpu.memory_space<vmem>>, vector<16x16xbf16>
    %27 = arith.truncf %25 : vector<16x256xf32> to vector<16x256xbf16>
    %cst_12 = arith.constant dense<0.000000e+00> : vector<16x256xf32>
    %28 = tpu.matmul %26, %27, %cst_12 {dimension_numbers = #tpu.dot_dimension_numbers<[1], [0], [0], [1], [0, 0, 1, 1], [], []>} : vector<16x16xbf16>, vector<16x256xbf16>, vector<16x256xf32> -> vector<16x256xf32>
    %c0_13 = arith.constant 0 : index
    %c2 = arith.constant 2 : index
    %29 = vector.load %arg4[%c0_13, %c2] : memref<48x20xf32, #tpu.memory_space<vmem>>, vector<16x1xf32>
    %30 = vector.broadcast %29 : vector<16x1xf32> to vector<16x256xf32>
    %31 = arith.addf %28, %30 : vector<16x256xf32>
    %32 = arith.negf %31 : vector<16x256xf32>
    %33 = math.exp %32 : vector<16x256xf32>
    %cst_14 = arith.constant 1.000000e+00 : f32
    %34 = vector.broadcast %cst_14 : f32 to vector<16x256xf32>
    %35 = arith.addf %34, %33 : vector<16x256xf32>
    %36 = arith.divf %34, %35 : vector<16x256xf32>
    %37 = arith.mulf %31, %36 : vector<16x256xf32>
    %c48 = arith.constant 48 : index
    %c0_15 = arith.constant 0 : index
    %38 = vector.load %arg3[%c48, %c0_15] : memref<800x128xbf16, #tpu.memory_space<vmem>>, vector<24x16xbf16>
    %39 = arith.truncf %37 : vector<16x256xf32> to vector<16x256xbf16>
    %cst_16 = arith.constant dense<0.000000e+00> : vector<24x256xf32>
    %40 = tpu.matmul %38, %39, %cst_16 {dimension_numbers = #tpu.dot_dimension_numbers<[1], [0], [0], [1], [0, 0, 1, 1], [], []>} : vector<24x16xbf16>, vector<16x256xbf16>, vector<24x256xf32> -> vector<24x256xf32>
    %c0_17 = arith.constant 0 : index
    %c3 = arith.constant 3 : index
    %41 = vector.load %arg4[%c0_17, %c3] : memref<48x20xf32, #tpu.memory_space<vmem>>, vector<24x1xf32>
    %42 = vector.broadcast %41 : vector<24x1xf32> to vector<24x256xf32>
    %43 = arith.addf %40, %42 : vector<24x256xf32>
    %44 = arith.negf %43 : vector<24x256xf32>
    %45 = math.exp %44 : vector<24x256xf32>
    %cst_18 = arith.constant 1.000000e+00 : f32
    %46 = vector.broadcast %cst_18 : f32 to vector<24x256xf32>
    %47 = arith.addf %46, %45 : vector<24x256xf32>
    %48 = arith.divf %46, %47 : vector<24x256xf32>
    %49 = arith.mulf %43, %48 : vector<24x256xf32>
    %c80 = arith.constant 80 : index
    %c0_19 = arith.constant 0 : index
    %50 = vector.load %arg3[%c80, %c0_19] : memref<800x128xbf16, #tpu.memory_space<vmem>>, vector<24x24xbf16>
    %51 = arith.truncf %49 : vector<24x256xf32> to vector<24x256xbf16>
    %cst_20 = arith.constant dense<0.000000e+00> : vector<24x256xf32>
    %52 = tpu.matmul %50, %51, %cst_20 {dimension_numbers = #tpu.dot_dimension_numbers<[1], [0], [0], [1], [0, 0, 1, 1], [], []>} : vector<24x24xbf16>, vector<24x256xbf16>, vector<24x256xf32> -> vector<24x256xf32>
    %c0_21 = arith.constant 0 : index
    %c4 = arith.constant 4 : index
    %53 = vector.load %arg4[%c0_21, %c4] : memref<48x20xf32, #tpu.memory_space<vmem>>, vector<24x1xf32>
    %54 = vector.broadcast %53 : vector<24x1xf32> to vector<24x256xf32>
    %55 = arith.addf %52, %54 : vector<24x256xf32>
    %56 = arith.negf %55 : vector<24x256xf32>
    %57 = math.exp %56 : vector<24x256xf32>
    %cst_22 = arith.constant 1.000000e+00 : f32
    %58 = vector.broadcast %cst_22 : f32 to vector<24x256xf32>
    %59 = arith.addf %58, %57 : vector<24x256xf32>
    %60 = arith.divf %58, %59 : vector<24x256xf32>
    %61 = arith.mulf %55, %60 : vector<24x256xf32>
    %c112 = arith.constant 112 : index
    %c0_23 = arith.constant 0 : index
    %62 = vector.load %arg3[%c112, %c0_23] : memref<800x128xbf16, #tpu.memory_space<vmem>>, vector<32x24xbf16>
    %63 = arith.truncf %61 : vector<24x256xf32> to vector<24x256xbf16>
    %cst_24 = arith.constant dense<0.000000e+00> : vector<32x256xf32>
    %64 = tpu.matmul %62, %63, %cst_24 {dimension_numbers = #tpu.dot_dimension_numbers<[1], [0], [0], [1], [0, 0, 1, 1], [], []>} : vector<32x24xbf16>, vector<24x256xbf16>, vector<32x256xf32> -> vector<32x256xf32>
    %c0_25 = arith.constant 0 : index
    %c5 = arith.constant 5 : index
    %65 = vector.load %arg4[%c0_25, %c5] : memref<48x20xf32, #tpu.memory_space<vmem>>, vector<32x1xf32>
    %66 = vector.broadcast %65 : vector<32x1xf32> to vector<32x256xf32>
    %67 = arith.addf %64, %66 : vector<32x256xf32>
    %68 = arith.negf %67 : vector<32x256xf32>
    %69 = math.exp %68 : vector<32x256xf32>
    %cst_26 = arith.constant 1.000000e+00 : f32
    %70 = vector.broadcast %cst_26 : f32 to vector<32x256xf32>
    %71 = arith.addf %70, %69 : vector<32x256xf32>
    %72 = arith.divf %70, %71 : vector<32x256xf32>
    %73 = arith.mulf %67, %72 : vector<32x256xf32>
    %c144 = arith.constant 144 : index
    %c0_27 = arith.constant 0 : index
    %74 = vector.load %arg3[%c144, %c0_27] : memref<800x128xbf16, #tpu.memory_space<vmem>>, vector<32x32xbf16>
    %75 = arith.truncf %73 : vector<32x256xf32> to vector<32x256xbf16>
    %cst_28 = arith.constant dense<0.000000e+00> : vector<32x256xf32>
    %76 = tpu.matmul %74, %75, %cst_28 {dimension_numbers = #tpu.dot_dimension_numbers<[1], [0], [0], [1], [0, 0, 1, 1], [], []>} : vector<32x32xbf16>, vector<32x256xbf16>, vector<32x256xf32> -> vector<32x256xf32>
    %c0_29 = arith.constant 0 : index
    %c6 = arith.constant 6 : index
    %77 = vector.load %arg4[%c0_29, %c6] : memref<48x20xf32, #tpu.memory_space<vmem>>, vector<32x1xf32>
    %78 = vector.broadcast %77 : vector<32x1xf32> to vector<32x256xf32>
    %79 = arith.addf %76, %78 : vector<32x256xf32>
    %80 = arith.negf %79 : vector<32x256xf32>
    %81 = math.exp %80 : vector<32x256xf32>
    %cst_30 = arith.constant 1.000000e+00 : f32
    %82 = vector.broadcast %cst_30 : f32 to vector<32x256xf32>
    %83 = arith.addf %82, %81 : vector<32x256xf32>
    %84 = arith.divf %82, %83 : vector<32x256xf32>
    %85 = arith.mulf %79, %84 : vector<32x256xf32>
    %c176 = arith.constant 176 : index
    %c0_31 = arith.constant 0 : index
    %86 = vector.load %arg3[%c176, %c0_31] : memref<800x128xbf16, #tpu.memory_space<vmem>>, vector<48x32xbf16>
    %87 = arith.truncf %85 : vector<32x256xf32> to vector<32x256xbf16>
    %cst_32 = arith.constant dense<0.000000e+00> : vector<48x256xf32>
    %88 = tpu.matmul %86, %87, %cst_32 {dimension_numbers = #tpu.dot_dimension_numbers<[1], [0], [0], [1], [0, 0, 1, 1], [], []>} : vector<48x32xbf16>, vector<32x256xbf16>, vector<48x256xf32> -> vector<48x256xf32>
    %c0_33 = arith.constant 0 : index
    %c7 = arith.constant 7 : index
    %89 = vector.load %arg4[%c0_33, %c7] : memref<48x20xf32, #tpu.memory_space<vmem>>, vector<48x1xf32>
    %90 = vector.broadcast %89 : vector<48x1xf32> to vector<48x256xf32>
    %91 = arith.addf %88, %90 : vector<48x256xf32>
    %92 = arith.negf %91 : vector<48x256xf32>
    %93 = math.exp %92 : vector<48x256xf32>
    %cst_34 = arith.constant 1.000000e+00 : f32
    %94 = vector.broadcast %cst_34 : f32 to vector<48x256xf32>
    %95 = arith.addf %94, %93 : vector<48x256xf32>
    %96 = arith.divf %94, %95 : vector<48x256xf32>
    %97 = arith.mulf %91, %96 : vector<48x256xf32>
    %c224 = arith.constant 224 : index
    %c0_35 = arith.constant 0 : index
    %98 = vector.load %arg3[%c224, %c0_35] : memref<800x128xbf16, #tpu.memory_space<vmem>>, vector<48x48xbf16>
    %99 = arith.truncf %97 : vector<48x256xf32> to vector<48x256xbf16>
    %cst_36 = arith.constant dense<0.000000e+00> : vector<48x256xf32>
    %100 = tpu.matmul %98, %99, %cst_36 {dimension_numbers = #tpu.dot_dimension_numbers<[1], [0], [0], [1], [0, 0, 1, 1], [], []>} : vector<48x48xbf16>, vector<48x256xbf16>, vector<48x256xf32> -> vector<48x256xf32>
    %c0_37 = arith.constant 0 : index
    %c8 = arith.constant 8 : index
    %101 = vector.load %arg4[%c0_37, %c8] : memref<48x20xf32, #tpu.memory_space<vmem>>, vector<48x1xf32>
    %102 = vector.broadcast %101 : vector<48x1xf32> to vector<48x256xf32>
    %103 = arith.addf %100, %102 : vector<48x256xf32>
    %104 = arith.negf %103 : vector<48x256xf32>
    %105 = math.exp %104 : vector<48x256xf32>
    %cst_38 = arith.constant 1.000000e+00 : f32
    %106 = vector.broadcast %cst_38 : f32 to vector<48x256xf32>
    %107 = arith.addf %106, %105 : vector<48x256xf32>
    %108 = arith.divf %106, %107 : vector<48x256xf32>
    %109 = arith.mulf %103, %108 : vector<48x256xf32>
    %c272 = arith.constant 272 : index
    %c0_39 = arith.constant 0 : index
    %110 = vector.load %arg3[%c272, %c0_39] : memref<800x128xbf16, #tpu.memory_space<vmem>>, vector<24x48xbf16>
    %111 = arith.truncf %109 : vector<48x256xf32> to vector<48x256xbf16>
    %cst_40 = arith.constant dense<0.000000e+00> : vector<24x256xf32>
    %112 = tpu.matmul %110, %111, %cst_40 {dimension_numbers = #tpu.dot_dimension_numbers<[1], [0], [0], [1], [0, 0, 1, 1], [], []>} : vector<24x48xbf16>, vector<48x256xbf16>, vector<24x256xf32> -> vector<24x256xf32>
    %c0_41 = arith.constant 0 : index
    %c9 = arith.constant 9 : index
    %113 = vector.load %arg4[%c0_41, %c9] : memref<48x20xf32, #tpu.memory_space<vmem>>, vector<24x1xf32>
    %114 = vector.broadcast %113 : vector<24x1xf32> to vector<24x256xf32>
    %115 = arith.addf %112, %114 : vector<24x256xf32>
    %cst_42 = arith.constant 0.000000e+00 : f32
    %116 = vector.broadcast %cst_42 : f32 to vector<24x256xf32>
    %117 = arith.maximumf %115, %116 : vector<24x256xf32>
    %c304 = arith.constant 304 : index
    %c0_43 = arith.constant 0 : index
    %118 = vector.load %arg3[%c304, %c0_43] : memref<800x128xbf16, #tpu.memory_space<vmem>>, vector<48x24xbf16>
    %119 = arith.truncf %117 : vector<24x256xf32> to vector<24x256xbf16>
    %cst_44 = arith.constant dense<0.000000e+00> : vector<48x256xf32>
    %120 = tpu.matmul %118, %119, %cst_44 {dimension_numbers = #tpu.dot_dimension_numbers<[1], [0], [0], [1], [0, 0, 1, 1], [], []>} : vector<48x24xbf16>, vector<24x256xbf16>, vector<48x256xf32> -> vector<48x256xf32>
    %c0_45 = arith.constant 0 : index
    %c10 = arith.constant 10 : index
    %121 = vector.load %arg4[%c0_45, %c10] : memref<48x20xf32, #tpu.memory_space<vmem>>, vector<48x1xf32>
    %122 = vector.broadcast %121 : vector<48x1xf32> to vector<48x256xf32>
    %123 = arith.addf %120, %122 : vector<48x256xf32>
    %cst_46 = arith.constant 0.000000e+00 : f32
    %124 = vector.broadcast %cst_46 : f32 to vector<48x256xf32>
    %125 = arith.maximumf %123, %124 : vector<48x256xf32>
    %c352 = arith.constant 352 : index
    %c0_47 = arith.constant 0 : index
    %126 = vector.load %arg3[%c352, %c0_47] : memref<800x128xbf16, #tpu.memory_space<vmem>>, vector<40x48xbf16>
    %127 = arith.truncf %125 : vector<48x256xf32> to vector<48x256xbf16>
    %cst_48 = arith.constant dense<0.000000e+00> : vector<40x256xf32>
    %128 = tpu.matmul %126, %127, %cst_48 {dimension_numbers = #tpu.dot_dimension_numbers<[1], [0], [0], [1], [0, 0, 1, 1], [], []>} : vector<40x48xbf16>, vector<48x256xbf16>, vector<40x256xf32> -> vector<40x256xf32>
    %c0_49 = arith.constant 0 : index
    %c11 = arith.constant 11 : index
    %129 = vector.load %arg4[%c0_49, %c11] : memref<48x20xf32, #tpu.memory_space<vmem>>, vector<40x1xf32>
    %130 = vector.broadcast %129 : vector<40x1xf32> to vector<40x256xf32>
    %131 = arith.addf %128, %130 : vector<40x256xf32>
    %132 = arith.negf %131 : vector<40x256xf32>
    %133 = math.exp %132 : vector<40x256xf32>
    %cst_50 = arith.constant 1.000000e+00 : f32
    %134 = vector.broadcast %cst_50 : f32 to vector<40x256xf32>
    %135 = arith.addf %134, %133 : vector<40x256xf32>
    %136 = arith.divf %134, %135 : vector<40x256xf32>
    %137 = arith.mulf %131, %136 : vector<40x256xf32>
    %c400 = arith.constant 400 : index
    %c0_51 = arith.constant 0 : index
    %138 = vector.load %arg3[%c400, %c0_51] : memref<800x128xbf16, #tpu.memory_space<vmem>>, vector<32x40xbf16>
    %139 = arith.truncf %137 : vector<40x256xf32> to vector<40x256xbf16>
    %cst_52 = arith.constant dense<0.000000e+00> : vector<32x256xf32>
    %140 = tpu.matmul %138, %139, %cst_52 {dimension_numbers = #tpu.dot_dimension_numbers<[1], [0], [0], [1], [0, 0, 1, 1], [], []>} : vector<32x40xbf16>, vector<40x256xbf16>, vector<32x256xf32> -> vector<32x256xf32>
    %c0_53 = arith.constant 0 : index
    %c12 = arith.constant 12 : index
    %141 = vector.load %arg4[%c0_53, %c12] : memref<48x20xf32, #tpu.memory_space<vmem>>, vector<32x1xf32>
    %142 = vector.broadcast %141 : vector<32x1xf32> to vector<32x256xf32>
    %143 = arith.addf %140, %142 : vector<32x256xf32>
    %144 = arith.negf %143 : vector<32x256xf32>
    %145 = math.exp %144 : vector<32x256xf32>
    %cst_54 = arith.constant 1.000000e+00 : f32
    %146 = vector.broadcast %cst_54 : f32 to vector<32x256xf32>
    %147 = arith.addf %146, %145 : vector<32x256xf32>
    %148 = arith.divf %146, %147 : vector<32x256xf32>
    %149 = arith.mulf %143, %148 : vector<32x256xf32>
    %c432 = arith.constant 432 : index
    %c0_55 = arith.constant 0 : index
    %150 = vector.load %arg3[%c432, %c0_55] : memref<800x128xbf16, #tpu.memory_space<vmem>>, vector<32x32xbf16>
    %151 = arith.truncf %149 : vector<32x256xf32> to vector<32x256xbf16>
    %cst_56 = arith.constant dense<0.000000e+00> : vector<32x256xf32>
    %152 = tpu.matmul %150, %151, %cst_56 {dimension_numbers = #tpu.dot_dimension_numbers<[1], [0], [0], [1], [0, 0, 1, 1], [], []>} : vector<32x32xbf16>, vector<32x256xbf16>, vector<32x256xf32> -> vector<32x256xf32>
    %c464 = arith.constant 464 : index
    %c0_57 = arith.constant 0 : index
    %153 = vector.load %arg3[%c464, %c0_57] : memref<800x128xbf16, #tpu.memory_space<vmem>>, vector<32x32xbf16>
    %154 = arith.truncf %85 : vector<32x256xf32> to vector<32x256xbf16>
    %cst_58 = arith.constant dense<0.000000e+00> : vector<32x256xf32>
    %155 = tpu.matmul %153, %154, %cst_58 {dimension_numbers = #tpu.dot_dimension_numbers<[1], [0], [0], [1], [0, 0, 1, 1], [], []>} : vector<32x32xbf16>, vector<32x256xbf16>, vector<32x256xf32> -> vector<32x256xf32>
    %156 = arith.addf %152, %155 : vector<32x256xf32>
    %c0_59 = arith.constant 0 : index
    %c13 = arith.constant 13 : index
    %157 = vector.load %arg4[%c0_59, %c13] : memref<48x20xf32, #tpu.memory_space<vmem>>, vector<32x1xf32>
    %158 = vector.broadcast %157 : vector<32x1xf32> to vector<32x256xf32>
    %159 = arith.addf %156, %158 : vector<32x256xf32>
    %160 = arith.negf %159 : vector<32x256xf32>
    %161 = math.exp %160 : vector<32x256xf32>
    %cst_60 = arith.constant 1.000000e+00 : f32
    %162 = vector.broadcast %cst_60 : f32 to vector<32x256xf32>
    %163 = arith.addf %162, %161 : vector<32x256xf32>
    %164 = arith.divf %162, %163 : vector<32x256xf32>
    %165 = arith.mulf %159, %164 : vector<32x256xf32>
    %c496 = arith.constant 496 : index
    %c0_61 = arith.constant 0 : index
    %166 = vector.load %arg3[%c496, %c0_61] : memref<800x128xbf16, #tpu.memory_space<vmem>>, vector<24x32xbf16>
    %167 = arith.truncf %165 : vector<32x256xf32> to vector<32x256xbf16>
    %cst_62 = arith.constant dense<0.000000e+00> : vector<24x256xf32>
    %168 = tpu.matmul %166, %167, %cst_62 {dimension_numbers = #tpu.dot_dimension_numbers<[1], [0], [0], [1], [0, 0, 1, 1], [], []>} : vector<24x32xbf16>, vector<32x256xbf16>, vector<24x256xf32> -> vector<24x256xf32>
    %c0_63 = arith.constant 0 : index
    %c14 = arith.constant 14 : index
    %169 = vector.load %arg4[%c0_63, %c14] : memref<48x20xf32, #tpu.memory_space<vmem>>, vector<24x1xf32>
    %170 = vector.broadcast %169 : vector<24x1xf32> to vector<24x256xf32>
    %171 = arith.addf %168, %170 : vector<24x256xf32>
    %172 = arith.negf %171 : vector<24x256xf32>
    %173 = math.exp %172 : vector<24x256xf32>
    %cst_64 = arith.constant 1.000000e+00 : f32
    %174 = vector.broadcast %cst_64 : f32 to vector<24x256xf32>
    %175 = arith.addf %174, %173 : vector<24x256xf32>
    %176 = arith.divf %174, %175 : vector<24x256xf32>
    %177 = arith.mulf %171, %176 : vector<24x256xf32>
    %c528 = arith.constant 528 : index
    %c0_65 = arith.constant 0 : index
    %178 = vector.load %arg3[%c528, %c0_65] : memref<800x128xbf16, #tpu.memory_space<vmem>>, vector<32x24xbf16>
    %179 = arith.truncf %177 : vector<24x256xf32> to vector<24x256xbf16>
    %cst_66 = arith.constant dense<0.000000e+00> : vector<32x256xf32>
    %180 = tpu.matmul %178, %179, %cst_66 {dimension_numbers = #tpu.dot_dimension_numbers<[1], [0], [0], [1], [0, 0, 1, 1], [], []>} : vector<32x24xbf16>, vector<24x256xbf16>, vector<32x256xf32> -> vector<32x256xf32>
    %c560 = arith.constant 560 : index
    %c0_67 = arith.constant 0 : index
    %181 = vector.load %arg3[%c560, %c0_67] : memref<800x128xbf16, #tpu.memory_space<vmem>>, vector<32x24xbf16>
    %182 = arith.truncf %61 : vector<24x256xf32> to vector<24x256xbf16>
    %cst_68 = arith.constant dense<0.000000e+00> : vector<32x256xf32>
    %183 = tpu.matmul %181, %182, %cst_68 {dimension_numbers = #tpu.dot_dimension_numbers<[1], [0], [0], [1], [0, 0, 1, 1], [], []>} : vector<32x24xbf16>, vector<24x256xbf16>, vector<32x256xf32> -> vector<32x256xf32>
    %184 = arith.addf %180, %183 : vector<32x256xf32>
    %c0_69 = arith.constant 0 : index
    %c15 = arith.constant 15 : index
    %185 = vector.load %arg4[%c0_69, %c15] : memref<48x20xf32, #tpu.memory_space<vmem>>, vector<32x1xf32>
    %186 = vector.broadcast %185 : vector<32x1xf32> to vector<32x256xf32>
    %187 = arith.addf %184, %186 : vector<32x256xf32>
    %188 = arith.negf %187 : vector<32x256xf32>
    %189 = math.exp %188 : vector<32x256xf32>
    %cst_70 = arith.constant 1.000000e+00 : f32
    %190 = vector.broadcast %cst_70 : f32 to vector<32x256xf32>
    %191 = arith.addf %190, %189 : vector<32x256xf32>
    %192 = arith.divf %190, %191 : vector<32x256xf32>
    %193 = arith.mulf %187, %192 : vector<32x256xf32>
    %c592 = arith.constant 592 : index
    %c0_71 = arith.constant 0 : index
    %194 = vector.load %arg3[%c592, %c0_71] : memref<800x128xbf16, #tpu.memory_space<vmem>>, vector<32x32xbf16>
    %195 = arith.truncf %193 : vector<32x256xf32> to vector<32x256xbf16>
    %cst_72 = arith.constant dense<0.000000e+00> : vector<32x256xf32>
    %196 = tpu.matmul %194, %195, %cst_72 {dimension_numbers = #tpu.dot_dimension_numbers<[1], [0], [0], [1], [0, 0, 1, 1], [], []>} : vector<32x32xbf16>, vector<32x256xbf16>, vector<32x256xf32> -> vector<32x256xf32>
    %c0_73 = arith.constant 0 : index
    %c16_74 = arith.constant 16 : index
    %197 = vector.load %arg4[%c0_73, %c16_74] : memref<48x20xf32, #tpu.memory_space<vmem>>, vector<32x1xf32>
    %198 = vector.broadcast %197 : vector<32x1xf32> to vector<32x256xf32>
    %199 = arith.addf %196, %198 : vector<32x256xf32>
    %200 = arith.negf %199 : vector<32x256xf32>
    %201 = math.exp %200 : vector<32x256xf32>
    %cst_75 = arith.constant 1.000000e+00 : f32
    %202 = vector.broadcast %cst_75 : f32 to vector<32x256xf32>
    %203 = arith.addf %202, %201 : vector<32x256xf32>
    %204 = arith.divf %202, %203 : vector<32x256xf32>
    %205 = arith.mulf %199, %204 : vector<32x256xf32>
    %c624 = arith.constant 624 : index
    %c0_76 = arith.constant 0 : index
    %206 = vector.load %arg3[%c624, %c0_76] : memref<800x128xbf16, #tpu.memory_space<vmem>>, vector<40x32xbf16>
    %207 = arith.truncf %205 : vector<32x256xf32> to vector<32x256xbf16>
    %cst_77 = arith.constant dense<0.000000e+00> : vector<40x256xf32>
    %208 = tpu.matmul %206, %207, %cst_77 {dimension_numbers = #tpu.dot_dimension_numbers<[1], [0], [0], [1], [0, 0, 1, 1], [], []>} : vector<40x32xbf16>, vector<32x256xbf16>, vector<40x256xf32> -> vector<40x256xf32>
    %c672 = arith.constant 672 : index
    %c0_78 = arith.constant 0 : index
    %209 = vector.load %arg3[%c672, %c0_78] : memref<800x128xbf16, #tpu.memory_space<vmem>>, vector<40x32xbf16>
    %210 = arith.truncf %165 : vector<32x256xf32> to vector<32x256xbf16>
    %cst_79 = arith.constant dense<0.000000e+00> : vector<40x256xf32>
    %211 = tpu.matmul %209, %210, %cst_79 {dimension_numbers = #tpu.dot_dimension_numbers<[1], [0], [0], [1], [0, 0, 1, 1], [], []>} : vector<40x32xbf16>, vector<32x256xbf16>, vector<40x256xf32> -> vector<40x256xf32>
    %212 = arith.addf %208, %211 : vector<40x256xf32>
    %c0_80 = arith.constant 0 : index
    %c17 = arith.constant 17 : index
    %213 = vector.load %arg4[%c0_80, %c17] : memref<48x20xf32, #tpu.memory_space<vmem>>, vector<40x1xf32>
    %214 = vector.broadcast %213 : vector<40x1xf32> to vector<40x256xf32>
    %215 = arith.addf %212, %214 : vector<40x256xf32>
    %216 = arith.negf %215 : vector<40x256xf32>
    %217 = math.exp %216 : vector<40x256xf32>
    %cst_81 = arith.constant 1.000000e+00 : f32
    %218 = vector.broadcast %cst_81 : f32 to vector<40x256xf32>
    %219 = arith.addf %218, %217 : vector<40x256xf32>
    %220 = arith.divf %218, %219 : vector<40x256xf32>
    %221 = arith.mulf %215, %220 : vector<40x256xf32>
    %c720 = arith.constant 720 : index
    %c0_82 = arith.constant 0 : index
    %222 = vector.load %arg3[%c720, %c0_82] : memref<800x128xbf16, #tpu.memory_space<vmem>>, vector<40x40xbf16>
    %223 = arith.truncf %221 : vector<40x256xf32> to vector<40x256xbf16>
    %cst_83 = arith.constant dense<0.000000e+00> : vector<40x256xf32>
    %224 = tpu.matmul %222, %223, %cst_83 {dimension_numbers = #tpu.dot_dimension_numbers<[1], [0], [0], [1], [0, 0, 1, 1], [], []>} : vector<40x40xbf16>, vector<40x256xbf16>, vector<40x256xf32> -> vector<40x256xf32>
    %c0_84 = arith.constant 0 : index
    %c18 = arith.constant 18 : index
    %225 = vector.load %arg4[%c0_84, %c18] : memref<48x20xf32, #tpu.memory_space<vmem>>, vector<40x1xf32>
    %226 = vector.broadcast %225 : vector<40x1xf32> to vector<40x256xf32>
    %227 = arith.addf %224, %226 : vector<40x256xf32>
    %228 = arith.negf %227 : vector<40x256xf32>
    %229 = math.exp %228 : vector<40x256xf32>
    %cst_85 = arith.constant 1.000000e+00 : f32
    %230 = vector.broadcast %cst_85 : f32 to vector<40x256xf32>
    %231 = arith.addf %230, %229 : vector<40x256xf32>
    %232 = arith.divf %230, %231 : vector<40x256xf32>
    %233 = arith.mulf %227, %232 : vector<40x256xf32>
    %c768 = arith.constant 768 : index
    %c0_86 = arith.constant 0 : index
    %234 = vector.load %arg3[%c768, %c0_86] : memref<800x128xbf16, #tpu.memory_space<vmem>>, vector<10x40xbf16>
    %235 = arith.truncf %233 : vector<40x256xf32> to vector<40x256xbf16>
    %cst_87 = arith.constant dense<0.000000e+00> : vector<10x256xf32>
    %236 = tpu.matmul %234, %235, %cst_87 {dimension_numbers = #tpu.dot_dimension_numbers<[1], [0], [0], [1], [0, 0, 1, 1], [], []>} : vector<10x40xbf16>, vector<40x256xbf16>, vector<10x256xf32> -> vector<10x256xf32>
    %c784 = arith.constant 784 : index
    %c0_88 = arith.constant 0 : index
    %237 = vector.load %arg3[%c784, %c0_88] : memref<800x128xbf16, #tpu.memory_space<vmem>>, vector<10x40xbf16>
    %238 = arith.truncf %137 : vector<40x256xf32> to vector<40x256xbf16>
    %cst_89 = arith.constant dense<0.000000e+00> : vector<10x256xf32>
    %239 = tpu.matmul %237, %238, %cst_89 {dimension_numbers = #tpu.dot_dimension_numbers<[1], [0], [0], [1], [0, 0, 1, 1], [], []>} : vector<10x40xbf16>, vector<40x256xbf16>, vector<10x256xf32> -> vector<10x256xf32>
    %240 = arith.addf %236, %239 : vector<10x256xf32>
    %c0_90 = arith.constant 0 : index
    %c19 = arith.constant 19 : index
    %241 = vector.load %arg4[%c0_90, %c19] : memref<48x20xf32, #tpu.memory_space<vmem>>, vector<10x1xf32>
    %242 = vector.broadcast %241 : vector<10x1xf32> to vector<10x256xf32>
    %243 = arith.addf %240, %242 : vector<10x256xf32>
    %244 = vector.extract_strided_slice %243 {offsets = [4, 0], sizes = [6, 256], strides = [1, 1]} : vector<10x256xf32> to vector<6x256xf32>
    %245 = arith.negf %244 : vector<6x256xf32>
    %246 = math.exp %245 : vector<6x256xf32>
    %cst_91 = arith.constant 1.000000e+00 : f32
    %247 = vector.broadcast %cst_91 : f32 to vector<6x256xf32>
    %248 = arith.addf %247, %246 : vector<6x256xf32>
    %249 = arith.divf %247, %248 : vector<6x256xf32>
    %250 = vector.extract_strided_slice %243 {offsets = [0, 0], sizes = [4, 256], strides = [1, 1]} : vector<10x256xf32> to vector<4x256xf32>
    %c0_92 = arith.constant 0 : index
    %c0_93 = arith.constant 0 : index
    %c0_94 = arith.constant 0 : index
    %251 = vector.load %arg5[%c0_92, %c0_93, %c0_94] : memref<1x11x256xf32, #tpu.memory_space<vmem>>, vector<1x4x256xf32>
    %252 = vector.shape_cast %251 : vector<1x4x256xf32> to vector<4x256xf32>
    %253 = vector.shape_cast %250 : vector<4x256xf32> to vector<1x4x256xf32>
    tpu.vector_store %arg5[%c0_92, %c0_93, %c0_94], %253 {strides = array<i32>} : memref<1x11x256xf32, #tpu.memory_space<vmem>>, vector<1x4x256xf32>,
    %c0_95 = arith.constant 0 : index
    %c4_96 = arith.constant 4 : index
    %c0_97 = arith.constant 0 : index
    %254 = vector.load %arg5[%c0_95, %c4_96, %c0_97] : memref<1x11x256xf32, #tpu.memory_space<vmem>>, vector<1x6x256xf32>
    %255 = vector.shape_cast %254 : vector<1x6x256xf32> to vector<6x256xf32>
    %256 = vector.shape_cast %249 : vector<6x256xf32> to vector<1x6x256xf32>
    tpu.vector_store %arg5[%c0_95, %c4_96, %c0_97], %256 {strides = array<i32>} : memref<1x11x256xf32, #tpu.memory_space<vmem>>, vector<1x6x256xf32>,
    %cst_98 = arith.constant dense<0xFF800000> : vector<256xf32>
    %257 = vector.multi_reduction <maximumf>, %249, %cst_98 [0] : vector<6x256xf32> to vector<256xf32>
    %258 = vector.shape_cast %257 : vector<256xf32> to vector<1x256xf32>
    %c0_99 = arith.constant 0 : index
    %c10_100 = arith.constant 10 : index
    %c0_101 = arith.constant 0 : index
    %259 = vector.load %arg5[%c0_99, %c10_100, %c0_101] : memref<1x11x256xf32, #tpu.memory_space<vmem>>, vector<1x1x256xf32>
    %260 = vector.shape_cast %259 : vector<1x1x256xf32> to vector<1x256xf32>
    %261 = vector.shape_cast %258 : vector<1x256xf32> to vector<1x1x256xf32>
    tpu.vector_store %arg5[%c0_99, %c10_100, %c0_101], %261 {strides = array<i32>} : memref<1x11x256xf32, #tpu.memory_space<vmem>>, vector<1x1x256xf32>,
    return
  }
  func.func @transform_0(%arg0: i32, %arg1: i32) -> (i32, i32, i32) {
    %c0_i32 = arith.constant 0 : i32
    %c0_i32_0 = arith.constant 0 : i32
    return %arg0, %c0_i32, %arg1 : i32, i32, i32
  }
  func.func @transform_1(%arg0: i32, %arg1: i32) -> (i32, i32) {
    %c0_i32 = arith.constant 0 : i32
    %c0_i32_0 = arith.constant 0 : i32
    %c0_i32_1 = arith.constant 0 : i32
    return %c0_i32, %c0_i32_0 : i32, i32
  }
  func.func @transform_2(%arg0: i32, %arg1: i32) -> (i32, i32) {
    %c0_i32 = arith.constant 0 : i32
    %c0_i32_0 = arith.constant 0 : i32
    %c0_i32_1 = arith.constant 0 : i32
    return %c0_i32, %c0_i32_0 : i32, i32
  }
  func.func @transform_3(%arg0: i32, %arg1: i32) -> (i32, i32, i32) {
    %c0_i32 = arith.constant 0 : i32
    %c0_i32_0 = arith.constant 0 : i32
    return %arg0, %c0_i32, %arg1 : i32, i32, i32
  }
}

</mosaic_0001>

<llo_original>
// kernel: domain_adapted_yolo_forward.1
$region0: #{domain_adapted_yolo_forward.1}
  #allocation0 [shape = 'u32[]', space=smem, size = 0x4, offset = 0x4, fixed_abs, tag = 'smem constant byte address 0x4 - core index']
  #allocation1 [shape = 'u32[144,128]{1,0:T(1,128)}', space=vmem, size = 0x12000, scoped, tag = 'internal scratch']
  %s0 = inlined_call_operand.vmem [shape: f32[2,3,256], index: 0, kind: input, shape index: {}]
  %s1 = inlined_call_operand.vmem [shape: bf16[800,128], index: 1, kind: input, shape index: {}]
  %s2 = inlined_call_operand.vmem [shape: f32[48,20], index: 2, kind: input, shape index: {}]
  %s3 = inlined_call_operand.vmem [shape: f32[2,11,256], index: 3, kind: output, shape index: {}]
  %s4 = sld [smem:[#allocation0]]
  $region45: #{domain_adapted_yolo_forward.1} parent=0
    _
  %s6 = ssub.s32 1, %s4
  %s7 = scalar_select 0, %s6, %s4
  loop: start=0, step=1, limit=4
  $region2: #{domain_adapted_yolo_forward.1} parent=0 // loop_pre_header
    _
  $region3: #{domain_adapted_yolo_forward.1} parent=0 // loop_header
    %s9 = sphi 0, %s13
    %p10 = scmp.ge.s32.totalorder %s9, 4
    %s16 = sphi 0, %s28
    %s17 = sphi 0, %s24
    %s18 = sphi 0, %s16
    %s19 = sphi 0, %s17
    %s20 = sphi 0, %s18
    %s21 = sphi 0, %s19
    %s33 = sphi 0, %s35
    %s36 = sphi 0, %s33
    %s37 = sphi 0, %s36
    %s53 = sphi 0, %s37
    %s57 = sphi 0, %s57
    %s59 = sphi 0, %s57
    %s60 = sphi 0, %s59
    %s74 = sphi 0, %s60
    %s78 = sphi 0, %s78
    %s80 = sphi 0, %s78
    %s81 = sphi 0, %s80
    %s95 = sphi 0, %s81
    %s103 = sphi 0, %s105
    %s106 = sphi 0, %s103
    %s107 = sphi 0, %s106
    %s123 = sphi 0, %s107
  $region4: #{domain_adapted_yolo_forward.1} parent=0 // loop_header_branch
    %12 = sbr.rel (%p10) target = $region8
  $region5: #{domain_adapted_yolo_forward.1} parent=0 // loop_body
    %s14 = ssub.s32 %s9, 1
    %s15 = ssub.s32 %s9, 2
    %s22 = sadd.s32 1, %s17
    %p23 = scmp.ge.s32.totalorder %s22, 1
    %s24 = scalar_select %p23, 0, %s22
    %s25 = sadd.s32 1, %s16
    %s26 = scalar_select %p23, %s25, %s16
    %p27 = scmp.ge.s32.totalorder %s26, 2
    %s28 = scalar_select %p27, 0, %s26
    %s29 = ssub.s32 %s16, %s28
    %s30 = ssub.s32 %s17, %s24
    %s31 = sor.u32 %s29, %s30
    %p32 = scmp.eq.s32.totalorder %s31, 0
    %s34 = sadd.s32 %s33, 1
    %s35 = scalar_select %p32, %s33, %s34
    %p38 = pneg %p32
    %p39 = scmp.eq.s32.totalorder %s9, 1
    %p40 = por %p38, %p39
    %p41 = scmp.ne.s32.totalorder %s33, %s36
    %p42 = scmp.eq.s32.totalorder %s9, 0
    %p43 = por %p41, %p42
    %p44 = scmp.ne.s32.totalorder %s33, %s36
    %p45 = scmp.eq.s32.totalorder %s14, 1
    %p46 = por %p44, %p45
    %p47 = scmp.ne.s32.totalorder %s36, %s37
    %p48 = scmp.eq.s32.totalorder %s14, 0
    %p49 = por %p47, %p48
    %p50 = scmp.ne.s32.totalorder %s36, %s37
    %p51 = scmp.eq.s32.totalorder %s15, 1
    %p52 = por %p50, %p51
    %p54 = scmp.ne.s32.totalorder %s37, %s53
    %p55 = scmp.eq.s32.totalorder %s15, 0
    %p56 = por %p54, %p55
    %s58 = sadd.s32 %s57, 1
    %p61 = scmp.eq.s32.totalorder %s9, 1
    %p62 = scmp.ne.s32.totalorder %s57, %s59
    %p63 = scmp.eq.s32.totalorder %s9, 0
    %p64 = por %p62, %p63
    %p65 = scmp.ne.s32.totalorder %s57, %s59
    %p66 = scmp.eq.s32.totalorder %s14, 1
    %p67 = por %p65, %p66
    %p68 = scmp.ne.s32.totalorder %s59, %s60
    %p69 = scmp.eq.s32.totalorder %s14, 0
    %p70 = por %p68, %p69
    %p71 = scmp.ne.s32.totalorder %s59, %s60
    %p72 = scmp.eq.s32.totalorder %s15, 1
    %p73 = por %p71, %p72
    %p75 = scmp.ne.s32.totalorder %s60, %s74
    %p76 = scmp.eq.s32.totalorder %s15, 0
    %p77 = por %p75, %p76
    %s79 = sadd.s32 %s78, 1
    %p82 = scmp.eq.s32.totalorder %s9, 1
    %p83 = scmp.ne.s32.totalorder %s78, %s80
    %p84 = scmp.eq.s32.totalorder %s9, 0
    %p85 = por %p83, %p84
    %p86 = scmp.ne.s32.totalorder %s78, %s80
    %p87 = scmp.eq.s32.totalorder %s14, 1
    %p88 = por %p86, %p87
    %p89 = scmp.ne.s32.totalorder %s80, %s81
    %p90 = scmp.eq.s32.totalorder %s14, 0
    %p91 = por %p89, %p90
    %p92 = scmp.ne.s32.totalorder %s80, %s81
    %p93 = scmp.eq.s32.totalorder %s15, 1
    %p94 = por %p92, %p93
    %p96 = scmp.ne.s32.totalorder %s81, %s95
    %p97 = scmp.eq.s32.totalorder %s15, 0
    %p98 = por %p96, %p97
    %s99 = ssub.s32 %s16, %s28
    %s100 = ssub.s32 %s17, %s24
    %s101 = sor.u32 %s99, %s100
    %p102 = scmp.eq.s32.totalorder %s101, 0
    %s104 = sadd.s32 %s103, 1
    %s105 = scalar_select %p102, %s103, %s104
    %p108 = pneg %p102
    %p109 = scmp.eq.s32.totalorder %s9, 1
    %p110 = por %p108, %p109
    %p111 = scmp.ne.s32.totalorder %s103, %s106
    %p112 = scmp.eq.s32.totalorder %s9, 0
    %p113 = por %p111, %p112
    %p114 = scmp.ne.s32.totalorder %s103, %s106
    %p115 = scmp.eq.s32.totalorder %s14, 1
    %p116 = por %p114, %p115
    %p117 = scmp.ne.s32.totalorder %s106, %s107
    %p118 = scmp.eq.s32.totalorder %s14, 0
    %p119 = por %p117, %p118
    %p120 = scmp.ne.s32.totalorder %s106, %s107
    %p121 = scmp.eq.s32.totalorder %s15, 1
    %p122 = por %p120, %p121
    %p124 = scmp.ne.s32.totalorder %s107, %s123
    %p125 = scmp.eq.s32.totalorder %s15, 0
    %p126 = por %p124, %p125
    %p127 = scmp.le.s32.totalorder 1, %s9
    %p128 = scmp.lt.s32.totalorder %s9, 3
    %p129 = pnand %p127, %p128
    %p130 = pneg %p129
    // Predicated region
    $region9: #{domain_adapted_yolo_forward.1} parent=5 // pred_check
      _
    $region10: #{domain_adapted_yolo_forward.1} parent=5 // pred_check_branch
      %132 = sbr.rel (%p129) target = $region12
    $region11: #{domain_adapted_yolo_forward.1} parent=5 // pred_region
      %s133 = ssub.s32 %s9, 1
      // Predicated region
      $region13: #{domain_adapted_yolo_forward.1} parent=11 // pred_check
        %p134 = pneg %p70
      $region14: #{domain_adapted_yolo_forward.1} parent=11 // pred_check_branch
        %136 = sbr.rel (%p134) target = $region16
      $region15: #{domain_adapted_yolo_forward.1} parent=11 // pred_region
        _
      $region16: #{domain_adapted_yolo_forward.1} parent=11 // pred_fallthru
        _
      // Predicated region
      $region17: #{domain_adapted_yolo_forward.1} parent=11 // pred_check
        %p137 = pneg %p91
      $region18: #{domain_adapted_yolo_forward.1} parent=11 // pred_check_branch
        %139 = sbr.rel (%p137) target = $region20
      $region19: #{domain_adapted_yolo_forward.1} parent=11 // pred_region
        _
      $region20: #{domain_adapted_yolo_forward.1} parent=11 // pred_fallthru
        _
    $region12: #{domain_adapted_yolo_forward.1} parent=5 // pred_fallthru
      _
    %p140 = scmp.lt.s32.totalorder %s9, 2
    // Predicated region
    $region21: #{domain_adapted_yolo_forward.1} parent=5 // pred_check
      %p141 = pneg %p140
    $region22: #{domain_adapted_yolo_forward.1} parent=5 // pred_check_branch
      %143 = sbr.rel (%p141) target = $region24
    $region23: #{domain_adapted_yolo_forward.1} parent=5 // pred_region
      // Predicated region
      $region25: #{domain_adapted_yolo_forward.1} parent=23 // pred_check
        %p144 = pneg %p43
      $region26: #{domain_adapted_yolo_forward.1} parent=23 // pred_check_branch
        %146 = sbr.rel (%p144) target = $region28
      $region27: #{domain_adapted_yolo_forward.1} parent=23 // pred_region
        %s147 = smul.u32 2, %s17
        %p148 = scmp.lt.s32.totalorder %s16, 1
        %s149 = scalar_select %p148, %s16, 1
        %p150 = scmp.lt.s32.totalorder %s147, 1
        %s151 = scalar_select %p150, %s147, 1
        %s152 = smul.addr %s149, 2
        %s153 = sadd.s32 %s151, %s152
        %s154 = smul.addr %s153, 4
        %s155 = scalar_lea.vmem %s0, %s154
        %s156 = smul.u32 2, %s17
      $region28: #{domain_adapted_yolo_forward.1} parent=23 // pred_fallthru
        _
    $region24: #{domain_adapted_yolo_forward.1} parent=5 // pred_fallthru
      _
    %p157 = scmp.le.s32.totalorder 1, %s9
    %p158 = scmp.lt.s32.totalorder %s9, 3
    %p159 = pnand %p157, %p158
    %p160 = pneg %p159
    // Predicated region
    $region29: #{domain_adapted_yolo_forward.1} parent=5 // pred_check
      _
    $region30: #{domain_adapted_yolo_forward.1} parent=5 // pred_check_branch
      %162 = sbr.rel (%p159) target = $region32
    $region31: #{domain_adapted_yolo_forward.1} parent=5 // pred_region
      %s163 = ssub.s32 %s9, 1
      %s164 = smul.u32 2, %s19
      %p165 = scmp.lt.s32.totalorder %s18, 1
      %s166 = scalar_select %p165, %s18, 1
      %p167 = scmp.lt.s32.totalorder %s164, 1
      %s168 = scalar_select %p167, %s164, 1
      %s169 = smul.addr %s166, 2
      %s170 = sadd.s32 %s168, %s169
      %s171 = smul.addr %s170, 4
      %s172 = scalar_lea.vmem %s0, %s171
      %p173 = pneg %p49
      %p174 = pneg %p46
      %p175 = pneg %p70
      %p176 = pneg %p67
      %p177 = pneg %p91
      %p178 = pneg %p88
      %p179 = pneg %p119
      %p180 = pneg %p116
      %s181 = smul.u32 2, %s19
      %p182 = scmp.lt.s32.totalorder %s18, 1
      %s183 = scalar_select %p182, %s18, 1
      %p184 = scmp.lt.s32.totalorder %s181, 1
      %s185 = scalar_select %p184, %s181, 1
      %s186 = smul.addr %s183, 4
      %s187 = sadd.s32 %s185, %s186
      %s188 = smul.addr %s187, 8
      %s189 = scalar_lea.vmem %s3, %s188
      %s190 = smul.u32 2, %s19
      %p191 = scmp.lt.s32.totalorder %s18, 1
      %s192 = scalar_select %p191, %s18, 1
      %p193 = scmp.lt.s32.totalorder %s190, 1
      %s194 = scalar_select %p193, %s190, 1
      %s195 = smul.addr %s192, 2
      %s196 = sadd.s32 %s194, %s195
      %s197 = smul.addr %s196, 4
      %s198 = scalar_lea.vmem %s0, %s197
      %s199 = smul.u32 2, %s19
      %s200 = smul.u32 2, %s19
      %p201 = scmp.lt.s32.totalorder %s18, 1
      %s202 = scalar_select %p201, %s18, 1
      %p203 = scmp.lt.s32.totalorder %s200, 1
      %s204 = scalar_select %p203, %s200, 1
      %s205 = smul.addr %s202, 4
      %s206 = sadd.s32 %s204, %s205
      %s207 = smul.addr %s206, 8
      %s208 = scalar_lea.vmem %s3, %s207
      %s209 = smul.u32 2, %s19
      %v211 = vld [vmem:[%s198] sm:$0x77]
      %v212 = vld [vmem:[%s1] sm:$0xf]
      %v214 = vcombine.high %v211, %v211
      %v216 = vpack.c.bf16 %v211, %v211
      %v217 = vpack.c.bf16 %v214, %v214
      %v218 = vld [vmem:[%s2] sm:$0xff]
      %220 = vset.pattern.permute.xlu0 0
      %221 = vperm.xlu0 %220, %v218
      %v222 = vpop.permute.xlu0 %221
      %vm224 = vcmask 23552
      %v226 = vsel %vm224, %v212, 0
      %vm228 = vcmask 1040384
      %vm229 = vcmask 1041408
      %v230 = vsel %vm228, 4294967295, 65535
      %v231 = vsel %vm229, %v230, 0
      %v233 = vand.u32 %v216, %v231
      %v236 = vand.u32 %v217, %v231
      %238 = vmatprep.subr.bf16.mxu0 %v236
      %239 = vmatpush1.bf16.msra.mxu0 %v233
      %240 = vmatprep.subr.bf16.mxu0 0
      %241 = vmatpush1.bf16.msra.mxu0 0
      %242 = vmatprep.subr.bf16.mxu0 0
      %243 = vmatpush1.bf16.msra.mxu0 0
      %244 = vmatprep.subr.bf16.mxu0 0
      %245 = vmatpush1.bf16.msra.mxu0 0
      %246 = vmatprep.subr.bf16.mxu0 0
      %247 = vmatpush1.bf16.msra.mxu0 0
      %248 = vmatprep.subr.bf16.mxu0 0
      %249 = vmatpush1.bf16.msra.mxu0 0
      %250 = vmatprep.subr.bf16.mxu0 0
      %251 = vmatpush1.bf16.msra.mxu0 0
      %252 = vmatprep.subr.bf16.mxu0 0
      %253 = vmatpush1.bf16.msra.mxu0 0
      %254 = vmatprep.subr.bf16.mxu0 0
      %255 = vmatpush1.bf16.msra.mxu0 0
      %256 = vmatprep.subr.bf16.mxu0 0
      %257 = vmatpush1.bf16.msra.mxu0 0
      %258 = vmatprep.subr.bf16.mxu0 0
      %259 = vmatpush1.bf16.msra.mxu0 0
      %260 = vmatprep.subr.bf16.mxu0 0
      %261 = vmatpush1.bf16.msra.mxu0 0
      %262 = vmatprep.subr.bf16.mxu0 0
      %263 = vmatpush1.bf16.msra.mxu0 0
      %264 = vmatprep.subr.bf16.mxu0 0
      %265 = vmatpush1.bf16.msra.mxu0 0
      %266 = vmatprep.subr.bf16.mxu0 0
      %267 = vmatpush1.bf16.msra.mxu0 0
      %268 = vmatprep.subr.bf16.mxu0 0
      %269 = vmatpush1.bf16.msra.mxu0 0
      %270 = vmatprep.mubr.bf16.mxu0 0
      %271 = vmatmul.mubr.bf16.gmra.mrb[0].mxu0 %v226
      %v272 = vpop.f32.mrb[0].mxu0
      %v273 = vadd.f32 %v222, %v272
      %v274 = vpop.f32.mrb[0].mxu0
      %v275 = vadd.f32 %v222, %v274
      %v276 = vpop.f32.mrb[0].mxu0
      %v277 = vpop.f32.mrb[0].mxu0
      %278 = vdwg.mxu0
      %v279 = vxor.u32 %v273, 2147483648
      %v280 = vxor.u32 %v275, 2147483648
      %v281 = vmul.f32 %v279, 1.442695
      %v282 = vpow.pop %v281
      %v283 = vmul.f32 %v280, 1.442695
      %v284 = vpow.pop %v283
      %v285 = vadd.f32 %v282, 1.0
      %v286 = vadd.f32 %v284, 1.0
      %v287 = vrcp.pop %v285
      %v288 = vmul.f32 1.0, %v287
      %v289 = vrcp.pop %v286
      %v290 = vmul.f32 1.0, %v289
      %v291 = vmul.f32 %v273, %v288
      %v292 = vmul.f32 %v275, %v290
      %v293 = vld [vmem:[%s1 + $0x8] sm:$0xf]
      %v294 = vld [vmem:[%s1 + $0xc] sm:$0xf]
      %v295 = vpack.c.bf16 %v291, %v291
      %v296 = vpack.c.bf16 %v292, %v292
      %v297 = vld [vmem:[%s2] sm:$0xff]
      %v298 = vld [vmem:[%s2 + $0x8] sm:$0xff]
      %300 = vset.pattern.permute.xlu0 1
      %301 = vperm.xlu0 %300, %v297
      %v302 = vpop.permute.xlu0 %301
      %305 = vset.pattern.permute.xlu0 1
      %306 = vperm.xlu0 %305, %v298
      %v307 = vpop.permute.xlu0 %306
      %v311 = vunpack.c.l.b16 %v293
      %v312 = vunpack.c.l.b16 %v294
      %v313 = vpack.c.b16 %v312, %v311
      %vm314 = vcmask 64512
      %v316 = vsel %vm314, %v313, 0
      %vm318 = vcmask 1043456
      %v320 = vsel %vm318, %v295, 0
      %v323 = vsel %vm318, %v296, 0
      %325 = vmatprep.subr.bf16.mxu0 %v323
      %326 = vmatpush1.bf16.msra.mxu0 %v320
      %327 = vmatprep.subr.bf16.mxu0 0
      %328 = vmatpush1.bf16.msra.mxu0 0
      %329 = vmatprep.subr.bf16.mxu0 0
      %330 = vmatpush1.bf16.msra.mxu0 0
      %331 = vmatprep.subr.bf16.mxu0 0
      %332 = vmatpush1.bf16.msra.mxu0 0
      %333 = vmatprep.subr.bf16.mxu0 0
      %334 = vmatpush1.bf16.msra.mxu0 0
      %335 = vmatprep.subr.bf16.mxu0 0
      %336 = vmatpush1.bf16.msra.mxu0 0
      %337 = vmatprep.subr.bf16.mxu0 0
      %338 = vmatpush1.bf16.msra.mxu0 0
      %339 = vmatprep.subr.bf16.mxu0 0
      %340 = vmatpush1.bf16.msra.mxu0 0
      %341 = vmatprep.subr.bf16.mxu0 0
      %342 = vmatpush1.bf16.msra.mxu0 0
      %343 = vmatprep.subr.bf16.mxu0 0
      %344 = vmatpush1.bf16.msra.mxu0 0
      %345 = vmatprep.subr.bf16.mxu0 0
      %346 = vmatpush1.bf16.msra.mxu0 0
      %347 = vmatprep.subr.bf16.mxu0 0
      %348 = vmatpush1.bf16.msra.mxu0 0
      %349 = vmatprep.subr.bf16.mxu0 0
      %350 = vmatpush1.bf16.msra.mxu0 0
      %351 = vmatprep.subr.bf16.mxu0 0
      %352 = vmatpush1.bf16.msra.mxu0 0
      %353 = vmatprep.subr.bf16.mxu0 0
      %354 = vmatpush1.bf16.msra.mxu0 0
      %355 = vmatprep.subr.bf16.mxu0 0
      %356 = vmatpush1.bf16.msra.mxu0 0
      %357 = vmatprep.mubr.bf16.mxu0 0
      %358 = vmatmul.mubr.bf16.gmra.mrb[0].mxu0 %v316
      %v359 = vpop.f32.mrb[0].mxu0
      %v360 = vadd.f32 %v302, %v359
      %v361 = vpop.f32.mrb[0].mxu0
      %v362 = vadd.f32 %v302, %v361
      %v363 = vpop.f32.mrb[0].mxu0
      %v364 = vadd.f32 %v307, %v363
      %v365 = vpop.f32.mrb[0].mxu0
      %v366 = vadd.f32 %v307, %v365
      %367 = vdwg.mxu0
      %v368 = vxor.u32 %v360, 2147483648
      %v369 = vxor.u32 %v362, 2147483648
      %v370 = vxor.u32 %v364, 2147483648
      %v371 = vxor.u32 %v366, 2147483648
      %v372 = vmul.f32 %v368, 1.442695
      %v373 = vpow.pop %v372
      %v374 = vmul.f32 %v369, 1.442695
      %v375 = vpow.pop %v374
      %v376 = vmul.f32 %v370, 1.442695
      %v377 = vpow.pop %v376
      %v378 = vmul.f32 %v371, 1.442695
      %v379 = vpow.pop %v378
      %v380 = vadd.f32 %v373, 1.0
      %v381 = vadd.f32 %v375, 1.0
      %v382 = vadd.f32 %v377, 1.0
      %v383 = vadd.f32 %v379, 1.0
      %v384 = vrcp.pop %v380
      %v385 = vmul.f32 1.0, %v384
      %v386 = vrcp.pop %v381
      %v387 = vmul.f32 1.0, %v386
      %v388 = vrcp.pop %v382
      %v389 = vmul.f32 1.0, %v388
      %v390 = vrcp.pop %v383
      %v391 = vmul.f32 1.0, %v390
      %v392 = vmul.f32 %v360, %v385
      %v393 = vmul.f32 %v362, %v387
      %v394 = vmul.f32 %v364, %v389
      %v395 = vmul.f32 %v366, %v391
      %v396 = vld [vmem:[%s1 + $0x10] sm:$0xf]
      %v397 = vld [vmem:[%s1 + $0x14] sm:$0xf]
      %v398 = vpack.c.bf16 %v394, %v392
      %v399 = vpack.c.bf16 %v395, %v393
      %400 = vset.pattern.permute.xlu0 2
      %401 = vperm.xlu0 %400, %v297
      %v402 = vpop.permute.xlu0 %401
      %404 = vset.pattern.permute.xlu0 2
      %405 = vperm.xlu0 %404, %v298
      %v406 = vpop.permute.xlu0 %405
      %v410 = vunpack.c.l.b16 %v396
      %v411 = vunpack.c.l.b16 %v397
      %v412 = vpack.c.b16 %v411, %v410
      %vm413 = vcmask 130048
      %v415 = vsel %vm413, %v412, 0
      %417 = vmatprep.subr.bf16.mxu0 %v399
      %418 = vmatpush1.bf16.msra.mxu0 %v398
      %419 = vmatprep.subr.bf16.mxu0 0
      %420 = vmatpush1.bf16.msra.mxu0 0
      %421 = vmatprep.subr.bf16.mxu0 0
      %422 = vmatpush1.bf16.msra.mxu0 0
      %423 = vmatprep.subr.bf16.mxu0 0
      %424 = vmatpush1.bf16.msra.mxu0 0
      %425 = vmatprep.subr.bf16.mxu0 0
      %426 = vmatpush1.bf16.msra.mxu0 0
      %427 = vmatprep.subr.bf16.mxu0 0
      %428 = vmatpush1.bf16.msra.mxu0 0
      %429 = vmatprep.subr.bf16.mxu0 0
      %430 = vmatpush1.bf16.msra.mxu0 0
      %431 = vmatprep.subr.bf16.mxu0 0
      %432 = vmatpush1.bf16.msra.mxu0 0
      %433 = vmatprep.subr.bf16.mxu0 0
      %434 = vmatpush1.bf16.msra.mxu0 0
      %435 = vmatprep.subr.bf16.mxu0 0
      %436 = vmatpush1.bf16.msra.mxu0 0
      %437 = vmatprep.subr.bf16.mxu0 0
      %438 = vmatpush1.bf16.msra.mxu0 0
      %439 = vmatprep.subr.bf16.mxu0 0
      %440 = vmatpush1.bf16.msra.mxu0 0
      %441 = vmatprep.subr.bf16.mxu0 0
      %442 = vmatpush1.bf16.msra.mxu0 0
      %443 = vmatprep.subr.bf16.mxu0 0
      %444 = vmatpush1.bf16.msra.mxu0 0
      %445 = vmatprep.subr.bf16.mxu0 0
      %446 = vmatpush1.bf16.msra.mxu0 0
      %447 = vmatprep.subr.bf16.mxu0 0
      %448 = vmatpush1.bf16.msra.mxu0 0
      %449 = vmatprep.mubr.bf16.mxu0 0
      %450 = vmatmul.mubr.bf16.gmra.mrb[0].mxu0 %v415
      %v451 = vpop.f32.mrb[0].mxu0
      %v452 = vadd.f32 %v402, %v451
      %v453 = vpop.f32.mrb[0].mxu0
      %v454 = vadd.f32 %v402, %v453
      %v455 = vpop.f32.mrb[0].mxu0
      %v456 = vadd.f32 %v406, %v455
      %v457 = vpop.f32.mrb[0].mxu0
      %v458 = vadd.f32 %v406, %v457
      %459 = vdwg.mxu0
      %v460 = vxor.u32 %v452, 2147483648
      %v461 = vxor.u32 %v454, 2147483648
      %v462 = vxor.u32 %v456, 2147483648
      %v463 = vxor.u32 %v458, 2147483648
      %v464 = vmul.f32 %v460, 1.442695
      %v465 = vpow.pop %v464
      %v466 = vmul.f32 %v461, 1.442695
      %v467 = vpow.pop %v466
      %v468 = vmul.f32 %v462, 1.442695
      %v469 = vpow.pop %v468
      %v470 = vmul.f32 %v463, 1.442695
      %v471 = vpow.pop %v470
      %v472 = vadd.f32 %v465, 1.0
      %v473 = vadd.f32 %v467, 1.0
      %v474 = vadd.f32 %v469, 1.0
      %v475 = vadd.f32 %v471, 1.0
      %v476 = vrcp.pop %v472
      %v477 = vmul.f32 1.0, %v476
      %v478 = vrcp.pop %v473
      %v479 = vmul.f32 1.0, %v478
      %v480 = vrcp.pop %v474
      %v481 = vmul.f32 1.0, %v480
      %v482 = vrcp.pop %v475
      %v483 = vmul.f32 1.0, %v482
      %v484 = vmul.f32 %v452, %v477
      %v485 = vmul.f32 %v454, %v479
      %v486 = vmul.f32 %v456, %v481
      %v487 = vmul.f32 %v458, %v483
      %v488 = vld [vmem:[%s1 + $0x18] sm:$0xf]
      %v489 = vld [vmem:[%s1 + $0x1c] sm:$0xf]
      %v490 = vld [vmem:[%s1 + $0x20] sm:$0xf]
      %v491 = vpack.c.bf16 %v486, %v484
      %v492 = vpack.c.bf16 %v487, %v485
      %v493 = vld [vmem:[%s2] sm:$0xff]
      %v494 = vld [vmem:[%s2 + $0x8] sm:$0xff]
      %v495 = vld [vmem:[%s2 + $0x10] sm:$0xff]
      %497 = vset.pattern.permute.xlu0 3
      %498 = vperm.xlu0 %497, %v493
      %v499 = vpop.permute.xlu0 %498
      %502 = vset.pattern.permute.xlu0 3
      %503 = vperm.xlu0 %502, %v494
      %v504 = vpop.permute.xlu0 %503
      %507 = vset.pattern.permute.xlu0 3
      %508 = vperm.xlu0 %507, %v495
      %v509 = vpop.permute.xlu0 %508
      %v514 = vunpack.c.l.b16 %v488
      %v515 = vunpack.c.l.b16 %v489
      %v516 = vunpack.c.l.b16 %v490
      %v517 = vpack.c.b16 %v515, %v514
      %v518 = vpack.c.b16 %v516, %v516
      %v520 = vsel %vm413, %v517, 0
      %v523 = vsel %vm413, %v518, 0
      %525 = vmatprep.subr.bf16.mxu0 %v492
      %526 = vmatpush1.bf16.msra.mxu0 %v491
      %527 = vmatprep.subr.bf16.mxu0 0
      %528 = vmatpush1.bf16.msra.mxu0 0
      %529 = vmatprep.subr.bf16.mxu0 0
      %530 = vmatpush1.bf16.msra.mxu0 0
      %531 = vmatprep.subr.bf16.mxu0 0
      %532 = vmatpush1.bf16.msra.mxu0 0
      %533 = vmatprep.subr.bf16.mxu0 0
      %534 = vmatpush1.bf16.msra.mxu0 0
      %535 = vmatprep.subr.bf16.mxu0 0
      %536 = vmatpush1.bf16.msra.mxu0 0
      %537 = vmatprep.subr.bf16.mxu0 0
      %538 = vmatpush1.bf16.msra.mxu0 0
      %539 = vmatprep.subr.bf16.mxu0 0
      %540 = vmatpush1.bf16.msra.mxu0 0
      %541 = vmatprep.subr.bf16.mxu0 0
      %542 = vmatpush1.bf16.msra.mxu0 0
      %543 = vmatprep.subr.bf16.mxu0 0
      %544 = vmatpush1.bf16.msra.mxu0 0
      %545 = vmatprep.subr.bf16.mxu0 0
      %546 = vmatpush1.bf16.msra.mxu0 0
      %547 = vmatprep.subr.bf16.mxu0 0
      %548 = vmatpush1.bf16.msra.mxu0 0
      %549 = vmatprep.subr.bf16.mxu0 0
      %550 = vmatpush1.bf16.msra.mxu0 0
      %551 = vmatprep.subr.bf16.mxu0 0
      %552 = vmatpush1.bf16.msra.mxu0 0
      %553 = vmatprep.subr.bf16.mxu0 0
      %554 = vmatpush1.bf16.msra.mxu0 0
      %555 = vmatprep.subr.bf16.mxu0 0
      %556 = vmatpush1.bf16.msra.mxu0 0
      %557 = vmatprep.mubr.bf16.mxu0 0
      %558 = vmatmul.mubr.bf16.gmra.mrb[0].mxu0 %v520
      %v559 = vpop.f32.mrb[0].mxu0
      %v560 = vadd.f32 %v499, %v559
      %v561 = vpop.f32.mrb[0].mxu0
      %v562 = vadd.f32 %v499, %v561
      %v563 = vpop.f32.mrb[0].mxu0
      %v564 = vadd.f32 %v504, %v563
      %v565 = vpop.f32.mrb[0].mxu0
      %v566 = vadd.f32 %v504, %v565
      %567 = vmatprep.mubr.bf16.mxu0 0
      %568 = vmatmul.mubr.bf16.gmra.mrb[0].mxu0 %v523
      %v569 = vpop.f32.mrb[0].mxu0
      %v570 = vadd.f32 %v509, %v569
      %v571 = vpop.f32.mrb[0].mxu0
      %v572 = vadd.f32 %v509, %v571
      %v573 = vpop.f32.mrb[0].mxu0
      %v574 = vpop.f32.mrb[0].mxu0
      %575 = vdwg.mxu0
      %v576 = vxor.u32 %v560, 2147483648
      %v577 = vxor.u32 %v562, 2147483648
      %v578 = vxor.u32 %v564, 2147483648
      %v579 = vxor.u32 %v566, 2147483648
      %v580 = vxor.u32 %v570, 2147483648
      %v581 = vxor.u32 %v572, 2147483648
      %v582 = vmul.f32 %v576, 1.442695
      %v583 = vpow.pop %v582
      %v584 = vmul.f32 %v577, 1.442695
      %v585 = vpow.pop %v584
      %v586 = vmul.f32 %v578, 1.442695
      %v587 = vpow.pop %v586
      %v588 = vmul.f32 %v579, 1.442695
      %v589 = vpow.pop %v588
      %v590 = vmul.f32 %v580, 1.442695
      %v591 = vpow.pop %v590
      %v592 = vmul.f32 %v581, 1.442695
      %v593 = vpow.pop %v592
      %v594 = vadd.f32 %v583, 1.0
      %v595 = vadd.f32 %v585, 1.0
      %v596 = vadd.f32 %v587, 1.0
      %v597 = vadd.f32 %v589, 1.0
      %v598 = vadd.f32 %v591, 1.0
      %v599 = vadd.f32 %v593, 1.0
      %v600 = vrcp.pop %v594
      %v601 = vmul.f32 1.0, %v600
      %v602 = vrcp.pop %v595
      %v603 = vmul.f32 1.0, %v602
      %v604 = vrcp.pop %v596
      %v605 = vmul.f32 1.0, %v604
      %v606 = vrcp.pop %v597
      %v607 = vmul.f32 1.0, %v606
      %v608 = vrcp.pop %v598
      %v609 = vmul.f32 1.0, %v608
      %v610 = vrcp.pop %v599
      %v611 = vmul.f32 1.0, %v610
      %v612 = vmul.f32 %v560, %v601
      %v613 = vmul.f32 %v562, %v603
      %v614 = vmul.f32 %v564, %v605
      %v615 = vmul.f32 %v566, %v607
      %v616 = vmul.f32 %v570, %v609
      %v617 = vmul.f32 %v572, %v611
      %v618 = vld [vmem:[%s1 + $0x28] sm:$0xf]
      %v619 = vld [vmem:[%s1 + $0x2c] sm:$0xf]
      %v620 = vld [vmem:[%s1 + $0x30] sm:$0xf]
      %v621 = vpack.c.bf16 %v614, %v612
      %v622 = vpack.c.bf16 %v615, %v613
      %v623 = vpack.c.bf16 %v616, %v616
      %v624 = vpack.c.bf16 %v617, %v617
      %625 = vset.pattern.permute.xlu0 4
      %626 = vperm.xlu0 %625, %v493
      %v627 = vpop.permute.xlu0 %626
      %629 = vset.pattern.permute.xlu0 4
      %630 = vperm.xlu0 %629, %v494
      %v631 = vpop.permute.xlu0 %630
      %633 = vset.pattern.permute.xlu0 4
      %634 = vperm.xlu0 %633, %v495
      %v635 = vpop.permute.xlu0 %634
      %v640 = vunpack.c.l.b16 %v618
      %v641 = vunpack.c.l.b16 %v619
      %v642 = vunpack.c.l.b16 %v620
      %v643 = vpack.c.b16 %v641, %v640
      %v644 = vpack.c.b16 %v642, %v642
      %vm645 = vcmask 195584
      %v647 = vsel %vm645, %v643, 0
      %v650 = vsel %vm645, %v644, 0
      %v653 = vsel %vm318, %v623, 0
      %v656 = vsel %vm318, %v624, 0
      %658 = vmatprep.subr.bf16.mxu0 %v622
      %659 = vmatpush1.bf16.msra.mxu0 %v621
      %660 = vmatprep.subr.bf16.mxu0 %v656
      %661 = vmatpush1.bf16.msra.mxu0 %v653
      %662 = vmatprep.subr.bf16.mxu0 0
      %663 = vmatpush1.bf16.msra.mxu0 0
      %664 = vmatprep.subr.bf16.mxu0 0
      %665 = vmatpush1.bf16.msra.mxu0 0
      %666 = vmatprep.subr.bf16.mxu0 0
      %667 = vmatpush1.bf16.msra.mxu0 0
      %668 = vmatprep.subr.bf16.mxu0 0
      %669 = vmatpush1.bf16.msra.mxu0 0
      %670 = vmatprep.subr.bf16.mxu0 0
      %671 = vmatpush1.bf16.msra.mxu0 0
      %672 = vmatprep.subr.bf16.mxu0 0
      %673 = vmatpush1.bf16.msra.mxu0 0
      %674 = vmatprep.subr.bf16.mxu0 0
      %675 = vmatpush1.bf16.msra.mxu0 0
      %676 = vmatprep.subr.bf16.mxu0 0
      %677 = vmatpush1.bf16.msra.mxu0 0
      %678 = vmatprep.subr.bf16.mxu0 0
      %679 = vmatpush1.bf16.msra.mxu0 0
      %680 = vmatprep.subr.bf16.mxu0 0
      %681 = vmatpush1.bf16.msra.mxu0 0
      %682 = vmatprep.subr.bf16.mxu0 0
      %683 = vmatpush1.bf16.msra.mxu0 0
      %684 = vmatprep.subr.bf16.mxu0 0
      %685 = vmatpush1.bf16.msra.mxu0 0
      %686 = vmatprep.subr.bf16.mxu0 0
      %687 = vmatpush1.bf16.msra.mxu0 0
      %688 = vmatprep.subr.bf16.mxu0 0
      %689 = vmatpush1.bf16.msra.mxu0 0
      %690 = vmatprep.mubr.bf16.mxu0 0
      %691 = vmatmul.mubr.bf16.gmra.mrb[0].mxu0 %v647
      %v692 = vpop.f32.mrb[0].mxu0
      %v693 = vadd.f32 %v627, %v692
      %v694 = vpop.f32.mrb[0].mxu0
      %v695 = vadd.f32 %v627, %v694
      %v696 = vpop.f32.mrb[0].mxu0
      %v697 = vadd.f32 %v631, %v696
      %v698 = vpop.f32.mrb[0].mxu0
      %v699 = vadd.f32 %v631, %v698
      %700 = vmatprep.mubr.bf16.mxu0 0
      %701 = vmatmul.mubr.bf16.gmra.mrb[0].mxu0 %v650
      %v702 = vpop.f32.mrb[0].mxu0
      %v703 = vadd.f32 %v635, %v702
      %v704 = vpop.f32.mrb[0].mxu0
      %v705 = vadd.f32 %v635, %v704
      %v706 = vpop.f32.mrb[0].mxu0
      %v707 = vpop.f32.mrb[0].mxu0
      %708 = vdwg.mxu0
      %v709 = vxor.u32 %v693, 2147483648
      %v710 = vxor.u32 %v695, 2147483648
      %v711 = vxor.u32 %v697, 2147483648
      %v712 = vxor.u32 %v699, 2147483648
      %v713 = vxor.u32 %v703, 2147483648
      %v714 = vxor.u32 %v705, 2147483648
      %v715 = vmul.f32 %v709, 1.442695
      %v716 = vpow.pop %v715
      %v717 = vmul.f32 %v710, 1.442695
      %v718 = vpow.pop %v717
      %v719 = vmul.f32 %v711, 1.442695
      %v720 = vpow.pop %v719
      %v721 = vmul.f32 %v712, 1.442695
      %v722 = vpow.pop %v721
      %v723 = vmul.f32 %v713, 1.442695
      %v724 = vpow.pop %v723
      %v725 = vmul.f32 %v714, 1.442695
      %v726 = vpow.pop %v725
      %v727 = vadd.f32 %v716, 1.0
      %v728 = vadd.f32 %v718, 1.0
      %v729 = vadd.f32 %v720, 1.0
      %v730 = vadd.f32 %v722, 1.0
      %v731 = vadd.f32 %v724, 1.0
      %v732 = vadd.f32 %v726, 1.0
      %v733 = vrcp.pop %v727
      %v734 = vmul.f32 1.0, %v733
      %v735 = vrcp.pop %v728
      %v736 = vmul.f32 1.0, %v735
      %v737 = vrcp.pop %v729
      %v738 = vmul.f32 1.0, %v737
      %v739 = vrcp.pop %v730
      %v740 = vmul.f32 1.0, %v739
      %v741 = vrcp.pop %v731
      %v742 = vmul.f32 1.0, %v741
      %v743 = vrcp.pop %v732
      %v744 = vmul.f32 1.0, %v743
      %v745 = vmul.f32 %v693, %v734
      %v746 = vmul.f32 %v695, %v736
      %v747 = vmul.f32 %v697, %v738
      %v748 = vmul.f32 %v699, %v740
      %v749 = vmul.f32 %v703, %v742
      %v750 = vmul.f32 %v705, %v744
      %v751 = vld [vmem:[%s1 + $0x38] sm:$0xf]
      %v752 = vld [vmem:[%s1 + $0x3c] sm:$0xf]
      %v753 = vld [vmem:[%s1 + $0x40] sm:$0xf]
      %v754 = vld [vmem:[%s1 + $0x44] sm:$0xf]
      %v755 = vpack.c.bf16 %v747, %v745
      %v756 = vpack.c.bf16 %v748, %v746
      %v757 = vpack.c.bf16 %v749, %v749
      %v758 = vpack.c.bf16 %v750, %v750
      %v759 = vld [vmem:[%s2] sm:$0xff]
      %v760 = vld [vmem:[%s2 + $0x8] sm:$0xff]
      %v761 = vld [vmem:[%s2 + $0x10] sm:$0xff]
      %v762 = vld [vmem:[%s2 + $0x18] sm:$0xff]
      %764 = vset.pattern.permute.xlu0 5
      %765 = vperm.xlu0 %764, %v759
      %v766 = vpop.permute.xlu0 %765
      %769 = vset.pattern.permute.xlu0 5
      %770 = vperm.xlu0 %769, %v760
      %v771 = vpop.permute.xlu0 %770
      %774 = vset.pattern.permute.xlu0 5
      %775 = vperm.xlu0 %774, %v761
      %v776 = vpop.permute.xlu0 %775
      %779 = vset.pattern.permute.xlu0 5
      %780 = vperm.xlu0 %779, %v762
      %v781 = vpop.permute.xlu0 %780
      %v787 = vunpack.c.l.b16 %v751
      %v788 = vunpack.c.l.b16 %v752
      %v789 = vunpack.c.l.b16 %v753
      %v790 = vunpack.c.l.b16 %v754
      %v791 = vpack.c.b16 %v788, %v787
      %v792 = vpack.c.b16 %v790, %v789
      %v794 = vsel %vm645, %v791, 0
      %v797 = vsel %vm645, %v792, 0
      %v800 = vsel %vm318, %v757, 0
      %v803 = vsel %vm318, %v758, 0
      %805 = vmatprep.subr.bf16.mxu0 %v756
      %806 = vmatpush1.bf16.msra.mxu0 %v755
      %807 = vmatprep.subr.bf16.mxu0 %v803
      %808 = vmatpush1.bf16.msra.mxu0 %v800
      %809 = vmatprep.subr.bf16.mxu0 0
      %810 = vmatpush1.bf16.msra.mxu0 0
      %811 = vmatprep.subr.bf16.mxu0 0
      %812 = vmatpush1.bf16.msra.mxu0 0
      %813 = vmatprep.subr.bf16.mxu0 0
      %814 = vmatpush1.bf16.msra.mxu0 0
      %815 = vmatprep.subr.bf16.mxu0 0
      %816 = vmatpush1.bf16.msra.mxu0 0
      %817 = vmatprep.subr.bf16.mxu0 0
      %818 = vmatpush1.bf16.msra.mxu0 0
      %819 = vmatprep.subr.bf16.mxu0 0
      %820 = vmatpush1.bf16.msra.mxu0 0
      %821 = vmatprep.subr.bf16.mxu0 0
      %822 = vmatpush1.bf16.msra.mxu0 0
      %823 = vmatprep.subr.bf16.mxu0 0
      %824 = vmatpush1.bf16.msra.mxu0 0
      %825 = vmatprep.subr.bf16.mxu0 0
      %826 = vmatpush1.bf16.msra.mxu0 0
      %827 = vmatprep.subr.bf16.mxu0 0
      %828 = vmatpush1.bf16.msra.mxu0 0
      %829 = vmatprep.subr.bf16.mxu0 0
      %830 = vmatpush1.bf16.msra.mxu0 0
      %831 = vmatprep.subr.bf16.mxu0 0
      %832 = vmatpush1.bf16.msra.mxu0 0
      %833 = vmatprep.subr.bf16.mxu0 0
      %834 = vmatpush1.bf16.msra.mxu0 0
      %835 = vmatprep.subr.bf16.mxu0 0
      %836 = vmatpush1.bf16.msra.mxu0 0
      %837 = vmatprep.mubr.bf16.mxu0 0
      %838 = vmatmul.mubr.bf16.gmra.mrb[0].mxu0 %v794
      %v839 = vpop.f32.mrb[0].mxu0
      %v840 = vadd.f32 %v766, %v839
      %v841 = vpop.f32.mrb[0].mxu0
      %v842 = vadd.f32 %v766, %v841
      %v843 = vpop.f32.mrb[0].mxu0
      %v844 = vadd.f32 %v771, %v843
      %v845 = vpop.f32.mrb[0].mxu0
      %v846 = vadd.f32 %v771, %v845
      %847 = vmatprep.mubr.bf16.mxu0 0
      %848 = vmatmul.mubr.bf16.gmra.mrb[0].mxu0 %v797
      %v849 = vpop.f32.mrb[0].mxu0
      %v850 = vadd.f32 %v776, %v849
      %v851 = vpop.f32.mrb[0].mxu0
      %v852 = vadd.f32 %v776, %v851
      %v853 = vpop.f32.mrb[0].mxu0
      %v854 = vadd.f32 %v781, %v853
      %v855 = vpop.f32.mrb[0].mxu0
      %v856 = vadd.f32 %v781, %v855
      %857 = vdwg.mxu0
      %v858 = vxor.u32 %v840, 2147483648
      %v859 = vxor.u32 %v842, 2147483648
      %v860 = vxor.u32 %v844, 2147483648
      %v861 = vxor.u32 %v846, 2147483648
      %v862 = vxor.u32 %v850, 2147483648
      %v863 = vxor.u32 %v852, 2147483648
      %v864 = vxor.u32 %v854, 2147483648
      %v865 = vxor.u32 %v856, 2147483648
      %v866 = vmul.f32 %v858, 1.442695
      %v867 = vpow.pop %v866
      %v868 = vmul.f32 %v859, 1.442695
      %v869 = vpow.pop %v868
      %v870 = vmul.f32 %v860, 1.442695
      %v871 = vpow.pop %v870
      %v872 = vmul.f32 %v861, 1.442695
      %v873 = vpow.pop %v872
      %v874 = vmul.f32 %v862, 1.442695
      %v875 = vpow.pop %v874
      %v876 = vmul.f32 %v863, 1.442695
      %v877 = vpow.pop %v876
      %v878 = vmul.f32 %v864, 1.442695
      %v879 = vpow.pop %v878
      %v880 = vmul.f32 %v865, 1.442695
      %v881 = vpow.pop %v880
      %v882 = vadd.f32 %v867, 1.0
      %v883 = vadd.f32 %v869, 1.0
      %v884 = vadd.f32 %v871, 1.0
      %v885 = vadd.f32 %v873, 1.0
      %v886 = vadd.f32 %v875, 1.0
      %v887 = vadd.f32 %v877, 1.0
      %v888 = vadd.f32 %v879, 1.0
      %v889 = vadd.f32 %v881, 1.0
      %v890 = vrcp.pop %v882
      %v891 = vmul.f32 1.0, %v890
      %v892 = vrcp.pop %v883
      %v893 = vmul.f32 1.0, %v892
      %v894 = vrcp.pop %v884
      %v895 = vmul.f32 1.0, %v894
      %v896 = vrcp.pop %v885
      %v897 = vmul.f32 1.0, %v896
      %v898 = vrcp.pop %v886
      %v899 = vmul.f32 1.0, %v898
      %v900 = vrcp.pop %v887
      %v901 = vmul.f32 1.0, %v900
      %v902 = vrcp.pop %v888
      %v903 = vmul.f32 1.0, %v902
      %v904 = vrcp.pop %v889
      %v905 = vmul.f32 1.0, %v904
      %v906 = vmul.f32 %v840, %v891
      %v907 = vmul.f32 %v842, %v893
      %v908 = vmul.f32 %v844, %v895
      %v909 = vmul.f32 %v846, %v897
      %v910 = vmul.f32 %v850, %v899
      %v911 = vmul.f32 %v852, %v901
      %v912 = vmul.f32 %v854, %v903
      %v913 = vmul.f32 %v856, %v905
      %v914 = vld [vmem:[%s1 + $0x48] sm:$0xf]
      %v915 = vld [vmem:[%s1 + $0x4c] sm:$0xf]
      %v916 = vld [vmem:[%s1 + $0x50] sm:$0xf]
      %v917 = vld [vmem:[%s1 + $0x54] sm:$0xf]
      %v918 = vpack.c.bf16 %v908, %v906
      %v919 = vpack.c.bf16 %v909, %v907
      %v920 = vpack.c.bf16 %v912, %v910
      %v921 = vpack.c.bf16 %v913, %v911
      %922 = vset.pattern.permute.xlu0 6
      %923 = vperm.xlu0 %922, %v759
      %v924 = vpop.permute.xlu0 %923
      %926 = vset.pattern.permute.xlu0 6
      %927 = vperm.xlu0 %926, %v760
      %v928 = vpop.permute.xlu0 %927
      %930 = vset.pattern.permute.xlu0 6
      %931 = vperm.xlu0 %930, %v761
      %v932 = vpop.permute.xlu0 %931
      %934 = vset.pattern.permute.xlu0 6
      %935 = vperm.xlu0 %934, %v762
      %v936 = vpop.permute.xlu0 %935
      %v942 = vunpack.c.l.b16 %v914
      %v943 = vunpack.c.l.b16 %v915
      %v944 = vunpack.c.l.b16 %v916
      %v945 = vunpack.c.l.b16 %v917
      %v946 = vpack.c.b16 %v943, %v942
      %v947 = vpack.c.b16 %v945, %v944
      %vm948 = vcmask 261120
      %v950 = vsel %vm948, %v946, 0
      %v953 = vsel %vm948, %v947, 0
      %955 = vmatprep.subr.bf16.mxu0 %v919
      %956 = vmatpush1.bf16.msra.mxu0 %v918
      %957 = vmatprep.subr.bf16.mxu0 %v921
      %958 = vmatpush1.bf16.msra.mxu0 %v920
      %959 = vmatprep.subr.bf16.mxu0 0
      %960 = vmatpush1.bf16.msra.mxu0 0
      %961 = vmatprep.subr.bf16.mxu0 0
      %962 = vmatpush1.bf16.msra.mxu0 0
      %963 = vmatprep.subr.bf16.mxu0 0
      %964 = vmatpush1.bf16.msra.mxu0 0
      %965 = vmatprep.subr.bf16.mxu0 0
      %966 = vmatpush1.bf16.msra.mxu0 0
      %967 = vmatprep.subr.bf16.mxu0 0
      %968 = vmatpush1.bf16.msra.mxu0 0
      %969 = vmatprep.subr.bf16.mxu0 0
      %970 = vmatpush1.bf16.msra.mxu0 0
      %971 = vmatprep.subr.bf16.mxu0 0
      %972 = vmatpush1.bf16.msra.mxu0 0
      %973 = vmatprep.subr.bf16.mxu0 0
      %974 = vmatpush1.bf16.msra.mxu0 0
      %975 = vmatprep.subr.bf16.mxu0 0
      %976 = vmatpush1.bf16.msra.mxu0 0
      %977 = vmatprep.subr.bf16.mxu0 0
      %978 = vmatpush1.bf16.msra.mxu0 0
      %979 = vmatprep.subr.bf16.mxu0 0
      %980 = vmatpush1.bf16.msra.mxu0 0
      %981 = vmatprep.subr.bf16.mxu0 0
      %982 = vmatpush1.bf16.msra.mxu0 0
      %983 = vmatprep.subr.bf16.mxu0 0
      %984 = vmatpush1.bf16.msra.mxu0 0
      %985 = vmatprep.subr.bf16.mxu0 0
      %986 = vmatpush1.bf16.msra.mxu0 0
      %987 = vmatprep.mubr.bf16.mxu0 0
      %988 = vmatmul.mubr.bf16.gmra.mrb[0].mxu0 %v950
      %v989 = vpop.f32.mrb[0].mxu0
      %v990 = vadd.f32 %v924, %v989
      %v991 = vpop.f32.mrb[0].mxu0
      %v992 = vadd.f32 %v924, %v991
      %v993 = vpop.f32.mrb[0].mxu0
      %v994 = vadd.f32 %v928, %v993
      %v995 = vpop.f32.mrb[0].mxu0
      %v996 = vadd.f32 %v928, %v995
      %997 = vmatprep.mubr.bf16.mxu0 0
      %998 = vmatmul.mubr.bf16.gmra.mrb[0].mxu0 %v953
      %v999 = vpop.f32.mrb[0].mxu0
      %v1000 = vadd.f32 %v932, %v999
      %v1001 = vpop.f32.mrb[0].mxu0
      %v1002 = vadd.f32 %v932, %v1001
      %v1003 = vpop.f32.mrb[0].mxu0
      %v1004 = vadd.f32 %v936, %v1003
      %v1005 = vpop.f32.mrb[0].mxu0
      %v1006 = vadd.f32 %v936, %v1005
      %1007 = vdwg.mxu0
      %v1008 = vxor.u32 %v990, 2147483648
      %v1009 = vxor.u32 %v992, 2147483648
      %v1010 = vxor.u32 %v994, 2147483648
      %v1011 = vxor.u32 %v996, 2147483648
      %v1012 = vxor.u32 %v1000, 2147483648
      %v1013 = vxor.u32 %v1002, 2147483648
      %v1014 = vxor.u32 %v1004, 2147483648
      %v1015 = vxor.u32 %v1006, 2147483648
      %v1016 = vmul.f32 %v1008, 1.442695
      %v1017 = vpow.pop %v1016
      %v1018 = vmul.f32 %v1009, 1.442695
      %v1019 = vpow.pop %v1018
      %v1020 = vmul.f32 %v1010, 1.442695
      %v1021 = vpow.pop %v1020
      %v1022 = vmul.f32 %v1011, 1.442695
      %v1023 = vpow.pop %v1022
      %v1024 = vmul.f32 %v1012, 1.442695
      %v1025 = vpow.pop %v1024
      %v1026 = vmul.f32 %v1013, 1.442695
      %v1027 = vpow.pop %v1026
      %v1028 = vmul.f32 %v1014, 1.442695
      %v1029 = vpow.pop %v1028
      %v1030 = vmul.f32 %v1015, 1.442695
      %v1031 = vpow.pop %v1030
      %v1032 = vadd.f32 %v1017, 1.0
      %v1033 = vadd.f32 %v1019, 1.0
      %v1034 = vadd.f32 %v1021, 1.0
      %v1035 = vadd.f32 %v1023, 1.0
      %v1036 = vadd.f32 %v1025, 1.0
      %v1037 = vadd.f32 %v1027, 1.0
      %v1038 = vadd.f32 %v1029, 1.0
      %v1039 = vadd.f32 %v1031, 1.0
      %v1040 = vrcp.pop %v1032
      %v1041 = vmul.f32 1.0, %v1040
      %v1042 = vrcp.pop %v1033
      %v1043 = vmul.f32 1.0, %v1042
      %v1044 = vrcp.pop %v1034
      %v1045 = vmul.f32 1.0, %v1044
      %v1046 = vrcp.pop %v1035
      %v1047 = vmul.f32 1.0, %v1046
      %v1048 = vrcp.pop %v1036
      %v1049 = vmul.f32 1.0, %v1048
      %v1050 = vrcp.pop %v1037
      %v1051 = vmul.f32 1.0, %v1050
      %v1052 = vrcp.pop %v1038
      %v1053 = vmul.f32 1.0, %v1052
      %v1054 = vrcp.pop %v1039
      %v1055 = vmul.f32 1.0, %v1054
      %v1056 = vmul.f32 %v990, %v1041
      %v1057 = vmul.f32 %v992, %v1043
      %v1058 = vmul.f32 %v994, %v1045
      %v1059 = vmul.f32 %v996, %v1047
      %v1060 = vmul.f32 %v1000, %v1049
      %v1061 = vmul.f32 %v1002, %v1051
      %v1062 = vmul.f32 %v1004, %v1053
      %v1063 = vmul.f32 %v1006, %v1055
      %v1064 = vld [vmem:[%s1 + $0x58] sm:$0xf]
      %v1065 = vld [vmem:[%s1 + $0x5c] sm:$0xf]
      %v1066 = vld [vmem:[%s1 + $0x60] sm:$0xf]
      %v1067 = vld [vmem:[%s1 + $0x64] sm:$0xf]
      %v1068 = vld [vmem:[%s1 + $0x68] sm:$0xf]
      %v1069 = vld [vmem:[%s1 + $0x6c] sm:$0xf]
      %v1070 = vpack.c.bf16 %v1058, %v1056
      %v1071 = vpack.c.bf16 %v1059, %v1057
      %v1072 = vpack.c.bf16 %v1062, %v1060
      %v1073 = vpack.c.bf16 %v1063, %v1061
      %v1074 = vld [vmem:[%s2] sm:$0xff]
      %v1075 = vld [vmem:[%s2 + $0x8] sm:$0xff]
      %v1076 = vld [vmem:[%s2 + $0x10] sm:$0xff]
      %v1077 = vld [vmem:[%s2 + $0x18] sm:$0xff]
      %v1078 = vld [vmem:[%s2 + $0x20] sm:$0xff]
      %v1079 = vld [vmem:[%s2 + $0x28] sm:$0xff]
      %1081 = vset.pattern.permute.xlu0 7
      %1082 = vperm.xlu0 %1081, %v1074
      %v1083 = vpop.permute.xlu0 %1082
      %1086 = vset.pattern.permute.xlu0 7
      %1087 = vperm.xlu0 %1086, %v1075
      %v1088 = vpop.permute.xlu0 %1087
      %1091 = vset.pattern.permute.xlu0 7
      %1092 = vperm.xlu0 %1091, %v1076
      %v1093 = vpop.permute.xlu0 %1092
      %1096 = vset.pattern.permute.xlu0 7
      %1097 = vperm.xlu0 %1096, %v1077
      %v1098 = vpop.permute.xlu0 %1097
      %1101 = vset.pattern.permute.xlu0 7
      %1102 = vperm.xlu0 %1101, %v1078
      %v1103 = vpop.permute.xlu0 %1102
      %1106 = vset.pattern.permute.xlu0 7
      %1107 = vperm.xlu0 %1106, %v1079
      %v1108 = vpop.permute.xlu0 %1107
      %v1116 = vunpack.c.l.b16 %v1064
      %v1117 = vunpack.c.l.b16 %v1065
      %v1118 = vunpack.c.l.b16 %v1066
      %v1119 = vunpack.c.l.b16 %v1067
      %v1120 = vunpack.c.l.b16 %v1068
      %v1121 = vunpack.c.l.b16 %v1069
      %v1122 = vpack.c.b16 %v1117, %v1116
      %v1123 = vpack.c.b16 %v1119, %v1118
      %v1124 = vpack.c.b16 %v1121, %v1120
      %v1126 = vsel %vm948, %v1122, 0
      %v1129 = vsel %vm948, %v1123, 0
      %v1132 = vsel %vm948, %v1124, 0
      %1134 = vmatprep.subr.bf16.mxu0 %v1071
      %1135 = vmatpush1.bf16.msra.mxu0 %v1070
      %1136 = vmatprep.subr.bf16.mxu0 %v1073
      %1137 = vmatpush1.bf16.msra.mxu0 %v1072
      %1138 = vmatprep.subr.bf16.mxu0 0
      %1139 = vmatpush1.bf16.msra.mxu0 0
      %1140 = vmatprep.subr.bf16.mxu0 0
      %1141 = vmatpush1.bf16.msra.mxu0 0
      %1142 = vmatprep.subr.bf16.mxu0 0
      %1143 = vmatpush1.bf16.msra.mxu0 0
      %1144 = vmatprep.subr.bf16.mxu0 0
      %1145 = vmatpush1.bf16.msra.mxu0 0
      %1146 = vmatprep.subr.bf16.mxu0 0
      %1147 = vmatpush1.bf16.msra.mxu0 0
      %1148 = vmatprep.subr.bf16.mxu0 0
      %1149 = vmatpush1.bf16.msra.mxu0 0
      %1150 = vmatprep.subr.bf16.mxu0 0
      %1151 = vmatpush1.bf16.msra.mxu0 0
      %1152 = vmatprep.subr.bf16.mxu0 0
      %1153 = vmatpush1.bf16.msra.mxu0 0
      %1154 = vmatprep.subr.bf16.mxu0 0
      %1155 = vmatpush1.bf16.msra.mxu0 0
      %1156 = vmatprep.subr.bf16.mxu0 0
      %1157 = vmatpush1.bf16.msra.mxu0 0
      %1158 = vmatprep.subr.bf16.mxu0 0
      %1159 = vmatpush1.bf16.msra.mxu0 0
      %1160 = vmatprep.subr.bf16.mxu0 0
      %1161 = vmatpush1.bf16.msra.mxu0 0
      %1162 = vmatprep.subr.bf16.mxu0 0
      %1163 = vmatpush1.bf16.msra.mxu0 0
      %1164 = vmatprep.subr.bf16.mxu0 0
      %1165 = vmatpush1.bf16.msra.mxu0 0
      %1166 = vmatprep.mubr.bf16.mxu0 0
      %1167 = vmatmul.mubr.bf16.gmra.mrb[0].mxu0 %v1126
      %v1168 = vpop.f32.mrb[0].mxu0
      %v1169 = vadd.f32 %v1083, %v1168
      %v1170 = vpop.f32.mrb[0].mxu0
      %v1171 = vadd.f32 %v1083, %v1170
      %v1172 = vpop.f32.mrb[0].mxu0
      %v1173 = vadd.f32 %v1088, %v1172
      %v1174 = vpop.f32.mrb[0].mxu0
      %v1175 = vadd.f32 %v1088, %v1174
      %1176 = vmatprep.mubr.bf16.mxu0 0
      %1177 = vmatmul.mubr.bf16.gmra.mrb[0].mxu0 %v1129
      %v1178 = vpop.f32.mrb[0].mxu0
      %v1179 = vadd.f32 %v1093, %v1178
      %v1180 = vpop.f32.mrb[0].mxu0
      %v1181 = vadd.f32 %v1093, %v1180
      %v1182 = vpop.f32.mrb[0].mxu0
      %v1183 = vadd.f32 %v1098, %v1182
      %v1184 = vpop.f32.mrb[0].mxu0
      %v1185 = vadd.f32 %v1098, %v1184
      %1186 = vmatprep.mubr.bf16.mxu0 0
      %1187 = vmatmul.mubr.bf16.gmra.mrb[0].mxu0 %v1132
      %v1188 = vpop.f32.mrb[0].mxu0
      %v1189 = vadd.f32 %v1103, %v1188
      %v1190 = vpop.f32.mrb[0].mxu0
      %v1191 = vadd.f32 %v1103, %v1190
      %v1192 = vpop.f32.mrb[0].mxu0
      %v1193 = vadd.f32 %v1108, %v1192
      %v1194 = vpop.f32.mrb[0].mxu0
      %v1195 = vadd.f32 %v1108, %v1194
      %1196 = vdwg.mxu0
      %v1197 = vxor.u32 %v1169, 2147483648
      %v1198 = vxor.u32 %v1171, 2147483648
      %v1199 = vxor.u32 %v1173, 2147483648
      %v1200 = vxor.u32 %v1175, 2147483648
      %v1201 = vxor.u32 %v1179, 2147483648
      %v1202 = vxor.u32 %v1181, 2147483648
      %v1203 = vxor.u32 %v1183, 2147483648
      %v1204 = vxor.u32 %v1185, 2147483648
      %v1205 = vxor.u32 %v1189, 2147483648
      %v1206 = vxor.u32 %v1191, 2147483648
      %v1207 = vxor.u32 %v1193, 2147483648
      %v1208 = vxor.u32 %v1195, 2147483648
      %v1209 = vmul.f32 %v1197, 1.442695
      %v1210 = vpow.pop %v1209
      %v1211 = vmul.f32 %v1198, 1.442695
      %v1212 = vpow.pop %v1211
      %v1213 = vmul.f32 %v1199, 1.442695
      %v1214 = vpow.pop %v1213
      %v1215 = vmul.f32 %v1200, 1.442695
      %v1216 = vpow.pop %v1215
      %v1217 = vmul.f32 %v1201, 1.442695
      %v1218 = vpow.pop %v1217
      %v1219 = vmul.f32 %v1202, 1.442695
      %v1220 = vpow.pop %v1219
      %v1221 = vmul.f32 %v1203, 1.442695
      %v1222 = vpow.pop %v1221
      %v1223 = vmul.f32 %v1204, 1.442695
      %v1224 = vpow.pop %v1223
      %v1225 = vmul.f32 %v1205, 1.442695
      %v1226 = vpow.pop %v1225
      %v1227 = vmul.f32 %v1206, 1.442695
      %v1228 = vpow.pop %v1227
      %v1229 = vmul.f32 %v1207, 1.442695
      %v1230 = vpow.pop %v1229
      %v1231 = vmul.f32 %v1208, 1.442695
      %v1232 = vpow.pop %v1231
      %v1233 = vadd.f32 %v1210, 1.0
      %v1234 = vadd.f32 %v1212, 1.0
      %v1235 = vadd.f32 %v1214, 1.0
      %v1236 = vadd.f32 %v1216, 1.0
      %v1237 = vadd.f32 %v1218, 1.0
      %v1238 = vadd.f32 %v1220, 1.0
      %v1239 = vadd.f32 %v1222, 1.0
      %v1240 = vadd.f32 %v1224, 1.0
      %v1241 = vadd.f32 %v1226, 1.0
      %v1242 = vadd.f32 %v1228, 1.0
      %v1243 = vadd.f32 %v1230, 1.0
      %v1244 = vadd.f32 %v1232, 1.0
      %v1245 = vrcp.pop %v1233
      %v1246 = vmul.f32 1.0, %v1245
      %v1247 = vrcp.pop %v1234
      %v1248 = vmul.f32 1.0, %v1247
      %v1249 = vrcp.pop %v1235
      %v1250 = vmul.f32 1.0, %v1249
      %v1251 = vrcp.pop %v1236
      %v1252 = vmul.f32 1.0, %v1251
      %v1253 = vrcp.pop %v1237
      %v1254 = vmul.f32 1.0, %v1253
      %v1255 = vrcp.pop %v1238
      %v1256 = vmul.f32 1.0, %v1255
      %v1257 = vrcp.pop %v1239
      %v1258 = vmul.f32 1.0, %v1257
      %v1259 = vrcp.pop %v1240
      %v1260 = vmul.f32 1.0, %v1259
      %v1261 = vrcp.pop %v1241
      %v1262 = vmul.f32 1.0, %v1261
      %v1263 = vrcp.pop %v1242
      %v1264 = vmul.f32 1.0, %v1263
      %v1265 = vrcp.pop %v1243
      %v1266 = vmul.f32 1.0, %v1265
      %v1267 = vrcp.pop %v1244
      %v1268 = vmul.f32 1.0, %v1267
      %v1269 = vmul.f32 %v1169, %v1246
      %v1270 = vmul.f32 %v1171, %v1248
      %v1271 = vmul.f32 %v1173, %v1250
      %v1272 = vmul.f32 %v1175, %v1252
      %v1273 = vmul.f32 %v1179, %v1254
      %v1274 = vmul.f32 %v1181, %v1256
      %v1275 = vmul.f32 %v1183, %v1258
      %v1276 = vmul.f32 %v1185, %v1260
      %v1277 = vmul.f32 %v1189, %v1262
      %v1278 = vmul.f32 %v1191, %v1264
      %v1279 = vmul.f32 %v1193, %v1266
      %v1280 = vmul.f32 %v1195, %v1268
      %v1281 = vld [vmem:[%s1 + $0x70] sm:$0xf]
      %v1282 = vld [vmem:[%s1 + $0x74] sm:$0xf]
      %v1283 = vld [vmem:[%s1 + $0x78] sm:$0xf]
      %v1284 = vld [vmem:[%s1 + $0x7c] sm:$0xf]
      %v1285 = vld [vmem:[%s1 + $0x80] sm:$0xf]
      %v1286 = vld [vmem:[%s1 + $0x84] sm:$0xf]
      %v1287 = vpack.c.bf16 %v1271, %v1269
      %v1288 = vpack.c.bf16 %v1272, %v1270
      %v1289 = vpack.c.bf16 %v1275, %v1273
      %v1290 = vpack.c.bf16 %v1276, %v1274
      %v1291 = vpack.c.bf16 %v1279, %v1277
      %v1292 = vpack.c.bf16 %v1280, %v1278
      %1293 = vset.pattern.permute.xlu0 8
      %1294 = vperm.xlu0 %1293, %v1074
      %v1295 = vpop.permute.xlu0 %1294
      %1297 = vset.pattern.permute.xlu0 8
      %1298 = vperm.xlu0 %1297, %v1075
      %v1299 = vpop.permute.xlu0 %1298
      %1301 = vset.pattern.permute.xlu0 8
      %1302 = vperm.xlu0 %1301, %v1076
      %v1303 = vpop.permute.xlu0 %1302
      %1305 = vset.pattern.permute.xlu0 8
      %1306 = vperm.xlu0 %1305, %v1077
      %v1307 = vpop.permute.xlu0 %1306
      %1309 = vset.pattern.permute.xlu0 8
      %1310 = vperm.xlu0 %1309, %v1078
      %v1311 = vpop.permute.xlu0 %1310
      %1313 = vset.pattern.permute.xlu0 8
      %1314 = vperm.xlu0 %1313, %v1079
      %v1315 = vpop.permute.xlu0 %1314
      %v1323 = vunpack.c.l.b16 %v1281
      %v1324 = vunpack.c.l.b16 %v1282
      %v1325 = vunpack.c.l.b16 %v1283
      %v1326 = vunpack.c.l.b16 %v1284
      %v1327 = vunpack.c.l.b16 %v1285
      %v1328 = vunpack.c.l.b16 %v1286
      %v1329 = vpack.c.b16 %v1324, %v1323
      %v1330 = vpack.c.b16 %v1326, %v1325
      %v1331 = vpack.c.b16 %v1328, %v1327
      %vm1332 = vcmask 392192
      %v1334 = vsel %vm1332, %v1329, 0
      %v1337 = vsel %vm1332, %v1330, 0
      %v1340 = vsel %vm1332, %v1331, 0
      %1342 = vmatprep.subr.bf16.mxu0 %v1288
      %1343 = vmatpush1.bf16.msra.mxu0 %v1287
      %1344 = vmatprep.subr.bf16.mxu0 %v1290
      %1345 = vmatpush1.bf16.msra.mxu0 %v1289
      %1346 = vmatprep.subr.bf16.mxu0 %v1292
      %1347 = vmatpush1.bf16.msra.mxu0 %v1291
      %1348 = vmatprep.subr.bf16.mxu0 0
      %1349 = vmatpush1.bf16.msra.mxu0 0
      %1350 = vmatprep.subr.bf16.mxu0 0
      %1351 = vmatpush1.bf16.msra.mxu0 0
      %1352 = vmatprep.subr.bf16.mxu0 0
      %1353 = vmatpush1.bf16.msra.mxu0 0
      %1354 = vmatprep.subr.bf16.mxu0 0
      %1355 = vmatpush1.bf16.msra.mxu0 0
      %1356 = vmatprep.subr.bf16.mxu0 0
      %1357 = vmatpush1.bf16.msra.mxu0 0
      %1358 = vmatprep.subr.bf16.mxu0 0
      %1359 = vmatpush1.bf16.msra.mxu0 0
      %1360 = vmatprep.subr.bf16.mxu0 0
      %1361 = vmatpush1.bf16.msra.mxu0 0
      %1362 = vmatprep.subr.bf16.mxu0 0
      %1363 = vmatpush1.bf16.msra.mxu0 0
      %1364 = vmatprep.subr.bf16.mxu0 0
      %1365 = vmatpush1.bf16.msra.mxu0 0
      %1366 = vmatprep.subr.bf16.mxu0 0
      %1367 = vmatpush1.bf16.msra.mxu0 0
      %1368 = vmatprep.subr.bf16.mxu0 0
      %1369 = vmatpush1.bf16.msra.mxu0 0
      %1370 = vmatprep.subr.bf16.mxu0 0
      %1371 = vmatpush1.bf16.msra.mxu0 0
      %1372 = vmatprep.subr.bf16.mxu0 0
      %1373 = vmatpush1.bf16.msra.mxu0 0
      %1374 = vmatprep.mubr.bf16.mxu0 0
      %1375 = vmatmul.mubr.bf16.gmra.mrb[0].mxu0 %v1334
      %v1376 = vpop.f32.mrb[0].mxu0
      %v1377 = vadd.f32 %v1295, %v1376
      %v1378 = vpop.f32.mrb[0].mxu0
      %v1379 = vadd.f32 %v1295, %v1378
      %v1380 = vpop.f32.mrb[0].mxu0
      %v1381 = vadd.f32 %v1299, %v1380
      %v1382 = vpop.f32.mrb[0].mxu0
      %v1383 = vadd.f32 %v1299, %v1382
      %1384 = vmatprep.mubr.bf16.mxu0 0
      %1385 = vmatmul.mubr.bf16.gmra.mrb[0].mxu0 %v1337
      %v1386 = vpop.f32.mrb[0].mxu0
      %v1387 = vadd.f32 %v1303, %v1386
      %v1388 = vpop.f32.mrb[0].mxu0
      %v1389 = vadd.f32 %v1303, %v1388
      %v1390 = vpop.f32.mrb[0].mxu0
      %v1391 = vadd.f32 %v1307, %v1390
      %v1392 = vpop.f32.mrb[0].mxu0
      %v1393 = vadd.f32 %v1307, %v1392
      %1394 = vmatprep.mubr.bf16.mxu0 0
      %1395 = vmatmul.mubr.bf16.gmra.mrb[0].mxu0 %v1340
      %v1396 = vpop.f32.mrb[0].mxu0
      %v1397 = vadd.f32 %v1311, %v1396
      %v1398 = vpop.f32.mrb[0].mxu0
      %v1399 = vadd.f32 %v1311, %v1398
      %v1400 = vpop.f32.mrb[0].mxu0
      %v1401 = vadd.f32 %v1315, %v1400
      %v1402 = vpop.f32.mrb[0].mxu0
      %v1403 = vadd.f32 %v1315, %v1402
      %1404 = vdwg.mxu0
      %v1405 = vxor.u32 %v1377, 2147483648
      %v1406 = vxor.u32 %v1379, 2147483648
      %v1407 = vxor.u32 %v1381, 2147483648
      %v1408 = vxor.u32 %v1383, 2147483648
      %v1409 = vxor.u32 %v1387, 2147483648
      %v1410 = vxor.u32 %v1389, 2147483648
      %v1411 = vxor.u32 %v1391, 2147483648
      %v1412 = vxor.u32 %v1393, 2147483648
      %v1413 = vxor.u32 %v1397, 2147483648
      %v1414 = vxor.u32 %v1399, 2147483648
      %v1415 = vxor.u32 %v1401, 2147483648
      %v1416 = vxor.u32 %v1403, 2147483648
      %v1417 = vmul.f32 %v1405, 1.442695
      %v1418 = vpow.pop %v1417
      %v1419 = vmul.f32 %v1406, 1.442695
      %v1420 = vpow.pop %v1419
      %v1421 = vmul.f32 %v1407, 1.442695
      %v1422 = vpow.pop %v1421
      %v1423 = vmul.f32 %v1408, 1.442695
      %v1424 = vpow.pop %v1423
      %v1425 = vmul.f32 %v1409, 1.442695
      %v1426 = vpow.pop %v1425
      %v1427 = vmul.f32 %v1410, 1.442695
      %v1428 = vpow.pop %v1427
      %v1429 = vmul.f32 %v1411, 1.442695
      %v1430 = vpow.pop %v1429
      %v1431 = vmul.f32 %v1412, 1.442695
      %v1432 = vpow.pop %v1431
      %v1433 = vmul.f32 %v1413, 1.442695
      %v1434 = vpow.pop %v1433
      %v1435 = vmul.f32 %v1414, 1.442695
      %v1436 = vpow.pop %v1435
      %v1437 = vmul.f32 %v1415, 1.442695
      %v1438 = vpow.pop %v1437
      %v1439 = vmul.f32 %v1416, 1.442695
      %v1440 = vpow.pop %v1439
      %v1441 = vadd.f32 %v1418, 1.0
      %v1442 = vadd.f32 %v1420, 1.0
      %v1443 = vadd.f32 %v1422, 1.0
      %v1444 = vadd.f32 %v1424, 1.0
      %v1445 = vadd.f32 %v1426, 1.0
      %v1446 = vadd.f32 %v1428, 1.0
      %v1447 = vadd.f32 %v1430, 1.0
      %v1448 = vadd.f32 %v1432, 1.0
      %v1449 = vadd.f32 %v1434, 1.0
      %v1450 = vadd.f32 %v1436, 1.0
      %v1451 = vadd.f32 %v1438, 1.0
      %v1452 = vadd.f32 %v1440, 1.0
      %v1453 = vrcp.pop %v1441
      %v1454 = vmul.f32 1.0, %v1453
      %v1455 = vrcp.pop %v1442
      %v1456 = vmul.f32 1.0, %v1455
      %v1457 = vrcp.pop %v1443
      %v1458 = vmul.f32 1.0, %v1457
      %v1459 = vrcp.pop %v1444
      %v1460 = vmul.f32 1.0, %v1459
      %v1461 = vrcp.pop %v1445
      %v1462 = vmul.f32 1.0, %v1461
      %v1463 = vrcp.pop %v1446
      %v1464 = vmul.f32 1.0, %v1463
      %v1465 = vrcp.pop %v1447
      %v1466 = vmul.f32 1.0, %v1465
      %v1467 = vrcp.pop %v1448
      %v1468 = vmul.f32 1.0, %v1467
      %v1469 = vrcp.pop %v1449
      %v1470 = vmul.f32 1.0, %v1469
      %v1471 = vrcp.pop %v1450
      %v1472 = vmul.f32 1.0, %v1471
      %v1473 = vrcp.pop %v1451
      %v1474 = vmul.f32 1.0, %v1473
      %v1475 = vrcp.pop %v1452
      %v1476 = vmul.f32 1.0, %v1475
      %v1477 = vmul.f32 %v1377, %v1454
      %v1478 = vmul.f32 %v1379, %v1456
      %v1479 = vmul.f32 %v1381, %v1458
      %v1480 = vmul.f32 %v1383, %v1460
      %v1481 = vmul.f32 %v1387, %v1462
      %v1482 = vmul.f32 %v1389, %v1464
      %v1483 = vmul.f32 %v1391, %v1466
      %v1484 = vmul.f32 %v1393, %v1468
      %v1485 = vmul.f32 %v1397, %v1470
      %v1486 = vmul.f32 %v1399, %v1472
      %v1487 = vmul.f32 %v1401, %v1474
      %v1488 = vmul.f32 %v1403, %v1476
      %v1489 = vld [vmem:[%s1 + $0x88] sm:$0xf]
      %v1490 = vld [vmem:[%s1 + $0x8c] sm:$0xf]
      %v1491 = vld [vmem:[%s1 + $0x90] sm:$0xf]
      %v1492 = vpack.c.bf16 %v1479, %v1477
      %v1493 = vpack.c.bf16 %v1480, %v1478
      %v1494 = vpack.c.bf16 %v1483, %v1481
      %v1495 = vpack.c.bf16 %v1484, %v1482
      %v1496 = vpack.c.bf16 %v1487, %v1485
      %v1497 = vpack.c.bf16 %v1488, %v1486
      %1498 = vset.pattern.permute.xlu0 9
      %1499 = vperm.xlu0 %1498, %v493
      %v1500 = vpop.permute.xlu0 %1499
      %1502 = vset.pattern.permute.xlu0 9
      %1503 = vperm.xlu0 %1502, %v494
      %v1504 = vpop.permute.xlu0 %1503
      %1506 = vset.pattern.permute.xlu0 9
      %1507 = vperm.xlu0 %1506, %v495
      %v1508 = vpop.permute.xlu0 %1507
      %v1513 = vunpack.c.l.b16 %v1489
      %v1514 = vunpack.c.l.b16 %v1490
      %v1515 = vunpack.c.l.b16 %v1491
      %v1516 = vpack.c.b16 %v1514, %v1513
      %v1517 = vpack.c.b16 %v1515, %v1515
      %v1519 = vsel %vm1332, %v1516, 0
      %v1522 = vsel %vm1332, %v1517, 0
      %1524 = vmatprep.subr.bf16.mxu0 %v1493
      %1525 = vmatpush1.bf16.msra.mxu0 %v1492
      %1526 = vmatprep.subr.bf16.mxu0 %v1495
      %1527 = vmatpush1.bf16.msra.mxu0 %v1494
      %1528 = vmatprep.subr.bf16.mxu0 %v1497
      %1529 = vmatpush1.bf16.msra.mxu0 %v1496
      %1530 = vmatprep.subr.bf16.mxu0 0
      %1531 = vmatpush1.bf16.msra.mxu0 0
      %1532 = vmatprep.subr.bf16.mxu0 0
      %1533 = vmatpush1.bf16.msra.mxu0 0
      %1534 = vmatprep.subr.bf16.mxu0 0
      %1535 = vmatpush1.bf16.msra.mxu0 0
      %1536 = vmatprep.subr.bf16.mxu0 0
      %1537 = vmatpush1.bf16.msra.mxu0 0
      %1538 = vmatprep.subr.bf16.mxu0 0
      %1539 = vmatpush1.bf16.msra.mxu0 0
      %1540 = vmatprep.subr.bf16.mxu0 0
      %1541 = vmatpush1.bf16.msra.mxu0 0
      %1542 = vmatprep.subr.bf16.mxu0 0
      %1543 = vmatpush1.bf16.msra.mxu0 0
      %1544 = vmatprep.subr.bf16.mxu0 0
      %1545 = vmatpush1.bf16.msra.mxu0 0
      %1546 = vmatprep.subr.bf16.mxu0 0
      %1547 = vmatpush1.bf16.msra.mxu0 0
      %1548 = vmatprep.subr.bf16.mxu0 0
      %1549 = vmatpush1.bf16.msra.mxu0 0
      %1550 = vmatprep.subr.bf16.mxu0 0
      %1551 = vmatpush1.bf16.msra.mxu0 0
      %1552 = vmatprep.subr.bf16.mxu0 0
      %1553 = vmatpush1.bf16.msra.mxu0 0
      %1554 = vmatprep.subr.bf16.mxu0 0
      %1555 = vmatpush1.bf16.msra.mxu0 0
      %1556 = vmatprep.mubr.bf16.mxu0 0
      %1557 = vmatmul.mubr.bf16.gmra.mrb[0].mxu0 %v1519
      %v1558 = vpop.f32.mrb[0].mxu0
      %v1559 = vadd.f32 %v1500, %v1558
      %v1560 = vpop.f32.mrb[0].mxu0
      %v1561 = vadd.f32 %v1500, %v1560
      %v1562 = vpop.f32.mrb[0].mxu0
      %v1563 = vadd.f32 %v1504, %v1562
      %v1564 = vpop.f32.mrb[0].mxu0
      %v1565 = vadd.f32 %v1504, %v1564
      %1566 = vmatprep.mubr.bf16.mxu0 0
      %1567 = vmatmul.mubr.bf16.gmra.mrb[0].mxu0 %v1522
      %v1568 = vpop.f32.mrb[0].mxu0
      %v1569 = vadd.f32 %v1508, %v1568
      %v1570 = vpop.f32.mrb[0].mxu0
      %v1571 = vadd.f32 %v1508, %v1570
      %v1572 = vpop.f32.mrb[0].mxu0
      %v1573 = vpop.f32.mrb[0].mxu0
      %1574 = vdwg.mxu0
      %v1575 = vmax.f32 %v1559, 0.0
      %v1576 = vmax.f32 %v1561, 0.0
      %v1577 = vmax.f32 %v1563, 0.0
      %v1578 = vmax.f32 %v1565, 0.0
      %v1579 = vmax.f32 %v1569, 0.0
      %v1580 = vmax.f32 %v1571, 0.0
      %v1581 = vld [vmem:[%s1 + $0x98] sm:$0xf]
      %v1582 = vld [vmem:[%s1 + $0x9c] sm:$0xf]
      %v1583 = vld [vmem:[%s1 + $0xa0] sm:$0xf]
      %v1584 = vld [vmem:[%s1 + $0xa4] sm:$0xf]
      %v1585 = vld [vmem:[%s1 + $0xa8] sm:$0xf]
      %v1586 = vld [vmem:[%s1 + $0xac] sm:$0xf]
      %v1587 = vpack.c.bf16 %v1577, %v1575
      %v1588 = vpack.c.bf16 %v1578, %v1576
      %v1589 = vpack.c.bf16 %v1579, %v1579
      %v1590 = vpack.c.bf16 %v1580, %v1580
      %1591 = vset.pattern.permute.xlu0 10
      %1592 = vperm.xlu0 %1591, %v1074
      %v1593 = vpop.permute.xlu0 %1592
      %1595 = vset.pattern.permute.xlu0 10
      %1596 = vperm.xlu0 %1595, %v1075
      %v1597 = vpop.permute.xlu0 %1596
      %1599 = vset.pattern.permute.xlu0 10
      %1600 = vperm.xlu0 %1599, %v1076
      %v1601 = vpop.permute.xlu0 %1600
      %1603 = vset.pattern.permute.xlu0 10
      %1604 = vperm.xlu0 %1603, %v1077
      %v1605 = vpop.permute.xlu0 %1604
      %1607 = vset.pattern.permute.xlu0 10
      %1608 = vperm.xlu0 %1607, %v1078
      %v1609 = vpop.permute.xlu0 %1608
      %1611 = vset.pattern.permute.xlu0 10
      %1612 = vperm.xlu0 %1611, %v1079
      %v1613 = vpop.permute.xlu0 %1612
      %v1621 = vunpack.c.l.b16 %v1581
      %v1622 = vunpack.c.l.b16 %v1582
      %v1623 = vunpack.c.l.b16 %v1583
      %v1624 = vunpack.c.l.b16 %v1584
      %v1625 = vunpack.c.l.b16 %v1585
      %v1626 = vunpack.c.l.b16 %v1586
      %v1627 = vpack.c.b16 %v1622, %v1621
      %v1628 = vpack.c.b16 %v1624, %v1623
      %v1629 = vpack.c.b16 %v1626, %v1625
      %v1631 = vsel %vm645, %v1627, 0
      %v1634 = vsel %vm645, %v1628, 0
      %v1637 = vsel %vm645, %v1629, 0
      %v1640 = vsel %vm318, %v1589, 0
      %v1643 = vsel %vm318, %v1590, 0
      %1645 = vmatprep.subr.bf16.mxu0 %v1588
      %1646 = vmatpush1.bf16.msra.mxu0 %v1587
      %1647 = vmatprep.subr.bf16.mxu0 %v1643
      %1648 = vmatpush1.bf16.msra.mxu0 %v1640
      %1649 = vmatprep.subr.bf16.mxu0 0
      %1650 = vmatpush1.bf16.msra.mxu0 0
      %1651 = vmatprep.subr.bf16.mxu0 0
      %1652 = vmatpush1.bf16.msra.mxu0 0
      %1653 = vmatprep.subr.bf16.mxu0 0
      %1654 = vmatpush1.bf16.msra.mxu0 0
      %1655 = vmatprep.subr.bf16.mxu0 0
      %1656 = vmatpush1.bf16.msra.mxu0 0
      %1657 = vmatprep.subr.bf16.mxu0 0
      %1658 = vmatpush1.bf16.msra.mxu0 0
      %1659 = vmatprep.subr.bf16.mxu0 0
      %1660 = vmatpush1.bf16.msra.mxu0 0
      %1661 = vmatprep.subr.bf16.mxu0 0
      %1662 = vmatpush1.bf16.msra.mxu0 0
      %1663 = vmatprep.subr.bf16.mxu0 0
      %1664 = vmatpush1.bf16.msra.mxu0 0
      %1665 = vmatprep.subr.bf16.mxu0 0
      %1666 = vmatpush1.bf16.msra.mxu0 0
      %1667 = vmatprep.subr.bf16.mxu0 0
      %1668 = vmatpush1.bf16.msra.mxu0 0
      %1669 = vmatprep.subr.bf16.mxu0 0
      %1670 = vmatpush1.bf16.msra.mxu0 0
      %1671 = vmatprep.subr.bf16.mxu0 0
      %1672 = vmatpush1.bf16.msra.mxu0 0
      %1673 = vmatprep.subr.bf16.mxu0 0
      %1674 = vmatpush1.bf16.msra.mxu0 0
      %1675 = vmatprep.subr.bf16.mxu0 0
      %1676 = vmatpush1.bf16.msra.mxu0 0
      %1677 = vmatprep.mubr.bf16.mxu0 0
      %1678 = vmatmul.mubr.bf16.gmra.mrb[0].mxu0 %v1631
      %v1679 = vpop.f32.mrb[0].mxu0
      %v1680 = vadd.f32 %v1593, %v1679
      %v1681 = vpop.f32.mrb[0].mxu0
      %v1682 = vadd.f32 %v1593, %v1681
      %v1683 = vpop.f32.mrb[0].mxu0
      %v1684 = vadd.f32 %v1597, %v1683
      %v1685 = vpop.f32.mrb[0].mxu0
      %v1686 = vadd.f32 %v1597, %v1685
      %1687 = vmatprep.mubr.bf16.mxu0 0
      %1688 = vmatmul.mubr.bf16.gmra.mrb[0].mxu0 %v1634
      %v1689 = vpop.f32.mrb[0].mxu0
      %v1690 = vadd.f32 %v1601, %v1689
      %v1691 = vpop.f32.mrb[0].mxu0
      %v1692 = vadd.f32 %v1601, %v1691
      %v1693 = vpop.f32.mrb[0].mxu0
      %v1694 = vadd.f32 %v1605, %v1693
      %v1695 = vpop.f32.mrb[0].mxu0
      %v1696 = vadd.f32 %v1605, %v1695
      %1697 = vmatprep.mubr.bf16.mxu0 0
      %1698 = vmatmul.mubr.bf16.gmra.mrb[0].mxu0 %v1637
      %v1699 = vpop.f32.mrb[0].mxu0
      %v1700 = vadd.f32 %v1609, %v1699
      %v1701 = vpop.f32.mrb[0].mxu0
      %v1702 = vadd.f32 %v1609, %v1701
      %v1703 = vpop.f32.mrb[0].mxu0
      %v1704 = vadd.f32 %v1613, %v1703
      %v1705 = vpop.f32.mrb[0].mxu0
      %v1706 = vadd.f32 %v1613, %v1705
      %1707 = vdwg.mxu0
      %v1708 = vmax.f32 %v1680, 0.0
      %v1709 = vmax.f32 %v1682, 0.0
      %v1710 = vmax.f32 %v1684, 0.0
      %v1711 = vmax.f32 %v1686, 0.0
      %v1712 = vmax.f32 %v1690, 0.0
      %v1713 = vmax.f32 %v1692, 0.0
      %v1714 = vmax.f32 %v1694, 0.0
      %v1715 = vmax.f32 %v1696, 0.0
      %v1716 = vmax.f32 %v1700, 0.0
      %v1717 = vmax.f32 %v1702, 0.0
      %v1718 = vmax.f32 %v1704, 0.0
      %v1719 = vmax.f32 %v1706, 0.0
      %v1720 = vld [vmem:[%s1 + $0xb0] sm:$0xf]
      %v1721 = vld [vmem:[%s1 + $0xb4] sm:$0xf]
      %v1722 = vld [vmem:[%s1 + $0xb8] sm:$0xf]
      %v1723 = vld [vmem:[%s1 + $0xbc] sm:$0xf]
      %v1724 = vld [vmem:[%s1 + $0xc0] sm:$0xf]
      %v1725 = vpack.c.bf16 %v1710, %v1708
      %v1726 = vpack.c.bf16 %v1711, %v1709
      %v1727 = vpack.c.bf16 %v1714, %v1712
      %v1728 = vpack.c.bf16 %v1715, %v1713
      %v1729 = vpack.c.bf16 %v1718, %v1716
      %v1730 = vpack.c.bf16 %v1719, %v1717
      %v1731 = vld [vmem:[%s2] sm:$0xff]
      %v1732 = vld [vmem:[%s2 + $0x8] sm:$0xff]
      %v1733 = vld [vmem:[%s2 + $0x10] sm:$0xff]
      %v1734 = vld [vmem:[%s2 + $0x18] sm:$0xff]
      %v1735 = vld [vmem:[%s2 + $0x20] sm:$0xff]
      %1737 = vset.pattern.permute.xlu0 11
      %1738 = vperm.xlu0 %1737, %v1731
      %v1739 = vpop.permute.xlu0 %1738
      %1742 = vset.pattern.permute.xlu0 11
      %1743 = vperm.xlu0 %1742, %v1732
      %v1744 = vpop.permute.xlu0 %1743
      %1747 = vset.pattern.permute.xlu0 11
      %1748 = vperm.xlu0 %1747, %v1733
      %v1749 = vpop.permute.xlu0 %1748
      %1752 = vset.pattern.permute.xlu0 11
      %1753 = vperm.xlu0 %1752, %v1734
      %v1754 = vpop.permute.xlu0 %1753
      %1757 = vset.pattern.permute.xlu0 11
      %1758 = vperm.xlu0 %1757, %v1735
      %v1759 = vpop.permute.xlu0 %1758
      %v1766 = vunpack.c.l.b16 %v1720
      %v1767 = vunpack.c.l.b16 %v1721
      %v1768 = vunpack.c.l.b16 %v1722
      %v1769 = vunpack.c.l.b16 %v1723
      %v1770 = vunpack.c.l.b16 %v1724
      %v1771 = vpack.c.b16 %v1767, %v1766
      %v1772 = vpack.c.b16 %v1769, %v1768
      %v1773 = vpack.c.b16 %v1770, %v1770
      %v1775 = vsel %vm1332, %v1771, 0
      %v1778 = vsel %vm1332, %v1772, 0
      %v1781 = vsel %vm1332, %v1773, 0
      %1783 = vmatprep.subr.bf16.mxu0 %v1726
      %1784 = vmatpush1.bf16.msra.mxu0 %v1725
      %1785 = vmatprep.subr.bf16.mxu0 %v1728
      %1786 = vmatpush1.bf16.msra.mxu0 %v1727
      %1787 = vmatprep.subr.bf16.mxu0 %v1730
      %1788 = vmatpush1.bf16.msra.mxu0 %v1729
      %1789 = vmatprep.subr.bf16.mxu0 0
      %1790 = vmatpush1.bf16.msra.mxu0 0
      %1791 = vmatprep.subr.bf16.mxu0 0
      %1792 = vmatpush1.bf16.msra.mxu0 0
      %1793 = vmatprep.subr.bf16.mxu0 0
      %1794 = vmatpush1.bf16.msra.mxu0 0
      %1795 = vmatprep.subr.bf16.mxu0 0
      %1796 = vmatpush1.bf16.msra.mxu0 0
      %1797 = vmatprep.subr.bf16.mxu0 0
      %1798 = vmatpush1.bf16.msra.mxu0 0
      %1799 = vmatprep.subr.bf16.mxu0 0
      %1800 = vmatpush1.bf16.msra.mxu0 0
      %1801 = vmatprep.subr.bf16.mxu0 0
      %1802 = vmatpush1.bf16.msra.mxu0 0
      %1803 = vmatprep.subr.bf16.mxu0 0
      %1804 = vmatpush1.bf16.msra.mxu0 0
      %1805 = vmatprep.subr.bf16.mxu0 0
      %1806 = vmatpush1.bf16.msra.mxu0 0
      %1807 = vmatprep.subr.bf16.mxu0 0
      %1808 = vmatpush1.bf16.msra.mxu0 0
      %1809 = vmatprep.subr.bf16.mxu0 0
      %1810 = vmatpush1.bf16.msra.mxu0 0
      %1811 = vmatprep.subr.bf16.mxu0 0
      %1812 = vmatpush1.bf16.msra.mxu0 0
      %1813 = vmatprep.subr.bf16.mxu0 0
      %1814 = vmatpush1.bf16.msra.mxu0 0
      %1815 = vmatprep.mubr.bf16.mxu0 0
      %1816 = vmatmul.mubr.bf16.gmra.mrb[0].mxu0 %v1775
      %v1817 = vpop.f32.mrb[0].mxu0
      %v1818 = vadd.f32 %v1739, %v1817
      %v1819 = vpop.f32.mrb[0].mxu0
      %v1820 = vadd.f32 %v1739, %v1819
      %v1821 = vpop.f32.mrb[0].mxu0
      %v1822 = vadd.f32 %v1744, %v1821
      %v1823 = vpop.f32.mrb[0].mxu0
      %v1824 = vadd.f32 %v1744, %v1823
      %1825 = vmatprep.mubr.bf16.mxu0 0
      %1826 = vmatmul.mubr.bf16.gmra.mrb[0].mxu0 %v1778
      %v1827 = vpop.f32.mrb[0].mxu0
      %v1828 = vadd.f32 %v1749, %v1827
      %v1829 = vpop.f32.mrb[0].mxu0
      %v1830 = vadd.f32 %v1749, %v1829
      %v1831 = vpop.f32.mrb[0].mxu0
      %v1832 = vadd.f32 %v1754, %v1831
      %v1833 = vpop.f32.mrb[0].mxu0
      %v1834 = vadd.f32 %v1754, %v1833
      %1835 = vmatprep.mubr.bf16.mxu0 0
      %1836 = vmatmul.mubr.bf16.gmra.mrb[0].mxu0 %v1781
      %v1837 = vpop.f32.mrb[0].mxu0
      %v1838 = vadd.f32 %v1759, %v1837
      %v1839 = vpop.f32.mrb[0].mxu0
      %v1840 = vadd.f32 %v1759, %v1839
      %v1841 = vpop.f32.mrb[0].mxu0
      %v1842 = vpop.f32.mrb[0].mxu0
      %1843 = vdwg.mxu0
      %v1844 = vxor.u32 %v1818, 2147483648
      %v1845 = vxor.u32 %v1820, 2147483648
      %v1846 = vxor.u32 %v1822, 2147483648
      %v1847 = vxor.u32 %v1824, 2147483648
      %v1848 = vxor.u32 %v1828, 2147483648
      %v1849 = vxor.u32 %v1830, 2147483648
      %v1850 = vxor.u32 %v1832, 2147483648
      %v1851 = vxor.u32 %v1834, 2147483648
      %v1852 = vxor.u32 %v1838, 2147483648
      %v1853 = vxor.u32 %v1840, 2147483648
      %v1854 = vmul.f32 %v1844, 1.442695
      %v1855 = vpow.pop %v1854
      %v1856 = vmul.f32 %v1845, 1.442695
      %v1857 = vpow.pop %v1856
      %v1858 = vmul.f32 %v1846, 1.442695
      %v1859 = vpow.pop %v1858
      %v1860 = vmul.f32 %v1847, 1.442695
      %v1861 = vpow.pop %v1860
      %v1862 = vmul.f32 %v1848, 1.442695
      %v1863 = vpow.pop %v1862
      %v1864 = vmul.f32 %v1849, 1.442695
      %v1865 = vpow.pop %v1864
      %v1866 = vmul.f32 %v1850, 1.442695
      %v1867 = vpow.pop %v1866
      %v1868 = vmul.f32 %v1851, 1.442695
      %v1869 = vpow.pop %v1868
      %v1870 = vmul.f32 %v1852, 1.442695
      %v1871 = vpow.pop %v1870
      %v1872 = vmul.f32 %v1853, 1.442695
      %v1873 = vpow.pop %v1872
      %v1874 = vadd.f32 %v1855, 1.0
      %v1875 = vadd.f32 %v1857, 1.0
      %v1876 = vadd.f32 %v1859, 1.0
      %v1877 = vadd.f32 %v1861, 1.0
      %v1878 = vadd.f32 %v1863, 1.0
      %v1879 = vadd.f32 %v1865, 1.0
      %v1880 = vadd.f32 %v1867, 1.0
      %v1881 = vadd.f32 %v1869, 1.0
      %v1882 = vadd.f32 %v1871, 1.0
      %v1883 = vadd.f32 %v1873, 1.0
      %v1884 = vrcp.pop %v1874
      %v1885 = vmul.f32 1.0, %v1884
      %v1886 = vrcp.pop %v1875
      %v1887 = vmul.f32 1.0, %v1886
      %v1888 = vrcp.pop %v1876
      %v1889 = vmul.f32 1.0, %v1888
      %v1890 = vrcp.pop %v1877
      %v1891 = vmul.f32 1.0, %v1890
      %v1892 = vrcp.pop %v1878
      %v1893 = vmul.f32 1.0, %v1892
      %v1894 = vrcp.pop %v1879
      %v1895 = vmul.f32 1.0, %v1894
      %v1896 = vrcp.pop %v1880
      %v1897 = vmul.f32 1.0, %v1896
      %v1898 = vrcp.pop %v1881
      %v1899 = vmul.f32 1.0, %v1898
      %v1900 = vrcp.pop %v1882
      %v1901 = vmul.f32 1.0, %v1900
      %v1902 = vrcp.pop %v1883
      %v1903 = vmul.f32 1.0, %v1902
      %v1904 = vmul.f32 %v1818, %v1885
      %v1905 = vmul.f32 %v1820, %v1887
      %v1906 = vmul.f32 %v1822, %v1889
      %v1907 = vmul.f32 %v1824, %v1891
      %v1908 = vmul.f32 %v1828, %v1893
      %v1909 = vmul.f32 %v1830, %v1895
      %v1910 = vmul.f32 %v1832, %v1897
      %v1911 = vmul.f32 %v1834, %v1899
      %v1912 = vmul.f32 %v1838, %v1901
      %v1913 = vmul.f32 %v1840, %v1903
      %v1914 = vld [vmem:[%s1 + $0xc8] sm:$0xf]
      %v1915 = vld [vmem:[%s1 + $0xcc] sm:$0xf]
      %v1916 = vld [vmem:[%s1 + $0xd0] sm:$0xf]
      %v1917 = vld [vmem:[%s1 + $0xd4] sm:$0xf]
      %v1918 = vpack.c.bf16 %v1906, %v1904
      %v1919 = vpack.c.bf16 %v1907, %v1905
      %v1920 = vpack.c.bf16 %v1910, %v1908
      %v1921 = vpack.c.bf16 %v1911, %v1909
      %v1922 = vpack.c.bf16 %v1912, %v1912
      %v1923 = vpack.c.bf16 %v1913, %v1913
      %1924 = vset.pattern.permute.xlu0 12
      %1925 = vperm.xlu0 %1924, %v759
      %v1926 = vpop.permute.xlu0 %1925
      %1928 = vset.pattern.permute.xlu0 12
      %1929 = vperm.xlu0 %1928, %v760
      %v1930 = vpop.permute.xlu0 %1929
      %1932 = vset.pattern.permute.xlu0 12
      %1933 = vperm.xlu0 %1932, %v761
      %v1934 = vpop.permute.xlu0 %1933
      %1936 = vset.pattern.permute.xlu0 12
      %1937 = vperm.xlu0 %1936, %v762
      %v1938 = vpop.permute.xlu0 %1937
      %v1944 = vunpack.c.l.b16 %v1914
      %v1945 = vunpack.c.l.b16 %v1915
      %v1946 = vunpack.c.l.b16 %v1916
      %v1947 = vunpack.c.l.b16 %v1917
      %v1948 = vpack.c.b16 %v1945, %v1944
      %v1949 = vpack.c.b16 %v1947, %v1946
      %vm1950 = vcmask 326656
      %v1952 = vsel %vm1950, %v1948, 0
      %v1955 = vsel %vm1950, %v1949, 0
      %v1958 = vsel %vm318, %v1922, 0
      %v1961 = vsel %vm318, %v1923, 0
      %1963 = vmatprep.subr.bf16.mxu0 %v1919
      %1964 = vmatpush1.bf16.msra.mxu0 %v1918
      %1965 = vmatprep.subr.bf16.mxu0 %v1921
      %1966 = vmatpush1.bf16.msra.mxu0 %v1920
      %1967 = vmatprep.subr.bf16.mxu0 %v1961
      %1968 = vmatpush1.bf16.msra.mxu0 %v1958
      %1969 = vmatprep.subr.bf16.mxu0 0
      %1970 = vmatpush1.bf16.msra.mxu0 0
      %1971 = vmatprep.subr.bf16.mxu0 0
      %1972 = vmatpush1.bf16.msra.mxu0 0
      %1973 = vmatprep.subr.bf16.mxu0 0
      %1974 = vmatpush1.bf16.msra.mxu0 0
      %1975 = vmatprep.subr.bf16.mxu0 0
      %1976 = vmatpush1.bf16.msra.mxu0 0
      %1977 = vmatprep.subr.bf16.mxu0 0
      %1978 = vmatpush1.bf16.msra.mxu0 0
      %1979 = vmatprep.subr.bf16.mxu0 0
      %1980 = vmatpush1.bf16.msra.mxu0 0
      %1981 = vmatprep.subr.bf16.mxu0 0
      %1982 = vmatpush1.bf16.msra.mxu0 0
      %1983 = vmatprep.subr.bf16.mxu0 0
      %1984 = vmatpush1.bf16.msra.mxu0 0
      %1985 = vmatprep.subr.bf16.mxu0 0
      %1986 = vmatpush1.bf16.msra.mxu0 0
      %1987 = vmatprep.subr.bf16.mxu0 0
      %1988 = vmatpush1.bf16.msra.mxu0 0
      %1989 = vmatprep.subr.bf16.mxu0 0
      %1990 = vmatpush1.bf16.msra.mxu0 0
      %1991 = vmatprep.subr.bf16.mxu0 0
      %1992 = vmatpush1.bf16.msra.mxu0 0
      %1993 = vmatprep.subr.bf16.mxu0 0
      %1994 = vmatpush1.bf16.msra.mxu0 0
      %1995 = vmatprep.mubr.bf16.mxu0 0
      %1996 = vmatmul.mubr.bf16.gmra.mrb[0].mxu0 %v1952
      %v1997 = vpop.f32.mrb[0].mxu0
      %v1998 = vadd.f32 %v1926, %v1997
      %v1999 = vpop.f32.mrb[0].mxu0
      %v2000 = vadd.f32 %v1926, %v1999
      %v2001 = vpop.f32.mrb[0].mxu0
      %v2002 = vadd.f32 %v1930, %v2001
      %v2003 = vpop.f32.mrb[0].mxu0
      %v2004 = vadd.f32 %v1930, %v2003
      %2005 = vmatprep.mubr.bf16.mxu0 0
      %2006 = vmatmul.mubr.bf16.gmra.mrb[0].mxu0 %v1955
      %v2007 = vpop.f32.mrb[0].mxu0
      %v2008 = vadd.f32 %v1934, %v2007
      %v2009 = vpop.f32.mrb[0].mxu0
      %v2010 = vadd.f32 %v1934, %v2009
      %v2011 = vpop.f32.mrb[0].mxu0
      %v2012 = vadd.f32 %v1938, %v2011
      %v2013 = vpop.f32.mrb[0].mxu0
      %v2014 = vadd.f32 %v1938, %v2013
      %2015 = vdwg.mxu0
      %v2016 = vxor.u32 %v1998, 2147483648
      %v2017 = vxor.u32 %v2000, 2147483648
      %v2018 = vxor.u32 %v2002, 2147483648
      %v2019 = vxor.u32 %v2004, 2147483648
      %v2020 = vxor.u32 %v2008, 2147483648
      %v2021 = vxor.u32 %v2010, 2147483648
      %v2022 = vxor.u32 %v2012, 2147483648
      %v2023 = vxor.u32 %v2014, 2147483648
      %v2024 = vmul.f32 %v2016, 1.442695
      %v2025 = vpow.pop %v2024
      %v2026 = vmul.f32 %v2017, 1.442695
      %v2027 = vpow.pop %v2026
      %v2028 = vmul.f32 %v2018, 1.442695
      %v2029 = vpow.pop %v2028
      %v2030 = vmul.f32 %v2019, 1.442695
      %v2031 = vpow.pop %v2030
      %v2032 = vmul.f32 %v2020, 1.442695
      %v2033 = vpow.pop %v2032
      %v2034 = vmul.f32 %v2021, 1.442695
      %v2035 = vpow.pop %v2034
      %v2036 = vmul.f32 %v2022, 1.442695
      %v2037 = vpow.pop %v2036
      %v2038 = vmul.f32 %v2023, 1.442695
      %v2039 = vpow.pop %v2038
      %v2040 = vadd.f32 %v2025, 1.0
      %v2041 = vadd.f32 %v2027, 1.0
      %v2042 = vadd.f32 %v2029, 1.0
      %v2043 = vadd.f32 %v2031, 1.0
      %v2044 = vadd.f32 %v2033, 1.0
      %v2045 = vadd.f32 %v2035, 1.0
      %v2046 = vadd.f32 %v2037, 1.0
      %v2047 = vadd.f32 %v2039, 1.0
      %v2048 = vrcp.pop %v2040
      %v2049 = vmul.f32 1.0, %v2048
      %v2050 = vrcp.pop %v2041
      %v2051 = vmul.f32 1.0, %v2050
      %v2052 = vrcp.pop %v2042
      %v2053 = vmul.f32 1.0, %v2052
      %v2054 = vrcp.pop %v2043
      %v2055 = vmul.f32 1.0, %v2054
      %v2056 = vrcp.pop %v2044
      %v2057 = vmul.f32 1.0, %v2056
      %v2058 = vrcp.pop %v2045
      %v2059 = vmul.f32 1.0, %v2058
      %v2060 = vrcp.pop %v2046
      %v2061 = vmul.f32 1.0, %v2060
      %v2062 = vrcp.pop %v2047
      %v2063 = vmul.f32 1.0, %v2062
      %v2064 = vmul.f32 %v1998, %v2049
      %v2065 = vmul.f32 %v2000, %v2051
      %v2066 = vmul.f32 %v2002, %v2053
      %v2067 = vmul.f32 %v2004, %v2055
      %v2068 = vmul.f32 %v2008, %v2057
      %v2069 = vmul.f32 %v2010, %v2059
      %v2070 = vmul.f32 %v2012, %v2061
      %v2071 = vmul.f32 %v2014, %v2063
      %v2072 = vld [vmem:[%s1 + $0xd8] sm:$0xf]
      %v2073 = vld [vmem:[%s1 + $0xdc] sm:$0xf]
      %v2074 = vld [vmem:[%s1 + $0xe0] sm:$0xf]
      %v2075 = vld [vmem:[%s1 + $0xe4] sm:$0xf]
      %v2076 = vpack.c.bf16 %v2066, %v2064
      %v2077 = vpack.c.bf16 %v2067, %v2065
      %v2078 = vpack.c.bf16 %v2070, %v2068
      %v2079 = vpack.c.bf16 %v2071, %v2069
      %v2080 = vld [vmem:[%s1 + $0xe8] sm:$0xf]
      %v2081 = vld [vmem:[%s1 + $0xec] sm:$0xf]
      %v2082 = vld [vmem:[%s1 + $0xf0] sm:$0xf]
      %v2083 = vld [vmem:[%s1 + $0xf4] sm:$0xf]
      %v2088 = vunpack.c.l.b16 %v2080
      %v2089 = vunpack.c.l.b16 %v2081
      %v2090 = vunpack.c.l.b16 %v2082
      %v2091 = vunpack.c.l.b16 %v2083
      %v2092 = vpack.c.b16 %v2089, %v2088
      %v2093 = vpack.c.b16 %v2091, %v2090
      %v2095 = vsel %vm948, %v2092, 0
      %v2098 = vsel %vm948, %v2093, 0
      %2100 = vmatprep.subr.bf16.mxu0 %v1071
      %2101 = vmatpush1.bf16.msra.mxu0 %v1070
      %2102 = vmatprep.subr.bf16.mxu0 %v1073
      %2103 = vmatpush1.bf16.msra.mxu0 %v1072
      %2104 = vmatprep.subr.bf16.mxu0 0
      %2105 = vmatpush1.bf16.msra.mxu0 0
      %2106 = vmatprep.subr.bf16.mxu0 0
      %2107 = vmatpush1.bf16.msra.mxu0 0
      %2108 = vmatprep.subr.bf16.mxu0 0
      %2109 = vmatpush1.bf16.msra.mxu0 0
      %2110 = vmatprep.subr.bf16.mxu0 0
      %2111 = vmatpush1.bf16.msra.mxu0 0
      %2112 = vmatprep.subr.bf16.mxu0 0
      %2113 = vmatpush1.bf16.msra.mxu0 0
      %2114 = vmatprep.subr.bf16.mxu0 0
      %2115 = vmatpush1.bf16.msra.mxu0 0
      %2116 = vmatprep.subr.bf16.mxu0 0
      %2117 = vmatpush1.bf16.msra.mxu0 0
      %2118 = vmatprep.subr.bf16.mxu0 0
      %2119 = vmatpush1.bf16.msra.mxu0 0
      %2120 = vmatprep.subr.bf16.mxu0 0
      %2121 = vmatpush1.bf16.msra.mxu0 0
      %2122 = vmatprep.subr.bf16.mxu0 0
      %2123 = vmatpush1.bf16.msra.mxu0 0
      %2124 = vmatprep.subr.bf16.mxu0 0
      %2125 = vmatpush1.bf16.msra.mxu0 0
      %2126 = vmatprep.subr.bf16.mxu0 0
      %2127 = vmatpush1.bf16.msra.mxu0 0
      %2128 = vmatprep.subr.bf16.mxu0 0
      %2129 = vmatpush1.bf16.msra.mxu0 0
      %2130 = vmatprep.subr.bf16.mxu0 0
      %2131 = vmatpush1.bf16.msra.mxu0 0
      %2132 = vmatprep.mubr.bf16.mxu0 0
      %2133 = vmatmul.mubr.bf16.gmra.mrb[0].mxu0 %v2095
      %v2134 = vpop.f32.mrb[0].mxu0
      %v2135 = vadd.f32 0.0, %v2134
      %v2136 = vpop.f32.mrb[0].mxu0
      %v2137 = vadd.f32 0.0, %v2136
      %v2138 = vpop.f32.mrb[0].mxu0
      %v2139 = vadd.f32 0.0, %v2138
      %v2140 = vpop.f32.mrb[0].mxu0
      %v2141 = vadd.f32 0.0, %v2140
      %2142 = vmatprep.mubr.bf16.mxu0 0
      %2143 = vmatmul.mubr.bf16.gmra.mrb[0].mxu0 %v2098
      %v2144 = vpop.f32.mrb[0].mxu0
      %v2145 = vadd.f32 0.0, %v2144
      %v2146 = vpop.f32.mrb[0].mxu0
      %v2147 = vadd.f32 0.0, %v2146
      %v2148 = vpop.f32.mrb[0].mxu0
      %v2149 = vadd.f32 0.0, %v2148
      %v2150 = vpop.f32.mrb[0].mxu0
      %v2151 = vadd.f32 0.0, %v2150
      %2152 = vdwg.mxu0
      %v2157 = vunpack.c.l.b16 %v2072
      %v2158 = vunpack.c.l.b16 %v2073
      %v2159 = vunpack.c.l.b16 %v2074
      %v2160 = vunpack.c.l.b16 %v2075
      %v2161 = vpack.c.b16 %v2158, %v2157
      %v2162 = vpack.c.b16 %v2160, %v2159
      %v2164 = vsel %vm948, %v2161, 0
      %v2167 = vsel %vm948, %v2162, 0
      %2169 = vmatprep.subr.bf16.mxu0 %v2077
      %2170 = vmatpush1.bf16.msra.mxu0 %v2076
      %2171 = vmatprep.subr.bf16.mxu0 %v2079
      %2172 = vmatpush1.bf16.msra.mxu0 %v2078
      %2173 = vmatprep.subr.bf16.mxu0 0
      %2174 = vmatpush1.bf16.msra.mxu0 0
      %2175 = vmatprep.subr.bf16.mxu0 0
      %2176 = vmatpush1.bf16.msra.mxu0 0
      %2177 = vmatprep.subr.bf16.mxu0 0
      %2178 = vmatpush1.bf16.msra.mxu0 0
      %2179 = vmatprep.subr.bf16.mxu0 0
      %2180 = vmatpush1.bf16.msra.mxu0 0
      %2181 = vmatprep.subr.bf16.mxu0 0
      %2182 = vmatpush1.bf16.msra.mxu0 0
      %2183 = vmatprep.subr.bf16.mxu0 0
      %2184 = vmatpush1.bf16.msra.mxu0 0
      %2185 = vmatprep.subr.bf16.mxu0 0
      %2186 = vmatpush1.bf16.msra.mxu0 0
      %2187 = vmatprep.subr.bf16.mxu0 0
      %2188 = vmatpush1.bf16.msra.mxu0 0
      %2189 = vmatprep.subr.bf16.mxu0 0
      %2190 = vmatpush1.bf16.msra.mxu0 0
      %2191 = vmatprep.subr.bf16.mxu0 0
      %2192 = vmatpush1.bf16.msra.mxu0 0
      %2193 = vmatprep.subr.bf16.mxu0 0
      %2194 = vmatpush1.bf16.msra.mxu0 0
      %2195 = vmatprep.subr.bf16.mxu0 0
      %2196 = vmatpush1.bf16.msra.mxu0 0
      %2197 = vmatprep.subr.bf16.mxu0 0
      %2198 = vmatpush1.bf16.msra.mxu0 0
      %2199 = vmatprep.subr.bf16.mxu0 0
      %2200 = vmatpush1.bf16.msra.mxu0 0
      %2201 = vmatprep.mubr.bf16.mxu0 0
      %2202 = vmatmul.mubr.bf16.gmra.mrb[0].mxu0 %v2164
      %v2203 = vpop.f32.mrb[0].mxu0
      %v2204 = vadd.f32 %v2135, %v2203
      %v2205 = vpop.f32.mrb[0].mxu0
      %v2206 = vadd.f32 %v2137, %v2205
      %v2207 = vpop.f32.mrb[0].mxu0
      %v2208 = vadd.f32 %v2139, %v2207
      %v2209 = vpop.f32.mrb[0].mxu0
      %v2210 = vadd.f32 %v2141, %v2209
      %2211 = vmatprep.mubr.bf16.mxu0 0
      %2212 = vmatmul.mubr.bf16.gmra.mrb[0].mxu0 %v2167
      %v2213 = vpop.f32.mrb[0].mxu0
      %v2214 = vadd.f32 %v2145, %v2213
      %v2215 = vpop.f32.mrb[0].mxu0
      %v2216 = vadd.f32 %v2147, %v2215
      %v2217 = vpop.f32.mrb[0].mxu0
      %v2218 = vadd.f32 %v2149, %v2217
      %v2219 = vpop.f32.mrb[0].mxu0
      %v2220 = vadd.f32 %v2151, %v2219
      %2221 = vdwg.mxu0
      %2222 = vset.pattern.permute.xlu0 13
      %2223 = vperm.xlu0 %2222, %v759
      %v2224 = vpop.permute.xlu0 %2223
      %2226 = vset.pattern.permute.xlu0 13
      %2227 = vperm.xlu0 %2226, %v760
      %v2228 = vpop.permute.xlu0 %2227
      %2230 = vset.pattern.permute.xlu0 13
      %2231 = vperm.xlu0 %2230, %v761
      %v2232 = vpop.permute.xlu0 %2231
      %2234 = vset.pattern.permute.xlu0 13
      %2235 = vperm.xlu0 %2234, %v762
      %v2236 = vpop.permute.xlu0 %2235
      %v2238 = vadd.f32 %v2204, %v2224
      %v2239 = vadd.f32 %v2206, %v2224
      %v2240 = vadd.f32 %v2208, %v2228
      %v2241 = vadd.f32 %v2210, %v2228
      %v2242 = vadd.f32 %v2214, %v2232
      %v2243 = vadd.f32 %v2216, %v2232
      %v2244 = vadd.f32 %v2218, %v2236
      %v2245 = vadd.f32 %v2220, %v2236
      %v2246 = vxor.u32 %v2238, 2147483648
      %v2247 = vxor.u32 %v2239, 2147483648
      %v2248 = vxor.u32 %v2240, 2147483648
      %v2249 = vxor.u32 %v2241, 2147483648
      %v2250 = vxor.u32 %v2242, 2147483648
      %v2251 = vxor.u32 %v2243, 2147483648
      %v2252 = vxor.u32 %v2244, 2147483648
      %v2253 = vxor.u32 %v2245, 2147483648
      %v2254 = vmul.f32 %v2246, 1.442695
      %v2255 = vpow.pop %v2254
      %v2256 = vmul.f32 %v2247, 1.442695
      %v2257 = vpow.pop %v2256
      %v2258 = vmul.f32 %v2248, 1.442695
      %v2259 = vpow.pop %v2258
      %v2260 = vmul.f32 %v2249, 1.442695
      %v2261 = vpow.pop %v2260
      %v2262 = vmul.f32 %v2250, 1.442695
      %v2263 = vpow.pop %v2262
      %v2264 = vmul.f32 %v2251, 1.442695
      %v2265 = vpow.pop %v2264
      %v2266 = vmul.f32 %v2252, 1.442695
      %v2267 = vpow.pop %v2266
      %v2268 = vmul.f32 %v2253, 1.442695
      %v2269 = vpow.pop %v2268
      %v2270 = vadd.f32 %v2255, 1.0
      %v2271 = vadd.f32 %v2257, 1.0
      %v2272 = vadd.f32 %v2259, 1.0
      %v2273 = vadd.f32 %v2261, 1.0
      %v2274 = vadd.f32 %v2263, 1.0
      %v2275 = vadd.f32 %v2265, 1.0
      %v2276 = vadd.f32 %v2267, 1.0
      %v2277 = vadd.f32 %v2269, 1.0
      %v2278 = vrcp.pop %v2270
      %v2279 = vmul.f32 1.0, %v2278
      %v2280 = vrcp.pop %v2271
      %v2281 = vmul.f32 1.0, %v2280
      %v2282 = vrcp.pop %v2272
      %v2283 = vmul.f32 1.0, %v2282
      %v2284 = vrcp.pop %v2273
      %v2285 = vmul.f32 1.0, %v2284
      %v2286 = vrcp.pop %v2274
      %v2287 = vmul.f32 1.0, %v2286
      %v2288 = vrcp.pop %v2275
      %v2289 = vmul.f32 1.0, %v2288
      %v2290 = vrcp.pop %v2276
      %v2291 = vmul.f32 1.0, %v2290
      %v2292 = vrcp.pop %v2277
      %v2293 = vmul.f32 1.0, %v2292
      %v2294 = vmul.f32 %v2238, %v2279
      %v2295 = vmul.f32 %v2239, %v2281
      %v2296 = vmul.f32 %v2240, %v2283
      %v2297 = vmul.f32 %v2241, %v2285
      %v2298 = vmul.f32 %v2242, %v2287
      %v2299 = vmul.f32 %v2243, %v2289
      %v2300 = vmul.f32 %v2244, %v2291
      %v2301 = vmul.f32 %v2245, %v2293
      %v2302 = vld [vmem:[%s1 + $0xf8] sm:$0xf]
      %v2303 = vld [vmem:[%s1 + $0xfc] sm:$0xf]
      %v2304 = vld [vmem:[%s1 + $0x100] sm:$0xf]
      %v2305 = vpack.c.bf16 %v2296, %v2294
      %v2306 = vpack.c.bf16 %v2297, %v2295
      %v2307 = vpack.c.bf16 %v2300, %v2298
      %v2308 = vpack.c.bf16 %v2301, %v2299
      %2309 = vset.pattern.permute.xlu0 14
      %2310 = vperm.xlu0 %2309, %v493
      %v2311 = vpop.permute.xlu0 %2310
      %2313 = vset.pattern.permute.xlu0 14
      %2314 = vperm.xlu0 %2313, %v494
      %v2315 = vpop.permute.xlu0 %2314
      %2317 = vset.pattern.permute.xlu0 14
      %2318 = vperm.xlu0 %2317, %v495
      %v2319 = vpop.permute.xlu0 %2318
      %v2324 = vunpack.c.l.b16 %v2302
      %v2325 = vunpack.c.l.b16 %v2303
      %v2326 = vunpack.c.l.b16 %v2304
      %v2327 = vpack.c.b16 %v2325, %v2324
      %v2328 = vpack.c.b16 %v2326, %v2326
      %v2330 = vsel %vm948, %v2327, 0
      %v2333 = vsel %vm948, %v2328, 0
      %2335 = vmatprep.subr.bf16.mxu0 %v2306
      %2336 = vmatpush1.bf16.msra.mxu0 %v2305
      %2337 = vmatprep.subr.bf16.mxu0 %v2308
      %2338 = vmatpush1.bf16.msra.mxu0 %v2307
      %2339 = vmatprep.subr.bf16.mxu0 0
      %2340 = vmatpush1.bf16.msra.mxu0 0
      %2341 = vmatprep.subr.bf16.mxu0 0
      %2342 = vmatpush1.bf16.msra.mxu0 0
      %2343 = vmatprep.subr.bf16.mxu0 0
      %2344 = vmatpush1.bf16.msra.mxu0 0
      %2345 = vmatprep.subr.bf16.mxu0 0
      %2346 = vmatpush1.bf16.msra.mxu0 0
      %2347 = vmatprep.subr.bf16.mxu0 0
      %2348 = vmatpush1.bf16.msra.mxu0 0
      %2349 = vmatprep.subr.bf16.mxu0 0
      %2350 = vmatpush1.bf16.msra.mxu0 0
      %2351 = vmatprep.subr.bf16.mxu0 0
      %2352 = vmatpush1.bf16.msra.mxu0 0
      %2353 = vmatprep.subr.bf16.mxu0 0
      %2354 = vmatpush1.bf16.msra.mxu0 0
      %2355 = vmatprep.subr.bf16.mxu0 0
      %2356 = vmatpush1.bf16.msra.mxu0 0
      %2357 = vmatprep.subr.bf16.mxu0 0
      %2358 = vmatpush1.bf16.msra.mxu0 0
      %2359 = vmatprep.subr.bf16.mxu0 0
      %2360 = vmatpush1.bf16.msra.mxu0 0
      %2361 = vmatprep.subr.bf16.mxu0 0
      %2362 = vmatpush1.bf16.msra.mxu0 0
      %2363 = vmatprep.subr.bf16.mxu0 0
      %2364 = vmatpush1.bf16.msra.mxu0 0
      %2365 = vmatprep.subr.bf16.mxu0 0
      %2366 = vmatpush1.bf16.msra.mxu0 0
      %2367 = vmatprep.mubr.bf16.mxu0 0
      %2368 = vmatmul.mubr.bf16.gmra.mrb[0].mxu0 %v2330
      %v2369 = vpop.f32.mrb[0].mxu0
      %v2370 = vadd.f32 %v2311, %v2369
      %v2371 = vpop.f32.mrb[0].mxu0
      %v2372 = vadd.f32 %v2311, %v2371
      %v2373 = vpop.f32.mrb[0].mxu0
      %v2374 = vadd.f32 %v2315, %v2373
      %v2375 = vpop.f32.mrb[0].mxu0
      %v2376 = vadd.f32 %v2315, %v2375
      %2377 = vmatprep.mubr.bf16.mxu0 0
      %2378 = vmatmul.mubr.bf16.gmra.mrb[0].mxu0 %v2333
      %v2379 = vpop.f32.mrb[0].mxu0
      %v2380 = vadd.f32 %v2319, %v2379
      %v2381 = vpop.f32.mrb[0].mxu0
      %v2382 = vadd.f32 %v2319, %v2381
      %v2383 = vpop.f32.mrb[0].mxu0
      %v2384 = vpop.f32.mrb[0].mxu0
      %2385 = vdwg.mxu0
      %v2386 = vxor.u32 %v2370, 2147483648
      %v2387 = vxor.u32 %v2372, 2147483648
      %v2388 = vxor.u32 %v2374, 2147483648
      %v2389 = vxor.u32 %v2376, 2147483648
      %v2390 = vxor.u32 %v2380, 2147483648
      %v2391 = vxor.u32 %v2382, 2147483648
      %v2392 = vmul.f32 %v2386, 1.442695
      %v2393 = vpow.pop %v2392
      %v2394 = vmul.f32 %v2387, 1.442695
      %v2395 = vpow.pop %v2394
      %v2396 = vmul.f32 %v2388, 1.442695
      %v2397 = vpow.pop %v2396
      %v2398 = vmul.f32 %v2389, 1.442695
      %v2399 = vpow.pop %v2398
      %v2400 = vmul.f32 %v2390, 1.442695
      %v2401 = vpow.pop %v2400
      %v2402 = vmul.f32 %v2391, 1.442695
      %v2403 = vpow.pop %v2402
      %v2404 = vadd.f32 %v2393, 1.0
      %v2405 = vadd.f32 %v2395, 1.0
      %v2406 = vadd.f32 %v2397, 1.0
      %v2407 = vadd.f32 %v2399, 1.0
      %v2408 = vadd.f32 %v2401, 1.0
      %v2409 = vadd.f32 %v2403, 1.0
      %v2410 = vrcp.pop %v2404
      %v2411 = vmul.f32 1.0, %v2410
      %v2412 = vrcp.pop %v2405
      %v2413 = vmul.f32 1.0, %v2412
      %v2414 = vrcp.pop %v2406
      %v2415 = vmul.f32 1.0, %v2414
      %v2416 = vrcp.pop %v2407
      %v2417 = vmul.f32 1.0, %v2416
      %v2418 = vrcp.pop %v2408
      %v2419 = vmul.f32 1.0, %v2418
      %v2420 = vrcp.pop %v2409
      %v2421 = vmul.f32 1.0, %v2420
      %v2422 = vmul.f32 %v2370, %v2411
      %v2423 = vmul.f32 %v2372, %v2413
      %v2424 = vmul.f32 %v2374, %v2415
      %v2425 = vmul.f32 %v2376, %v2417
      %v2426 = vmul.f32 %v2380, %v2419
      %v2427 = vmul.f32 %v2382, %v2421
      %v2428 = vld [vmem:[%s1 + $0x108] sm:$0xf]
      %v2429 = vld [vmem:[%s1 + $0x10c] sm:$0xf]
      %v2430 = vld [vmem:[%s1 + $0x110] sm:$0xf]
      %v2431 = vld [vmem:[%s1 + $0x114] sm:$0xf]
      %v2432 = vpack.c.bf16 %v2424, %v2422
      %v2433 = vpack.c.bf16 %v2425, %v2423
      %v2434 = vpack.c.bf16 %v2426, %v2426
      %v2435 = vpack.c.bf16 %v2427, %v2427
      %v2436 = vld [vmem:[%s1 + $0x118] sm:$0xf]
      %v2437 = vld [vmem:[%s1 + $0x11c] sm:$0xf]
      %v2438 = vld [vmem:[%s1 + $0x120] sm:$0xf]
      %v2439 = vld [vmem:[%s1 + $0x124] sm:$0xf]
      %v2444 = vunpack.c.l.b16 %v2436
      %v2445 = vunpack.c.l.b16 %v2437
      %v2446 = vunpack.c.l.b16 %v2438
      %v2447 = vunpack.c.l.b16 %v2439
      %v2448 = vpack.c.b16 %v2445, %v2444
      %v2449 = vpack.c.b16 %v2447, %v2446
      %v2451 = vsel %vm645, %v2448, 0
      %v2454 = vsel %vm645, %v2449, 0
      %2456 = vmatprep.subr.bf16.mxu0 %v756
      %2457 = vmatpush1.bf16.msra.mxu0 %v755
      %2458 = vmatprep.subr.bf16.mxu0 %v803
      %2459 = vmatpush1.bf16.msra.mxu0 %v800
      %2460 = vmatprep.subr.bf16.mxu0 0
      %2461 = vmatpush1.bf16.msra.mxu0 0
      %2462 = vmatprep.subr.bf16.mxu0 0
      %2463 = vmatpush1.bf16.msra.mxu0 0
      %2464 = vmatprep.subr.bf16.mxu0 0
      %2465 = vmatpush1.bf16.msra.mxu0 0
      %2466 = vmatprep.subr.bf16.mxu0 0
      %2467 = vmatpush1.bf16.msra.mxu0 0
      %2468 = vmatprep.subr.bf16.mxu0 0
      %2469 = vmatpush1.bf16.msra.mxu0 0
      %2470 = vmatprep.subr.bf16.mxu0 0
      %2471 = vmatpush1.bf16.msra.mxu0 0
      %2472 = vmatprep.subr.bf16.mxu0 0
      %2473 = vmatpush1.bf16.msra.mxu0 0
      %2474 = vmatprep.subr.bf16.mxu0 0
      %2475 = vmatpush1.bf16.msra.mxu0 0
      %2476 = vmatprep.subr.bf16.mxu0 0
      %2477 = vmatpush1.bf16.msra.mxu0 0
      %2478 = vmatprep.subr.bf16.mxu0 0
      %2479 = vmatpush1.bf16.msra.mxu0 0
      %2480 = vmatprep.subr.bf16.mxu0 0
      %2481 = vmatpush1.bf16.msra.mxu0 0
      %2482 = vmatprep.subr.bf16.mxu0 0
      %2483 = vmatpush1.bf16.msra.mxu0 0
      %2484 = vmatprep.subr.bf16.mxu0 0
      %2485 = vmatpush1.bf16.msra.mxu0 0
      %2486 = vmatprep.subr.bf16.mxu0 0
      %2487 = vmatpush1.bf16.msra.mxu0 0
      %2488 = vmatprep.mubr.bf16.mxu0 0
      %2489 = vmatmul.mubr.bf16.gmra.mrb[0].mxu0 %v2451
      %v2490 = vpop.f32.mrb[0].mxu0
      %v2491 = vadd.f32 0.0, %v2490
      %v2492 = vpop.f32.mrb[0].mxu0
      %v2493 = vadd.f32 0.0, %v2492
      %v2494 = vpop.f32.mrb[0].mxu0
      %v2495 = vadd.f32 0.0, %v2494
      %v2496 = vpop.f32.mrb[0].mxu0
      %v2497 = vadd.f32 0.0, %v2496
      %2498 = vmatprep.mubr.bf16.mxu0 0
      %2499 = vmatmul.mubr.bf16.gmra.mrb[0].mxu0 %v2454
      %v2500 = vpop.f32.mrb[0].mxu0
      %v2501 = vadd.f32 0.0, %v2500
      %v2502 = vpop.f32.mrb[0].mxu0
      %v2503 = vadd.f32 0.0, %v2502
      %v2504 = vpop.f32.mrb[0].mxu0
      %v2505 = vadd.f32 0.0, %v2504
      %v2506 = vpop.f32.mrb[0].mxu0
      %v2507 = vadd.f32 0.0, %v2506
      %2508 = vdwg.mxu0
      %v2513 = vunpack.c.l.b16 %v2428
      %v2514 = vunpack.c.l.b16 %v2429
      %v2515 = vunpack.c.l.b16 %v2430
      %v2516 = vunpack.c.l.b16 %v2431
      %v2517 = vpack.c.b16 %v2514, %v2513
      %v2518 = vpack.c.b16 %v2516, %v2515
      %v2520 = vsel %vm645, %v2517, 0
      %v2523 = vsel %vm645, %v2518, 0
      %v2526 = vsel %vm318, %v2434, 0
      %v2529 = vsel %vm318, %v2435, 0
      %2531 = vmatprep.subr.bf16.mxu0 %v2433
      %2532 = vmatpush1.bf16.msra.mxu0 %v2432
      %2533 = vmatprep.subr.bf16.mxu0 %v2529
      %2534 = vmatpush1.bf16.msra.mxu0 %v2526
      %2535 = vmatprep.subr.bf16.mxu0 0
      %2536 = vmatpush1.bf16.msra.mxu0 0
      %2537 = vmatprep.subr.bf16.mxu0 0
      %2538 = vmatpush1.bf16.msra.mxu0 0
      %2539 = vmatprep.subr.bf16.mxu0 0
      %2540 = vmatpush1.bf16.msra.mxu0 0
      %2541 = vmatprep.subr.bf16.mxu0 0
      %2542 = vmatpush1.bf16.msra.mxu0 0
      %2543 = vmatprep.subr.bf16.mxu0 0
      %2544 = vmatpush1.bf16.msra.mxu0 0
      %2545 = vmatprep.subr.bf16.mxu0 0
      %2546 = vmatpush1.bf16.msra.mxu0 0
      %2547 = vmatprep.subr.bf16.mxu0 0
      %2548 = vmatpush1.bf16.msra.mxu0 0
      %2549 = vmatprep.subr.bf16.mxu0 0
      %2550 = vmatpush1.bf16.msra.mxu0 0
      %2551 = vmatprep.subr.bf16.mxu0 0
      %2552 = vmatpush1.bf16.msra.mxu0 0
      %2553 = vmatprep.subr.bf16.mxu0 0
      %2554 = vmatpush1.bf16.msra.mxu0 0
      %2555 = vmatprep.subr.bf16.mxu0 0
      %2556 = vmatpush1.bf16.msra.mxu0 0
      %2557 = vmatprep.subr.bf16.mxu0 0
      %2558 = vmatpush1.bf16.msra.mxu0 0
      %2559 = vmatprep.subr.bf16.mxu0 0
      %2560 = vmatpush1.bf16.msra.mxu0 0
      %2561 = vmatprep.subr.bf16.mxu0 0
      %2562 = vmatpush1.bf16.msra.mxu0 0
      %2563 = vmatprep.mubr.bf16.mxu0 0
      %2564 = vmatmul.mubr.bf16.gmra.mrb[0].mxu0 %v2520
      %v2565 = vpop.f32.mrb[0].mxu0
      %v2566 = vadd.f32 %v2491, %v2565
      %v2567 = vpop.f32.mrb[0].mxu0
      %v2568 = vadd.f32 %v2493, %v2567
      %v2569 = vpop.f32.mrb[0].mxu0
      %v2570 = vadd.f32 %v2495, %v2569
      %v2571 = vpop.f32.mrb[0].mxu0
      %v2572 = vadd.f32 %v2497, %v2571
      %2573 = vmatprep.mubr.bf16.mxu0 0
      %2574 = vmatmul.mubr.bf16.gmra.mrb[0].mxu0 %v2523
      %v2575 = vpop.f32.mrb[0].mxu0
      %v2576 = vadd.f32 %v2501, %v2575
      %v2577 = vpop.f32.mrb[0].mxu0
      %v2578 = vadd.f32 %v2503, %v2577
      %v2579 = vpop.f32.mrb[0].mxu0
      %v2580 = vadd.f32 %v2505, %v2579
      %v2581 = vpop.f32.mrb[0].mxu0
      %v2582 = vadd.f32 %v2507, %v2581
      %2583 = vdwg.mxu0
      %2584 = vset.pattern.permute.xlu0 15
      %2585 = vperm.xlu0 %2584, %v759
      %v2586 = vpop.permute.xlu0 %2585
      %2588 = vset.pattern.permute.xlu0 15
      %2589 = vperm.xlu0 %2588, %v760
      %v2590 = vpop.permute.xlu0 %2589
      %2592 = vset.pattern.permute.xlu0 15
      %2593 = vperm.xlu0 %2592, %v761
      %v2594 = vpop.permute.xlu0 %2593
      %2596 = vset.pattern.permute.xlu0 15
      %2597 = vperm.xlu0 %2596, %v762
      %v2598 = vpop.permute.xlu0 %2597
      %v2600 = vadd.f32 %v2566, %v2586
      %v2601 = vadd.f32 %v2568, %v2586
      %v2602 = vadd.f32 %v2570, %v2590
      %v2603 = vadd.f32 %v2572, %v2590
      %v2604 = vadd.f32 %v2576, %v2594
      %v2605 = vadd.f32 %v2578, %v2594
      %v2606 = vadd.f32 %v2580, %v2598
      %v2607 = vadd.f32 %v2582, %v2598
      %v2608 = vxor.u32 %v2600, 2147483648
      %v2609 = vxor.u32 %v2601, 2147483648
      %v2610 = vxor.u32 %v2602, 2147483648
      %v2611 = vxor.u32 %v2603, 2147483648
      %v2612 = vxor.u32 %v2604, 2147483648
      %v2613 = vxor.u32 %v2605, 2147483648
      %v2614 = vxor.u32 %v2606, 2147483648
      %v2615 = vxor.u32 %v2607, 2147483648
      %v2616 = vmul.f32 %v2608, 1.442695
      %v2617 = vpow.pop %v2616
      %v2618 = vmul.f32 %v2609, 1.442695
      %v2619 = vpow.pop %v2618
      %v2620 = vmul.f32 %v2610, 1.442695
      %v2621 = vpow.pop %v2620
      %v2622 = vmul.f32 %v2611, 1.442695
      %v2623 = vpow.pop %v2622
      %v2624 = vmul.f32 %v2612, 1.442695
      %v2625 = vpow.pop %v2624
      %v2626 = vmul.f32 %v2613, 1.442695
      %v2627 = vpow.pop %v2626
      %v2628 = vmul.f32 %v2614, 1.442695
      %v2629 = vpow.pop %v2628
      %v2630 = vmul.f32 %v2615, 1.442695
      %v2631 = vpow.pop %v2630
      %v2632 = vadd.f32 %v2617, 1.0
      %v2633 = vadd.f32 %v2619, 1.0
      %v2634 = vadd.f32 %v2621, 1.0
      %v2635 = vadd.f32 %v2623, 1.0
      %v2636 = vadd.f32 %v2625, 1.0
      %v2637 = vadd.f32 %v2627, 1.0
      %v2638 = vadd.f32 %v2629, 1.0
      %v2639 = vadd.f32 %v2631, 1.0
      %v2640 = vrcp.pop %v2632
      %v2641 = vmul.f32 1.0, %v2640
      %v2642 = vrcp.pop %v2633
      %v2643 = vmul.f32 1.0, %v2642
      %v2644 = vrcp.pop %v2634
      %v2645 = vmul.f32 1.0, %v2644
      %v2646 = vrcp.pop %v2635
      %v2647 = vmul.f32 1.0, %v2646
      %v2648 = vrcp.pop %v2636
      %v2649 = vmul.f32 1.0, %v2648
      %v2650 = vrcp.pop %v2637
      %v2651 = vmul.f32 1.0, %v2650
      %v2652 = vrcp.pop %v2638
      %v2653 = vmul.f32 1.0, %v2652
      %v2654 = vrcp.pop %v2639
      %v2655 = vmul.f32 1.0, %v2654
      %v2656 = vmul.f32 %v2600, %v2641
      %v2657 = vmul.f32 %v2601, %v2643
      %v2658 = vmul.f32 %v2602, %v2645
      %v2659 = vmul.f32 %v2603, %v2647
      %v2660 = vmul.f32 %v2604, %v2649
      %v2661 = vmul.f32 %v2605, %v2651
      %v2662 = vmul.f32 %v2606, %v2653
      %v2663 = vmul.f32 %v2607, %v2655
      %v2664 = vld [vmem:[%s1 + $0x128] sm:$0xf]
      %v2665 = vld [vmem:[%s1 + $0x12c] sm:$0xf]
      %v2666 = vld [vmem:[%s1 + $0x130] sm:$0xf]
      %v2667 = vld [vmem:[%s1 + $0x134] sm:$0xf]
      %v2668 = vpack.c.bf16 %v2658, %v2656
      %v2669 = vpack.c.bf16 %v2659, %v2657
      %v2670 = vpack.c.bf16 %v2662, %v2660
      %v2671 = vpack.c.bf16 %v2663, %v2661
      %2672 = vset.pattern.permute.xlu0 16
      %2673 = vperm.xlu0 %2672, %v759
      %v2674 = vpop.permute.xlu0 %2673
      %2676 = vset.pattern.permute.xlu0 16
      %2677 = vperm.xlu0 %2676, %v760
      %v2678 = vpop.permute.xlu0 %2677
      %2680 = vset.pattern.permute.xlu0 16
      %2681 = vperm.xlu0 %2680, %v761
      %v2682 = vpop.permute.xlu0 %2681
      %2684 = vset.pattern.permute.xlu0 16
      %2685 = vperm.xlu0 %2684, %v762
      %v2686 = vpop.permute.xlu0 %2685
      %v2692 = vunpack.c.l.b16 %v2664
      %v2693 = vunpack.c.l.b16 %v2665
      %v2694 = vunpack.c.l.b16 %v2666
      %v2695 = vunpack.c.l.b16 %v2667
      %v2696 = vpack.c.b16 %v2693, %v2692
      %v2697 = vpack.c.b16 %v2695, %v2694
      %v2699 = vsel %vm948, %v2696, 0
      %v2702 = vsel %vm948, %v2697, 0
      %2704 = vmatprep.subr.bf16.mxu0 %v2669
      %2705 = vmatpush1.bf16.msra.mxu0 %v2668
      %2706 = vmatprep.subr.bf16.mxu0 %v2671
      %2707 = vmatpush1.bf16.msra.mxu0 %v2670
      %2708 = vmatprep.subr.bf16.mxu0 0
      %2709 = vmatpush1.bf16.msra.mxu0 0
      %2710 = vmatprep.subr.bf16.mxu0 0
      %2711 = vmatpush1.bf16.msra.mxu0 0
      %2712 = vmatprep.subr.bf16.mxu0 0
      %2713 = vmatpush1.bf16.msra.mxu0 0
      %2714 = vmatprep.subr.bf16.mxu0 0
      %2715 = vmatpush1.bf16.msra.mxu0 0
      %2716 = vmatprep.subr.bf16.mxu0 0
      %2717 = vmatpush1.bf16.msra.mxu0 0
      %2718 = vmatprep.subr.bf16.mxu0 0
      %2719 = vmatpush1.bf16.msra.mxu0 0
      %2720 = vmatprep.subr.bf16.mxu0 0
      %2721 = vmatpush1.bf16.msra.mxu0 0
      %2722 = vmatprep.subr.bf16.mxu0 0
      %2723 = vmatpush1.bf16.msra.mxu0 0
      %2724 = vmatprep.subr.bf16.mxu0 0
      %2725 = vmatpush1.bf16.msra.mxu0 0
      %2726 = vmatprep.subr.bf16.mxu0 0
      %2727 = vmatpush1.bf16.msra.mxu0 0
      %2728 = vmatprep.subr.bf16.mxu0 0
      %2729 = vmatpush1.bf16.msra.mxu0 0
      %2730 = vmatprep.subr.bf16.mxu0 0
      %2731 = vmatpush1.bf16.msra.mxu0 0
      %2732 = vmatprep.subr.bf16.mxu0 0
      %2733 = vmatpush1.bf16.msra.mxu0 0
      %2734 = vmatprep.subr.bf16.mxu0 0
      %2735 = vmatpush1.bf16.msra.mxu0 0
      %2736 = vmatprep.mubr.bf16.mxu0 0
      %2737 = vmatmul.mubr.bf16.gmra.mrb[0].mxu0 %v2699
      %v2738 = vpop.f32.mrb[0].mxu0
      %v2739 = vadd.f32 %v2674, %v2738
      %v2740 = vpop.f32.mrb[0].mxu0
      %v2741 = vadd.f32 %v2674, %v2740
      %v2742 = vpop.f32.mrb[0].mxu0
      %v2743 = vadd.f32 %v2678, %v2742
      %v2744 = vpop.f32.mrb[0].mxu0
      %v2745 = vadd.f32 %v2678, %v2744
      %2746 = vmatprep.mubr.bf16.mxu0 0
      %2747 = vmatmul.mubr.bf16.gmra.mrb[0].mxu0 %v2702
      %v2748 = vpop.f32.mrb[0].mxu0
      %v2749 = vadd.f32 %v2682, %v2748
      %v2750 = vpop.f32.mrb[0].mxu0
      %v2751 = vadd.f32 %v2682, %v2750
      %v2752 = vpop.f32.mrb[0].mxu0
      %v2753 = vadd.f32 %v2686, %v2752
      %v2754 = vpop.f32.mrb[0].mxu0
      %v2755 = vadd.f32 %v2686, %v2754
      %2756 = vdwg.mxu0
      %v2757 = vxor.u32 %v2739, 2147483648
      %v2758 = vxor.u32 %v2741, 2147483648
      %v2759 = vxor.u32 %v2743, 2147483648
      %v2760 = vxor.u32 %v2745, 2147483648
      %v2761 = vxor.u32 %v2749, 2147483648
      %v2762 = vxor.u32 %v2751, 2147483648
      %v2763 = vxor.u32 %v2753, 2147483648
      %v2764 = vxor.u32 %v2755, 2147483648
      %v2765 = vmul.f32 %v2757, 1.442695
      %v2766 = vpow.pop %v2765
      %v2767 = vmul.f32 %v2758, 1.442695
      %v2768 = vpow.pop %v2767
      %v2769 = vmul.f32 %v2759, 1.442695
      %v2770 = vpow.pop %v2769
      %v2771 = vmul.f32 %v2760, 1.442695
      %v2772 = vpow.pop %v2771
      %v2773 = vmul.f32 %v2761, 1.442695
      %v2774 = vpow.pop %v2773
      %v2775 = vmul.f32 %v2762, 1.442695
      %v2776 = vpow.pop %v2775
      %v2777 = vmul.f32 %v2763, 1.442695
      %v2778 = vpow.pop %v2777
      %v2779 = vmul.f32 %v2764, 1.442695
      %v2780 = vpow.pop %v2779
      %v2781 = vadd.f32 %v2766, 1.0
      %v2782 = vadd.f32 %v2768, 1.0
      %v2783 = vadd.f32 %v2770, 1.0
      %v2784 = vadd.f32 %v2772, 1.0
      %v2785 = vadd.f32 %v2774, 1.0
      %v2786 = vadd.f32 %v2776, 1.0
      %v2787 = vadd.f32 %v2778, 1.0
      %v2788 = vadd.f32 %v2780, 1.0
      %v2789 = vrcp.pop %v2781
      %v2790 = vmul.f32 1.0, %v2789
      %v2791 = vrcp.pop %v2782
      %v2792 = vmul.f32 1.0, %v2791
      %v2793 = vrcp.pop %v2783
      %v2794 = vmul.f32 1.0, %v2793
      %v2795 = vrcp.pop %v2784
      %v2796 = vmul.f32 1.0, %v2795
      %v2797 = vrcp.pop %v2785
      %v2798 = vmul.f32 1.0, %v2797
      %v2799 = vrcp.pop %v2786
      %v2800 = vmul.f32 1.0, %v2799
      %v2801 = vrcp.pop %v2787
      %v2802 = vmul.f32 1.0, %v2801
      %v2803 = vrcp.pop %v2788
      %v2804 = vmul.f32 1.0, %v2803
      %v2805 = vmul.f32 %v2739, %v2790
      %v2806 = vmul.f32 %v2741, %v2792
      %v2807 = vmul.f32 %v2743, %v2794
      %v2808 = vmul.f32 %v2745, %v2796
      %v2809 = vmul.f32 %v2749, %v2798
      %v2810 = vmul.f32 %v2751, %v2800
      %v2811 = vmul.f32 %v2753, %v2802
      %v2812 = vmul.f32 %v2755, %v2804
      %v2813 = vld [vmem:[%s1 + $0x138] sm:$0xf]
      %v2814 = vld [vmem:[%s1 + $0x13c] sm:$0xf]
      %v2815 = vld [vmem:[%s1 + $0x140] sm:$0xf]
      %v2816 = vld [vmem:[%s1 + $0x144] sm:$0xf]
      %v2817 = vld [vmem:[%s1 + $0x148] sm:$0xf]
      %v2818 = vpack.c.bf16 %v2807, %v2805
      %v2819 = vpack.c.bf16 %v2808, %v2806
      %v2820 = vpack.c.bf16 %v2811, %v2809
      %v2821 = vpack.c.bf16 %v2812, %v2810
      %v2822 = vld [vmem:[%s1 + $0x150] sm:$0xf]
      %v2823 = vld [vmem:[%s1 + $0x154] sm:$0xf]
      %v2824 = vld [vmem:[%s1 + $0x158] sm:$0xf]
      %v2825 = vld [vmem:[%s1 + $0x15c] sm:$0xf]
      %v2826 = vld [vmem:[%s1 + $0x160] sm:$0xf]
      %v2832 = vunpack.c.l.b16 %v2822
      %v2833 = vunpack.c.l.b16 %v2823
      %v2834 = vunpack.c.l.b16 %v2824
      %v2835 = vunpack.c.l.b16 %v2825
      %v2836 = vunpack.c.l.b16 %v2826
      %v2837 = vpack.c.b16 %v2833, %v2832
      %v2838 = vpack.c.b16 %v2835, %v2834
      %v2839 = vpack.c.b16 %v2836, %v2836
      %v2841 = vsel %vm948, %v2837, 0
      %v2844 = vsel %vm948, %v2838, 0
      %v2847 = vsel %vm948, %v2839, 0
      %2849 = vmatprep.subr.bf16.mxu0 %v2306
      %2850 = vmatpush1.bf16.msra.mxu0 %v2305
      %2851 = vmatprep.subr.bf16.mxu0 %v2308
      %2852 = vmatpush1.bf16.msra.mxu0 %v2307
      %2853 = vmatprep.subr.bf16.mxu0 0
      %2854 = vmatpush1.bf16.msra.mxu0 0
      %2855 = vmatprep.subr.bf16.mxu0 0
      %2856 = vmatpush1.bf16.msra.mxu0 0
      %2857 = vmatprep.subr.bf16.mxu0 0
      %2858 = vmatpush1.bf16.msra.mxu0 0
      %2859 = vmatprep.subr.bf16.mxu0 0
      %2860 = vmatpush1.bf16.msra.mxu0 0
      %2861 = vmatprep.subr.bf16.mxu0 0
      %2862 = vmatpush1.bf16.msra.mxu0 0
      %2863 = vmatprep.subr.bf16.mxu0 0
      %2864 = vmatpush1.bf16.msra.mxu0 0
      %2865 = vmatprep.subr.bf16.mxu0 0
      %2866 = vmatpush1.bf16.msra.mxu0 0
      %2867 = vmatprep.subr.bf16.mxu0 0
      %2868 = vmatpush1.bf16.msra.mxu0 0
      %2869 = vmatprep.subr.bf16.mxu0 0
      %2870 = vmatpush1.bf16.msra.mxu0 0
      %2871 = vmatprep.subr.bf16.mxu0 0
      %2872 = vmatpush1.bf16.msra.mxu0 0
      %2873 = vmatprep.subr.bf16.mxu0 0
      %2874 = vmatpush1.bf16.msra.mxu0 0
      %2875 = vmatprep.subr.bf16.mxu0 0
      %2876 = vmatpush1.bf16.msra.mxu0 0
      %2877 = vmatprep.subr.bf16.mxu0 0
      %2878 = vmatpush1.bf16.msra.mxu0 0
      %2879 = vmatprep.subr.bf16.mxu0 0
      %2880 = vmatpush1.bf16.msra.mxu0 0
      %2881 = vmatprep.mubr.bf16.mxu0 0
      %2882 = vmatmul.mubr.bf16.gmra.mrb[0].mxu0 %v2841
      %v2883 = vpop.f32.mrb[0].mxu0
      %v2884 = vadd.f32 0.0, %v2883
      %v2885 = vpop.f32.mrb[0].mxu0
      %v2886 = vadd.f32 0.0, %v2885
      %v2887 = vpop.f32.mrb[0].mxu0
      %v2888 = vadd.f32 0.0, %v2887
      %v2889 = vpop.f32.mrb[0].mxu0
      %v2890 = vadd.f32 0.0, %v2889
      %2891 = vmatprep.mubr.bf16.mxu0 0
      %2892 = vmatmul.mubr.bf16.gmra.mrb[0].mxu0 %v2844
      %v2893 = vpop.f32.mrb[0].mxu0
      %v2894 = vadd.f32 0.0, %v2893
      %v2895 = vpop.f32.mrb[0].mxu0
      %v2896 = vadd.f32 0.0, %v2895
      %v2897 = vpop.f32.mrb[0].mxu0
      %v2898 = vadd.f32 0.0, %v2897
      %v2899 = vpop.f32.mrb[0].mxu0
      %v2900 = vadd.f32 0.0, %v2899
      %2901 = vmatprep.mubr.bf16.mxu0 0
      %2902 = vmatmul.mubr.bf16.gmra.mrb[0].mxu0 %v2847
      %v2903 = vpop.f32.mrb[0].mxu0
      %v2904 = vadd.f32 0.0, %v2903
      %v2905 = vpop.f32.mrb[0].mxu0
      %v2906 = vadd.f32 0.0, %v2905
      %v2907 = vpop.f32.mrb[0].mxu0
      %v2908 = vpop.f32.mrb[0].mxu0
      %2909 = vdwg.mxu0
      %v2915 = vunpack.c.l.b16 %v2813
      %v2916 = vunpack.c.l.b16 %v2814
      %v2917 = vunpack.c.l.b16 %v2815
      %v2918 = vunpack.c.l.b16 %v2816
      %v2919 = vunpack.c.l.b16 %v2817
      %v2920 = vpack.c.b16 %v2916, %v2915
      %v2921 = vpack.c.b16 %v2918, %v2917
      %v2922 = vpack.c.b16 %v2919, %v2919
      %v2924 = vsel %vm948, %v2920, 0
      %v2927 = vsel %vm948, %v2921, 0
      %v2930 = vsel %vm948, %v2922, 0
      %2932 = vmatprep.subr.bf16.mxu0 %v2819
      %2933 = vmatpush1.bf16.msra.mxu0 %v2818
      %2934 = vmatprep.subr.bf16.mxu0 %v2821
      %2935 = vmatpush1.bf16.msra.mxu0 %v2820
      %2936 = vmatprep.subr.bf16.mxu0 0
      %2937 = vmatpush1.bf16.msra.mxu0 0
      %2938 = vmatprep.subr.bf16.mxu0 0
      %2939 = vmatpush1.bf16.msra.mxu0 0
      %2940 = vmatprep.subr.bf16.mxu0 0
      %2941 = vmatpush1.bf16.msra.mxu0 0
      %2942 = vmatprep.subr.bf16.mxu0 0
      %2943 = vmatpush1.bf16.msra.mxu0 0
      %2944 = vmatprep.subr.bf16.mxu0 0
      %2945 = vmatpush1.bf16.msra.mxu0 0
      %2946 = vmatprep.subr.bf16.mxu0 0
      %2947 = vmatpush1.bf16.msra.mxu0 0
      %2948 = vmatprep.subr.bf16.mxu0 0
      %2949 = vmatpush1.bf16.msra.mxu0 0
      %2950 = vmatprep.subr.bf16.mxu0 0
      %2951 = vmatpush1.bf16.msra.mxu0 0
      %2952 = vmatprep.subr.bf16.mxu0 0
      %2953 = vmatpush1.bf16.msra.mxu0 0
      %2954 = vmatprep.subr.bf16.mxu0 0
      %2955 = vmatpush1.bf16.msra.mxu0 0
      %2956 = vmatprep.subr.bf16.mxu0 0
      %2957 = vmatpush1.bf16.msra.mxu0 0
      %2958 = vmatprep.subr.bf16.mxu0 0
      %2959 = vmatpush1.bf16.msra.mxu0 0
      %2960 = vmatprep.subr.bf16.mxu0 0
      %2961 = vmatpush1.bf16.msra.mxu0 0
      %2962 = vmatprep.subr.bf16.mxu0 0
      %2963 = vmatpush1.bf16.msra.mxu0 0
      %2964 = vmatprep.mubr.bf16.mxu0 0
      %2965 = vmatmul.mubr.bf16.gmra.mrb[0].mxu0 %v2924
      %v2966 = vpop.f32.mrb[0].mxu0
      %v2967 = vadd.f32 %v2884, %v2966
      %v2968 = vpop.f32.mrb[0].mxu0
      %v2969 = vadd.f32 %v2886, %v2968
      %v2970 = vpop.f32.mrb[0].mxu0
      %v2971 = vadd.f32 %v2888, %v2970
      %v2972 = vpop.f32.mrb[0].mxu0
      %v2973 = vadd.f32 %v2890, %v2972
      %2974 = vmatprep.mubr.bf16.mxu0 0
      %2975 = vmatmul.mubr.bf16.gmra.mrb[0].mxu0 %v2927
      %v2976 = vpop.f32.mrb[0].mxu0
      %v2977 = vadd.f32 %v2894, %v2976
      %v2978 = vpop.f32.mrb[0].mxu0
      %v2979 = vadd.f32 %v2896, %v2978
      %v2980 = vpop.f32.mrb[0].mxu0
      %v2981 = vadd.f32 %v2898, %v2980
      %v2982 = vpop.f32.mrb[0].mxu0
      %v2983 = vadd.f32 %v2900, %v2982
      %2984 = vmatprep.mubr.bf16.mxu0 0
      %2985 = vmatmul.mubr.bf16.gmra.mrb[0].mxu0 %v2930
      %v2986 = vpop.f32.mrb[0].mxu0
      %v2987 = vadd.f32 %v2904, %v2986
      %v2988 = vpop.f32.mrb[0].mxu0
      %v2989 = vadd.f32 %v2906, %v2988
      %v2990 = vpop.f32.mrb[0].mxu0
      %v2991 = vpop.f32.mrb[0].mxu0
      %2992 = vdwg.mxu0
      %2993 = vset.pattern.permute.xlu0 17
      %2994 = vperm.xlu0 %2993, %v1731
      %v2995 = vpop.permute.xlu0 %2994
      %2997 = vset.pattern.permute.xlu0 17
      %2998 = vperm.xlu0 %2997, %v1732
      %v2999 = vpop.permute.xlu0 %2998
      %3001 = vset.pattern.permute.xlu0 17
      %3002 = vperm.xlu0 %3001, %v1733
      %v3003 = vpop.permute.xlu0 %3002
      %3005 = vset.pattern.permute.xlu0 17
      %3006 = vperm.xlu0 %3005, %v1734
      %v3007 = vpop.permute.xlu0 %3006
      %3009 = vset.pattern.permute.xlu0 17
      %3010 = vperm.xlu0 %3009, %v1735
      %v3011 = vpop.permute.xlu0 %3010
      %v3013 = vadd.f32 %v2967, %v2995
      %v3014 = vadd.f32 %v2969, %v2995
      %v3015 = vadd.f32 %v2971, %v2999
      %v3016 = vadd.f32 %v2973, %v2999
      %v3017 = vadd.f32 %v2977, %v3003
      %v3018 = vadd.f32 %v2979, %v3003
      %v3019 = vadd.f32 %v2981, %v3007
      %v3020 = vadd.f32 %v2983, %v3007
      %v3021 = vadd.f32 %v2987, %v3011
      %v3022 = vadd.f32 %v2989, %v3011
      %v3023 = vxor.u32 %v3013, 2147483648
      %v3024 = vxor.u32 %v3014, 2147483648
      %v3025 = vxor.u32 %v3015, 2147483648
      %v3026 = vxor.u32 %v3016, 2147483648
      %v3027 = vxor.u32 %v3017, 2147483648
      %v3028 = vxor.u32 %v3018, 2147483648
      %v3029 = vxor.u32 %v3019, 2147483648
      %v3030 = vxor.u32 %v3020, 2147483648
      %v3031 = vxor.u32 %v3021, 2147483648
      %v3032 = vxor.u32 %v3022, 2147483648
      %v3033 = vmul.f32 %v3023, 1.442695
      %v3034 = vpow.pop %v3033
      %v3035 = vmul.f32 %v3024, 1.442695
      %v3036 = vpow.pop %v3035
      %v3037 = vmul.f32 %v3025, 1.442695
      %v3038 = vpow.pop %v3037
      %v3039 = vmul.f32 %v3026, 1.442695
      %v3040 = vpow.pop %v3039
      %v3041 = vmul.f32 %v3027, 1.442695
      %v3042 = vpow.pop %v3041
      %v3043 = vmul.f32 %v3028, 1.442695
      %v3044 = vpow.pop %v3043
      %v3045 = vmul.f32 %v3029, 1.442695
      %v3046 = vpow.pop %v3045
      %v3047 = vmul.f32 %v3030, 1.442695
      %v3048 = vpow.pop %v3047
      %v3049 = vmul.f32 %v3031, 1.442695
      %v3050 = vpow.pop %v3049
      %v3051 = vmul.f32 %v3032, 1.442695
      %v3052 = vpow.pop %v3051
      %v3053 = vadd.f32 %v3034, 1.0
      %v3054 = vadd.f32 %v3036, 1.0
      %v3055 = vadd.f32 %v3038, 1.0
      %v3056 = vadd.f32 %v3040, 1.0
      %v3057 = vadd.f32 %v3042, 1.0
      %v3058 = vadd.f32 %v3044, 1.0
      %v3059 = vadd.f32 %v3046, 1.0
      %v3060 = vadd.f32 %v3048, 1.0
      %v3061 = vadd.f32 %v3050, 1.0
      %v3062 = vadd.f32 %v3052, 1.0
      %v3063 = vrcp.pop %v3053
      %v3064 = vmul.f32 1.0, %v3063
      %v3065 = vrcp.pop %v3054
      %v3066 = vmul.f32 1.0, %v3065
      %v3067 = vrcp.pop %v3055
      %v3068 = vmul.f32 1.0, %v3067
      %v3069 = vrcp.pop %v3056
      %v3070 = vmul.f32 1.0, %v3069
      %v3071 = vrcp.pop %v3057
      %v3072 = vmul.f32 1.0, %v3071
      %v3073 = vrcp.pop %v3058
      %v3074 = vmul.f32 1.0, %v3073
      %v3075 = vrcp.pop %v3059
      %v3076 = vmul.f32 1.0, %v3075
      %v3077 = vrcp.pop %v3060
      %v3078 = vmul.f32 1.0, %v3077
      %v3079 = vrcp.pop %v3061
      %v3080 = vmul.f32 1.0, %v3079
      %v3081 = vrcp.pop %v3062
      %v3082 = vmul.f32 1.0, %v3081
      %v3083 = vmul.f32 %v3013, %v3064
      %v3084 = vmul.f32 %v3014, %v3066
      %v3085 = vmul.f32 %v3015, %v3068
      %v3086 = vmul.f32 %v3016, %v3070
      %v3087 = vmul.f32 %v3017, %v3072
      %v3088 = vmul.f32 %v3018, %v3074
      %v3089 = vmul.f32 %v3019, %v3076
      %v3090 = vmul.f32 %v3020, %v3078
      %v3091 = vmul.f32 %v3021, %v3080
      %v3092 = vmul.f32 %v3022, %v3082
      %v3093 = vld [vmem:[%s1 + $0x168] sm:$0xf]
      %v3094 = vld [vmem:[%s1 + $0x16c] sm:$0xf]
      %v3095 = vld [vmem:[%s1 + $0x170] sm:$0xf]
      %v3096 = vld [vmem:[%s1 + $0x174] sm:$0xf]
      %v3097 = vld [vmem:[%s1 + $0x178] sm:$0xf]
      %v3098 = vpack.c.bf16 %v3085, %v3083
      %v3099 = vpack.c.bf16 %v3086, %v3084
      %v3100 = vpack.c.bf16 %v3089, %v3087
      %v3101 = vpack.c.bf16 %v3090, %v3088
      %v3102 = vpack.c.bf16 %v3091, %v3091
      %v3103 = vpack.c.bf16 %v3092, %v3092
      %3104 = vset.pattern.permute.xlu0 18
      %3105 = vperm.xlu0 %3104, %v1731
      %v3106 = vpop.permute.xlu0 %3105
      %3108 = vset.pattern.permute.xlu0 18
      %3109 = vperm.xlu0 %3108, %v1732
      %v3110 = vpop.permute.xlu0 %3109
      %3112 = vset.pattern.permute.xlu0 18
      %3113 = vperm.xlu0 %3112, %v1733
      %v3114 = vpop.permute.xlu0 %3113
      %3116 = vset.pattern.permute.xlu0 18
      %3117 = vperm.xlu0 %3116, %v1734
      %v3118 = vpop.permute.xlu0 %3117
      %3120 = vset.pattern.permute.xlu0 18
      %3121 = vperm.xlu0 %3120, %v1735
      %v3122 = vpop.permute.xlu0 %3121
      %v3129 = vunpack.c.l.b16 %v3093
      %v3130 = vunpack.c.l.b16 %v3094
      %v3131 = vunpack.c.l.b16 %v3095
      %v3132 = vunpack.c.l.b16 %v3096
      %v3133 = vunpack.c.l.b16 %v3097
      %v3134 = vpack.c.b16 %v3130, %v3129
      %v3135 = vpack.c.b16 %v3132, %v3131
      %v3136 = vpack.c.b16 %v3133, %v3133
      %v3138 = vsel %vm1950, %v3134, 0
      %v3141 = vsel %vm1950, %v3135, 0
      %v3144 = vsel %vm1950, %v3136, 0
      %v3147 = vsel %vm318, %v3102, 0
      %v3150 = vsel %vm318, %v3103, 0
      %3152 = vmatprep.subr.bf16.mxu0 %v3099
      %3153 = vmatpush1.bf16.msra.mxu0 %v3098
      %3154 = vmatprep.subr.bf16.mxu0 %v3101
      %3155 = vmatpush1.bf16.msra.mxu0 %v3100
      %3156 = vmatprep.subr.bf16.mxu0 %v3150
      %3157 = vmatpush1.bf16.msra.mxu0 %v3147
      %3158 = vmatprep.subr.bf16.mxu0 0
      %3159 = vmatpush1.bf16.msra.mxu0 0
      %3160 = vmatprep.subr.bf16.mxu0 0
      %3161 = vmatpush1.bf16.msra.mxu0 0
      %3162 = vmatprep.subr.bf16.mxu0 0
      %3163 = vmatpush1.bf16.msra.mxu0 0
      %3164 = vmatprep.subr.bf16.mxu0 0
      %3165 = vmatpush1.bf16.msra.mxu0 0
      %3166 = vmatprep.subr.bf16.mxu0 0
      %3167 = vmatpush1.bf16.msra.mxu0 0
      %3168 = vmatprep.subr.bf16.mxu0 0
      %3169 = vmatpush1.bf16.msra.mxu0 0
      %3170 = vmatprep.subr.bf16.mxu0 0
      %3171 = vmatpush1.bf16.msra.mxu0 0
      %3172 = vmatprep.subr.bf16.mxu0 0
      %3173 = vmatpush1.bf16.msra.mxu0 0
      %3174 = vmatprep.subr.bf16.mxu0 0
      %3175 = vmatpush1.bf16.msra.mxu0 0
      %3176 = vmatprep.subr.bf16.mxu0 0
      %3177 = vmatpush1.bf16.msra.mxu0 0
      %3178 = vmatprep.subr.bf16.mxu0 0
      %3179 = vmatpush1.bf16.msra.mxu0 0
      %3180 = vmatprep.subr.bf16.mxu0 0
      %3181 = vmatpush1.bf16.msra.mxu0 0
      %3182 = vmatprep.subr.bf16.mxu0 0
      %3183 = vmatpush1.bf16.msra.mxu0 0
      %3184 = vmatprep.mubr.bf16.mxu0 0
      %3185 = vmatmul.mubr.bf16.gmra.mrb[0].mxu0 %v3138
      %v3186 = vpop.f32.mrb[0].mxu0
      %v3187 = vadd.f32 %v3106, %v3186
      %v3188 = vpop.f32.mrb[0].mxu0
      %v3189 = vadd.f32 %v3106, %v3188
      %v3190 = vpop.f32.mrb[0].mxu0
      %v3191 = vadd.f32 %v3110, %v3190
      %v3192 = vpop.f32.mrb[0].mxu0
      %v3193 = vadd.f32 %v3110, %v3192
      %3194 = vmatprep.mubr.bf16.mxu0 0
      %3195 = vmatmul.mubr.bf16.gmra.mrb[0].mxu0 %v3141
      %v3196 = vpop.f32.mrb[0].mxu0
      %v3197 = vadd.f32 %v3114, %v3196
      %v3198 = vpop.f32.mrb[0].mxu0
      %v3199 = vadd.f32 %v3114, %v3198
      %v3200 = vpop.f32.mrb[0].mxu0
      %v3201 = vadd.f32 %v3118, %v3200
      %v3202 = vpop.f32.mrb[0].mxu0
      %v3203 = vadd.f32 %v3118, %v3202
      %3204 = vmatprep.mubr.bf16.mxu0 0
      %3205 = vmatmul.mubr.bf16.gmra.mrb[0].mxu0 %v3144
      %v3206 = vpop.f32.mrb[0].mxu0
      %v3207 = vadd.f32 %v3122, %v3206
      %v3208 = vpop.f32.mrb[0].mxu0
      %v3209 = vadd.f32 %v3122, %v3208
      %v3210 = vpop.f32.mrb[0].mxu0
      %v3211 = vpop.f32.mrb[0].mxu0
      %3212 = vdwg.mxu0
      %v3213 = vxor.u32 %v3187, 2147483648
      %v3214 = vxor.u32 %v3189, 2147483648
      %v3215 = vxor.u32 %v3191, 2147483648
      %v3216 = vxor.u32 %v3193, 2147483648
      %v3217 = vxor.u32 %v3197, 2147483648
      %v3218 = vxor.u32 %v3199, 2147483648
      %v3219 = vxor.u32 %v3201, 2147483648
      %v3220 = vxor.u32 %v3203, 2147483648
      %v3221 = vxor.u32 %v3207, 2147483648
      %v3222 = vxor.u32 %v3209, 2147483648
      %v3223 = vmul.f32 %v3213, 1.442695
      %v3224 = vpow.pop %v3223
      %v3225 = vmul.f32 %v3214, 1.442695
      %v3226 = vpow.pop %v3225
      %v3227 = vmul.f32 %v3215, 1.442695
      %v3228 = vpow.pop %v3227
      %v3229 = vmul.f32 %v3216, 1.442695
      %v3230 = vpow.pop %v3229
      %v3231 = vmul.f32 %v3217, 1.442695
      %v3232 = vpow.pop %v3231
      %v3233 = vmul.f32 %v3218, 1.442695
      %v3234 = vpow.pop %v3233
      %v3235 = vmul.f32 %v3219, 1.442695
      %v3236 = vpow.pop %v3235
      %v3237 = vmul.f32 %v3220, 1.442695
      %v3238 = vpow.pop %v3237
      %v3239 = vmul.f32 %v3221, 1.442695
      %v3240 = vpow.pop %v3239
      %v3241 = vmul.f32 %v3222, 1.442695
      %v3242 = vpow.pop %v3241
      %v3243 = vadd.f32 %v3224, 1.0
      %v3244 = vadd.f32 %v3226, 1.0
      %v3245 = vadd.f32 %v3228, 1.0
      %v3246 = vadd.f32 %v3230, 1.0
      %v3247 = vadd.f32 %v3232, 1.0
      %v3248 = vadd.f32 %v3234, 1.0
      %v3249 = vadd.f32 %v3236, 1.0
      %v3250 = vadd.f32 %v3238, 1.0
      %v3251 = vadd.f32 %v3240, 1.0
      %v3252 = vadd.f32 %v3242, 1.0
      %v3253 = vrcp.pop %v3243
      %v3254 = vmul.f32 1.0, %v3253
      %v3255 = vrcp.pop %v3244
      %v3256 = vmul.f32 1.0, %v3255
      %v3257 = vrcp.pop %v3245
      %v3258 = vmul.f32 1.0, %v3257
      %v3259 = vrcp.pop %v3246
      %v3260 = vmul.f32 1.0, %v3259
      %v3261 = vrcp.pop %v3247
      %v3262 = vmul.f32 1.0, %v3261
      %v3263 = vrcp.pop %v3248
      %v3264 = vmul.f32 1.0, %v3263
      %v3265 = vrcp.pop %v3249
      %v3266 = vmul.f32 1.0, %v3265
      %v3267 = vrcp.pop %v3250
      %v3268 = vmul.f32 1.0, %v3267
      %v3269 = vrcp.pop %v3251
      %v3270 = vmul.f32 1.0, %v3269
      %v3271 = vrcp.pop %v3252
      %v3272 = vmul.f32 1.0, %v3271
      %v3273 = vmul.f32 %v3187, %v3254
      %v3274 = vmul.f32 %v3189, %v3256
      %v3275 = vmul.f32 %v3191, %v3258
      %v3276 = vmul.f32 %v3193, %v3260
      %v3277 = vmul.f32 %v3197, %v3262
      %v3278 = vmul.f32 %v3199, %v3264
      %v3279 = vmul.f32 %v3201, %v3266
      %v3280 = vmul.f32 %v3203, %v3268
      %v3281 = vmul.f32 %v3207, %v3270
      %v3282 = vmul.f32 %v3209, %v3272
      %v3283 = vld [vmem:[%s1 + $0x180] sm:$0xf]
      %v3284 = vld [vmem:[%s1 + $0x184] sm:$0x1]
      %v3285 = vpack.c.bf16 %v3275, %v3273
      %v3286 = vpack.c.bf16 %v3276, %v3274
      %v3287 = vpack.c.bf16 %v3279, %v3277
      %v3288 = vpack.c.bf16 %v3280, %v3278
      %v3289 = vpack.c.bf16 %v3281, %v3281
      %v3290 = vpack.c.bf16 %v3282, %v3282
      %v3291 = vld [vmem:[%s1 + $0x188] sm:$0xf]
      %v3292 = vld [vmem:[%s1 + $0x18c] sm:$0x1]
      %v3295 = vunpack.c.l.b16 %v3291
      %v3296 = vunpack.c.l.b16 %v3292
      %v3297 = vpack.c.b16 %v3296, %v3295
      %v3299 = vsel %vm1950, %v3297, 0
      %3301 = vmatprep.subr.bf16.mxu0 %v1919
      %3302 = vmatpush1.bf16.msra.mxu0 %v1918
      %3303 = vmatprep.subr.bf16.mxu0 %v1921
      %3304 = vmatpush1.bf16.msra.mxu0 %v1920
      %3305 = vmatprep.subr.bf16.mxu0 %v1961
      %3306 = vmatpush1.bf16.msra.mxu0 %v1958
      %3307 = vmatprep.subr.bf16.mxu0 0
      %3308 = vmatpush1.bf16.msra.mxu0 0
      %3309 = vmatprep.subr.bf16.mxu0 0
      %3310 = vmatpush1.bf16.msra.mxu0 0
      %3311 = vmatprep.subr.bf16.mxu0 0
      %3312 = vmatpush1.bf16.msra.mxu0 0
      %3313 = vmatprep.subr.bf16.mxu0 0
      %3314 = vmatpush1.bf16.msra.mxu0 0
      %3315 = vmatprep.subr.bf16.mxu0 0
      %3316 = vmatpush1.bf16.msra.mxu0 0
      %3317 = vmatprep.subr.bf16.mxu0 0
      %3318 = vmatpush1.bf16.msra.mxu0 0
      %3319 = vmatprep.subr.bf16.mxu0 0
      %3320 = vmatpush1.bf16.msra.mxu0 0
      %3321 = vmatprep.subr.bf16.mxu0 0
      %3322 = vmatpush1.bf16.msra.mxu0 0
      %3323 = vmatprep.subr.bf16.mxu0 0
      %3324 = vmatpush1.bf16.msra.mxu0 0
      %3325 = vmatprep.subr.bf16.mxu0 0
      %3326 = vmatpush1.bf16.msra.mxu0 0
      %3327 = vmatprep.subr.bf16.mxu0 0
      %3328 = vmatpush1.bf16.msra.mxu0 0
      %3329 = vmatprep.subr.bf16.mxu0 0
      %3330 = vmatpush1.bf16.msra.mxu0 0
      %3331 = vmatprep.subr.bf16.mxu0 0
      %3332 = vmatpush1.bf16.msra.mxu0 0
      %3333 = vmatprep.mubr.bf16.mxu0 0
      %3334 = vmatmul.mubr.bf16.gmra.mrb[0].mxu0 %v3299
      %v3335 = vpop.f32.mrb[0].mxu0
      %v3336 = vadd.f32 0.0, %v3335
      %v3337 = vpop.f32.mrb[0].mxu0
      %v3338 = vadd.f32 0.0, %v3337
      %v3339 = vpop.f32.mrb[0].mxu0
      %v3340 = vadd.f32 0.0, %v3339
      %v3341 = vpop.f32.mrb[0].mxu0
      %v3342 = vadd.f32 0.0, %v3341
      %3343 = vdwg.mxu0
      %v3346 = vunpack.c.l.b16 %v3283
      %v3347 = vunpack.c.l.b16 %v3284
      %v3348 = vpack.c.b16 %v3347, %v3346
      %v3350 = vsel %vm1950, %v3348, 0
      %v3353 = vsel %vm318, %v3289, 0
      %v3356 = vsel %vm318, %v3290, 0
      %3358 = vmatprep.subr.bf16.mxu0 %v3286
      %3359 = vmatpush1.bf16.msra.mxu0 %v3285
      %3360 = vmatprep.subr.bf16.mxu0 %v3288
      %3361 = vmatpush1.bf16.msra.mxu0 %v3287
      %3362 = vmatprep.subr.bf16.mxu0 %v3356
      %3363 = vmatpush1.bf16.msra.mxu0 %v3353
      %3364 = vmatprep.subr.bf16.mxu0 0
      %3365 = vmatpush1.bf16.msra.mxu0 0
      %3366 = vmatprep.subr.bf16.mxu0 0
      %3367 = vmatpush1.bf16.msra.mxu0 0
      %3368 = vmatprep.subr.bf16.mxu0 0
      %3369 = vmatpush1.bf16.msra.mxu0 0
      %3370 = vmatprep.subr.bf16.mxu0 0
      %3371 = vmatpush1.bf16.msra.mxu0 0
      %3372 = vmatprep.subr.bf16.mxu0 0
      %3373 = vmatpush1.bf16.msra.mxu0 0
      %3374 = vmatprep.subr.bf16.mxu0 0
      %3375 = vmatpush1.bf16.msra.mxu0 0
      %3376 = vmatprep.subr.bf16.mxu0 0
      %3377 = vmatpush1.bf16.msra.mxu0 0
      %3378 = vmatprep.subr.bf16.mxu0 0
      %3379 = vmatpush1.bf16.msra.mxu0 0
      %3380 = vmatprep.subr.bf16.mxu0 0
      %3381 = vmatpush1.bf16.msra.mxu0 0
      %3382 = vmatprep.subr.bf16.mxu0 0
      %3383 = vmatpush1.bf16.msra.mxu0 0
      %3384 = vmatprep.subr.bf16.mxu0 0
      %3385 = vmatpush1.bf16.msra.mxu0 0
      %3386 = vmatprep.subr.bf16.mxu0 0
      %3387 = vmatpush1.bf16.msra.mxu0 0
      %3388 = vmatprep.subr.bf16.mxu0 0
      %3389 = vmatpush1.bf16.msra.mxu0 0
      %3390 = vmatprep.mubr.bf16.mxu0 0
      %3391 = vmatmul.mubr.bf16.gmra.mrb[0].mxu0 %v3350
      %v3392 = vpop.f32.mrb[0].mxu0
      %v3393 = vadd.f32 %v3336, %v3392
      %v3394 = vpop.f32.mrb[0].mxu0
      %v3395 = vadd.f32 %v3338, %v3394
      %v3396 = vpop.f32.mrb[0].mxu0
      %v3397 = vadd.f32 %v3340, %v3396
      %v3398 = vpop.f32.mrb[0].mxu0
      %v3399 = vadd.f32 %v3342, %v3398
      %3400 = vdwg.mxu0
      %v3401 = vld [vmem:[%s2] sm:$0xff]
      %v3402 = vld [vmem:[%s2 + $0x8] sm:$0x3]
      %3404 = vset.pattern.permute.xlu0 19
      %3405 = vperm.xlu0 %3404, %v3401
      %v3406 = vpop.permute.xlu0 %3405
      %3409 = vset.pattern.permute.xlu0 19
      %3410 = vperm.xlu0 %3409, %v3402
      %v3411 = vpop.permute.xlu0 %3410
      %v3413 = vadd.f32 %v3393, %v3406
      %v3414 = vadd.f32 %v3395, %v3406
      %v3415 = vadd.f32 %v3397, %v3411
      %v3416 = vadd.f32 %v3399, %v3411
      %v3417 = vxor.u32 %v3413, 2147483648
      %v3418 = vxor.u32 %v3414, 2147483648
      %v3419 = vxor.u32 %v3415, 2147483648
      %v3420 = vxor.u32 %v3416, 2147483648
      %v3421 = vmul.f32 %v3417, 1.442695
      %v3422 = vpow.pop %v3421
      %v3423 = vmul.f32 %v3418, 1.442695
      %v3424 = vpow.pop %v3423
      %v3425 = vmul.f32 %v3419, 1.442695
      %v3426 = vpow.pop %v3425
      %v3427 = vmul.f32 %v3420, 1.442695
      %v3428 = vpow.pop %v3427
      %v3429 = vadd.f32 %v3422, 1.0
      %v3430 = vadd.f32 %v3424, 1.0
      %v3431 = vadd.f32 %v3426, 1.0
      %v3432 = vadd.f32 %v3428, 1.0
      %v3433 = vrcp.pop %v3429
      %v3434 = vmul.f32 1.0, %v3433
      %v3435 = vrcp.pop %v3430
      %v3436 = vmul.f32 1.0, %v3435
      %v3437 = vrcp.pop %v3431
      %v3438 = vmul.f32 1.0, %v3437
      %v3439 = vrcp.pop %v3432
      %v3440 = vmul.f32 1.0, %v3439
      %3441 = vst [vmem:[%s208] sm:$0xf] %v3413
      %3442 = vst [vmem:[%s208 + $0x8] sm:$0xf] %v3414
      %3443 = vst [vmem:[%s208] sm:$0xf0] %v3434
      %3444 = vst [vmem:[%s208 + $0x8] sm:$0xf0] %v3436
      %3445 = vst [vmem:[%s208 + $0x10] sm:$0x3] %v3438
      %3446 = vst [vmem:[%s208 + $0x18] sm:$0x3] %v3440
      %vm3447 = vcmask 1047556
      %v3448 = vsel %vm3447, %v3434, -inf
      %v3449 = vsel %vm229, %v3438, -inf
      %v3450 = vmax.f32 %v3448, %v3449
      %v3451 = vrot.slane %v3450, 4
      %v3452 = vmax.f32 %v3450, %v3451
      %v3453 = vrot.slane %v3452, 2
      %v3454 = vmax.f32 %v3452, %v3453
      %v3455 = vrot.slane %v3454, 1
      %v3456 = vmax.f32 %v3454, %v3455
      %v3457 = vsel %vm3447, %v3436, -inf
      %v3458 = vsel %vm229, %v3440, -inf
      %v3459 = vmax.f32 %v3457, %v3458
      %v3460 = vrot.slane %v3459, 4
      %v3461 = vmax.f32 %v3459, %v3460
      %v3462 = vrot.slane %v3461, 2
      %v3463 = vmax.f32 %v3461, %v3462
      %v3464 = vrot.slane %v3463, 1
      %v3465 = vmax.f32 %v3463, %v3464
      %v3468 = vcombine.low %v3456, %v3465
      %v3470 = vunpack.c.l.s4 1966171168
      %v3471 = vunpack.c.0.s8 %v3470
      %v3472 = vlaneseq
      %v3473 = vshrl.u32 %v3472, 7
      %v3474 = vsub.s32 %v3471, %v3473
      %v3475 = vrot.slane %v3468, %v3474
      %v3477 = vunpack.c.l.s4 1966171168
      %v3478 = vunpack.c.0.s8 %v3477
      %v3479 = vlaneseq
      %v3480 = vshrl.u32 %v3479, 7
      %v3481 = vsub.s32 %v3478, %v3480
      %v3482 = vrot.slane %v3475, %v3481
      %v3484 = vlaneseq
      %vm3485 = vcmp.ge.s32.totalorder %v3484, 0
      %vm3486 = vcmp.lt.s32.totalorder %v3484, 256
      %vm3487 = vmand %vm3485, %vm3486
      %s3488 = scalar_lea.vmem %s208, 18
      %3489 = vst.msk [vmem:[%s3488] ss:$8 sm:$0x3] %vm3487, %v3482
      %3490 = vst.msk [vmem:[%s3488] ss:$8 sm:$0x0] %vm3487, %v3482
      %s3491 = smul.u32 2, %s19
      %p3492 = scmp.lt.s32.totalorder %s18, 1
      %s3493 = scalar_select %p3492, %s18, 1
      %p3494 = scmp.lt.s32.totalorder %s3491, 1
      %s3495 = scalar_select %p3494, %s3491, 1
      %s3496 = smul.addr %s3493, 4
      %s3497 = sadd.s32 %s3495, %s3496
      %s3498 = smul.addr %s3497, 8
      %s3499 = scalar_lea.vmem %s3, %s3498
      // Predicated region
      $region33: #{domain_adapted_yolo_forward.1} parent=31 // pred_check
        %p3500 = pneg %p116
      $region34: #{domain_adapted_yolo_forward.1} parent=31 // pred_check_branch
        %3502 = sbr.rel (%p3500) target = $region36
      $region35: #{domain_adapted_yolo_forward.1} parent=31 // pred_region
        %s3503 = smul.u32 2, %s19
      $region36: #{domain_adapted_yolo_forward.1} parent=31 // pred_fallthru
        _
    $region32: #{domain_adapted_yolo_forward.1} parent=5 // pred_fallthru
      _
    %p3504 = scmp.le.s32.totalorder 2, %s9
    // Predicated region
    $region37: #{domain_adapted_yolo_forward.1} parent=5 // pred_check
      %p3505 = pneg %p3504
    $region38: #{domain_adapted_yolo_forward.1} parent=5 // pred_check_branch
      %3507 = sbr.rel (%p3505) target = $region40
    $region39: #{domain_adapted_yolo_forward.1} parent=5 // pred_region
      %s3508 = ssub.s32 %s9, 2
      // Predicated region
      $region41: #{domain_adapted_yolo_forward.1} parent=39 // pred_check
        %p3509 = pneg %p122
      $region42: #{domain_adapted_yolo_forward.1} parent=39 // pred_check_branch
        %3511 = sbr.rel (%p3509) target = $region44
      $region43: #{domain_adapted_yolo_forward.1} parent=39 // pred_region
        %s3512 = smul.u32 2, %s21
        %p3513 = scmp.lt.s32.totalorder %s20, 1
        %s3514 = scalar_select %p3513, %s20, 1
        %p3515 = scmp.lt.s32.totalorder %s3512, 1
        %s3516 = scalar_select %p3515, %s3512, 1
        %s3517 = smul.addr %s3514, 4
        %s3518 = sadd.s32 %s3516, %s3517
        %s3519 = smul.addr %s3518, 8
        %s3520 = scalar_lea.vmem %s3, %s3519
      $region44: #{domain_adapted_yolo_forward.1} parent=39 // pred_fallthru
        _
    $region40: #{domain_adapted_yolo_forward.1} parent=5 // pred_fallthru
      _
  $region6: #{domain_adapted_yolo_forward.1} parent=0 // loop_footer
    %s13 = sadd.s32 1, %s9
  $region7: #{domain_adapted_yolo_forward.1} parent=0 // loop_footer_branch
    %8 = sbr.rel target = $region3
  $region8: #{domain_adapted_yolo_forward.1} parent=0 // loop_exit
    _

</llo_original>
